<compile_context>
chip_gen: v7x
topology: tpu7x:2x2x1
jax: 0.10.0
libtpu: 0.0.40
codegen_flags: <defaults>
</compile_context>

<pallas_src>
import math
from functools import partial

import jax
import jax.numpy as jnp
from jax.experimental import pallas as pl
from jax.experimental.pallas import tpu as pltpu  # noqa: F401  (TPU backend assumed)

D_MODEL = 32
NHEAD = 4
DIM_FF = 64
EPS = 1e-5


# ----------------------------------------------------------------------------
# Fused decoder-layer kernel (single invocation, everything resident in VMEM).
# ----------------------------------------------------------------------------
def _decoder_layer_kernel(*refs, nhead, n_batch, t_len, s_len, have_qpos, have_pos):
    it = iter(refs)
    tgt_ref = next(it)                      # (N*T, E)
    mem_ref = next(it)                      # (N*S, E)
    qpos_ref = next(it) if have_qpos else None
    pos_ref = next(it) if have_pos else None
    (sa_wq_ref, sa_wk_ref, sa_wv_ref, sa_bq_ref, sa_bk_ref, sa_bv_ref,
     sa_wo_ref, sa_bo_ref,
     ca_wq_ref, ca_wk_ref, ca_wv_ref, ca_bq_ref, ca_bk_ref, ca_bv_ref,
     ca_wo_ref, ca_bo_ref,
     w1_ref, b1_ref, w2_ref, b2_ref,
     ln1_g_ref, ln1_b_ref, ln2_g_ref, ln2_b_ref, ln3_g_ref, ln3_b_ref,
     out_ref) = it

    E = tgt_ref.shape[-1]
    dh = E // nhead
    scale = 1.0 / math.sqrt(dh)

    def layer_norm(x, g_ref, b_ref):
        mu = jnp.mean(x, axis=-1, keepdims=True)
        xc = x - mu
        var = jnp.mean(xc * xc, axis=-1, keepdims=True)
        return xc * jax.lax.rsqrt(var + EPS) * g_ref[...] + b_ref[...]

    def attention(q_in, k_in, v_in, q_rows, k_rows,
                  wq_ref, wk_ref, wv_ref, bq_ref, bk_ref, bv_ref,
                  wo_ref, bo_ref):
        # Full-width projections on the batch-flattened operands: one matmul each.
        # Weights are read from their VMEM refs right at the use site (short live
        # ranges) and are already transposed to the MXU-ready orientation.
        qh = (jnp.dot(q_in, wq_ref[...], preferred_element_type=jnp.float32)
              + bq_ref[...]) * scale                                   # (N*q_rows, E)
        kh = (jnp.dot(k_in, wk_ref[...], preferred_element_type=jnp.float32)
              + bk_ref[...])                                           # (N*k_rows, E)
        vh = (jnp.dot(v_in, wv_ref[...], preferred_element_type=jnp.float32)
              + bv_ref[...])                                           # (N*k_rows, E)
        wo = wo_ref[...]                                               # (E, E) == Wo^T

        outs = []
        for n in range(n_batch):                     # tiny unrolled batch loop
            q_n = qh[n * q_rows:(n + 1) * q_rows, :]
            k_n = kh[n * k_rows:(n + 1) * k_rows, :]
            v_n = vh[n * k_rows:(n + 1) * k_rows, :]
            acc = None
            for h in range(nhead):
                lo, hi = h * dh, (h + 1) * dh
                # Scores via transposed contraction: contract the head dim of both
                # operands directly on the MXU (no XLU transpose of K).
                s = jax.lax.dot_general(
                    q_n[:, lo:hi], k_n[:, lo:hi],
                    (((1,), (1,)), ((), ())),
                    preferred_element_type=jnp.float32)                # (q_rows, k_rows)
                m = jnp.max(s, axis=-1, keepdims=True)
                p = jnp.exp(s - m)
                p = p / jnp.sum(p, axis=-1, keepdims=True)             # exact (parity)
                ctx = jnp.dot(p, v_n[:, lo:hi],
                              preferred_element_type=jnp.float32)      # (q_rows, dh)
                # Fold the output projection into the head loop: no lane-concat,
                # just MXU accumulates over heads.
                contrib = jnp.dot(ctx, wo[lo:hi, :],
                                  preferred_element_type=jnp.float32)  # (q_rows, E)
                acc = contrib if acc is None else acc + contrib
            outs.append(acc)
        out = outs[0] if n_batch == 1 else jnp.concatenate(outs, axis=0)
        return out + bo_ref[...]                                       # (N*q_rows, E)

    tgt = tgt_ref[...]                           # (N*T, E)
    mem = mem_ref[...]                           # (N*S, E)

    # --- self-attention + residual + norm1 ---
    qk = (tgt + qpos_ref[...]) if have_qpos else tgt
    sa = attention(qk, qk, tgt, t_len, t_len,
                   sa_wq_ref, sa_wk_ref, sa_wv_ref,
                   sa_bq_ref, sa_bk_ref, sa_bv_ref,
                   sa_wo_ref, sa_bo_ref)
    x = layer_norm(tgt + sa, ln1_g_ref, ln1_b_ref)

    # --- cross-attention + residual + norm2 ---
    q_ca = (x + qpos_ref[...]) if have_qpos else x
    k_ca = (mem + pos_ref[...]) if have_pos else mem
    ca = attention(q_ca, k_ca, mem, t_len, s_len,
                   ca_wq_ref, ca_wk_ref, ca_wv_ref,
                   ca_bq_ref, ca_bk_ref, ca_bv_ref,
                   ca_wo_ref, ca_bo_ref)
    x = layer_norm(x + ca, ln2_g_ref, ln2_b_ref)

    # --- feed-forward (ReLU) + residual + norm3 ---
    h1 = jnp.maximum(
        jnp.dot(x, w1_ref[...], preferred_element_type=jnp.float32) + b1_ref[...], 0.0)
    ff = jnp.dot(h1, w2_ref[...], preferred_element_type=jnp.float32) + b2_ref[...]
    x = layer_norm(x + ff, ln3_g_ref, ln3_b_ref)

    # Single dense store of the whole result.
    out_ref[...] = x


# ----------------------------------------------------------------------------
# Wrapper: single pallas_call for the whole layer.  All weight transposes/splits
# happen here (outside the kernel) so the kernel sees MXU-ready layouts.
# ----------------------------------------------------------------------------
def transformer_decoder_layer(params, tgt, memory, pos=None, query_pos=None,
                              nhead=NHEAD):
    # tgt: (T, N, E), memory: (S, N, E) -- PyTorch (seq, batch, embed) layout
    T, N, E = tgt.shape
    S = memory.shape[0]
    f32 = jnp.float32

    flat = lambda x: jnp.transpose(x, (1, 0, 2)).reshape(N * x.shape[0], E).astype(f32)
    row = lambda v: v.reshape(1, -1).astype(f32)

    have_qpos = query_pos is not None
    have_pos = pos is not None

    sa_w_in = params["sa_w_in"].astype(f32)            # (3E, E)
    ca_w_in = params["ca_w_in"].astype(f32)

    args = [flat(tgt), flat(memory)]
    if have_qpos:
        args.append(flat(query_pos))
    if have_pos:
        args.append(flat(pos))
    args += [
        # self-attn: Wq^T, Wk^T, Wv^T, bias slices, Wo^T, bo
        sa_w_in[:E].T, sa_w_in[E:2 * E].T, sa_w_in[2 * E:].T,
        row(params["sa_b_in"][:E]), row(params["sa_b_in"][E:2 * E]),
        row(params["sa_b_in"][2 * E:]),
        params["sa_w_out"].astype(f32).T, row(params["sa_b_out"]),
        # cross-attn
        ca_w_in[:E].T, ca_w_in[E:2 * E].T, ca_w_in[2 * E:].T,
        row(params["ca_b_in"][:E]), row(params["ca_b_in"][E:2 * E]),
        row(params["ca_b_in"][2 * E:]),
        params["ca_w_out"].astype(f32).T, row(params["ca_b_out"]),
        # FFN: W1^T, b1, W2^T, b2
        params["w1"].astype(f32).T, row(params["b1"]),
        params["w2"].astype(f32).T, row(params["b2"]),
        # LayerNorms
        row(params["ln1_g"]), row(params["ln1_b"]),
        row(params["ln2_g"]), row(params["ln2_b"]),
        row(params["ln3_g"]), row(params["ln3_b"]),
    ]

    out2d = pl.pallas_call(
        partial(_decoder_layer_kernel, nhead=nhead, n_batch=N, t_len=T, s_len=S,
                have_qpos=have_qpos, have_pos=have_pos),
        out_shape=jax.ShapeDtypeStruct((N * T, E), f32),
        # No grid / no BlockSpecs: single invocation, whole working set (~100 KB)
        # mapped fully into VMEM.
    )(*args)

    return jnp.transpose(out2d.reshape(N, T, E), (1, 0, 2))   # back to (T, N, E)


# ----------------------------------------------------------------------------
# Deterministic parameter init (matching shapes from the module's __init__)
# ----------------------------------------------------------------------------
def init_params(key, d_model=D_MODEL, dim_ff=DIM_FF):
    keys = jax.random.split(key, 8)

    def unif(k, shape, fan_in):
        bound = 1.0 / math.sqrt(fan_in)
        return jax.random.uniform(k, shape, jnp.float32, -bound, bound)

    p = {}
    # self_attn: nn.MultiheadAttention(d_model, nhead)
    p["sa_w_in"] = unif(keys[0], (3 * d_model, d_model), d_model)
    p["sa_b_in"] = jnp.zeros((3 * d_model,), jnp.float32)
    p["sa_w_out"] = unif(keys[1], (d_model, d_model), d_model)
    p["sa_b_out"] = jnp.zeros((d_model,), jnp.float32)
    # multihead_attn (cross attention)
    p["ca_w_in"] = unif(keys[2], (3 * d_model, d_model), d_model)
    p["ca_b_in"] = jnp.zeros((3 * d_model,), jnp.float32)
    p["ca_w_out"] = unif(keys[3], (d_model, d_model), d_model)
    p["ca_b_out"] = jnp.zeros((d_model,), jnp.float32)
    # linear1 / linear2
    p["w1"] = unif(keys[4], (dim_ff, d_model), d_model)
    p["b1"] = unif(keys[5], (dim_ff,), d_model)
    p["w2"] = unif(keys[6], (d_model, dim_ff), dim_ff)
    p["b2"] = unif(keys[7], (d_model,), dim_ff)
    # norm1/2/3
    for i in (1, 2, 3):
        p[f"ln{i}_g"] = jnp.ones((d_model,), jnp.float32)
        p[f"ln{i}_b"] = jnp.zeros((d_model,), jnp.float32)
    return p


if __name__ == "__main__":
    key = jax.random.PRNGKey(0)
    kp, k1, k2, k3, k4 = jax.random.split(key, 5)
    params = init_params(kp)

    T, S, N, E = 8, 10, 2, D_MODEL
    tgt = jax.random.normal(k1, (T, N, E), jnp.float32)
    memory = jax.random.normal(k2, (S, N, E), jnp.float32)
    query_pos = jax.random.normal(k3, (T, N, E), jnp.float32)
    pos = jax.random.normal(k4, (S, N, E), jnp.float32)

    layer = jax.jit(partial(transformer_decoder_layer, nhead=NHEAD))
    out = layer(params, tgt, memory, pos=pos, query_pos=query_pos)
    out = jax.block_until_ready(out)
    assert out.shape == (T, N, E)
    assert bool(jnp.all(jnp.isfinite(out)))
    print("KERNEL_OK")
</pallas_src>

<mosaic_0001>
module attributes {stable_mosaic.version = 11 : i64} {
  func.func @_decoder_layer_kernel(%arg0: memref<16x32xf32, #tpu.memory_space<vmem>>, %arg1: memref<20x32xf32, #tpu.memory_space<vmem>>, %arg2: memref<16x32xf32, #tpu.memory_space<vmem>>, %arg3: memref<20x32xf32, #tpu.memory_space<vmem>>, %arg4: memref<32x32xf32, #tpu.memory_space<vmem>>, %arg5: memref<32x32xf32, #tpu.memory_space<vmem>>, %arg6: memref<32x32xf32, #tpu.memory_space<vmem>>, %arg7: memref<1x32xf32, #tpu.memory_space<vmem>>, %arg8: memref<1x32xf32, #tpu.memory_space<vmem>>, %arg9: memref<1x32xf32, #tpu.memory_space<vmem>>, %arg10: memref<32x32xf32, #tpu.memory_space<vmem>>, %arg11: memref<1x32xf32, #tpu.memory_space<vmem>>, %arg12: memref<32x32xf32, #tpu.memory_space<vmem>>, %arg13: memref<32x32xf32, #tpu.memory_space<vmem>>, %arg14: memref<32x32xf32, #tpu.memory_space<vmem>>, %arg15: memref<1x32xf32, #tpu.memory_space<vmem>>, %arg16: memref<1x32xf32, #tpu.memory_space<vmem>>, %arg17: memref<1x32xf32, #tpu.memory_space<vmem>>, %arg18: memref<32x32xf32, #tpu.memory_space<vmem>>, %arg19: memref<1x32xf32, #tpu.memory_space<vmem>>, %arg20: memref<32x64xf32, #tpu.memory_space<vmem>>, %arg21: memref<1x64xf32, #tpu.memory_space<vmem>>, %arg22: memref<64x32xf32, #tpu.memory_space<vmem>>, %arg23: memref<1x32xf32, #tpu.memory_space<vmem>>, %arg24: memref<1x32xf32, #tpu.memory_space<vmem>>, %arg25: memref<1x32xf32, #tpu.memory_space<vmem>>, %arg26: memref<1x32xf32, #tpu.memory_space<vmem>>, %arg27: memref<1x32xf32, #tpu.memory_space<vmem>>, %arg28: memref<1x32xf32, #tpu.memory_space<vmem>>, %arg29: memref<1x32xf32, #tpu.memory_space<vmem>>, %arg30: memref<16x32xf32, #tpu.memory_space<vmem>>) attributes {dimension_semantics = [], scalar_prefetch = 0 : i64, scratch_operands = 0 : i64, tpu.core_type = #tpu.core_type<tc>} {
    %c0 = arith.constant 0 : index
    %c0_0 = arith.constant 0 : index
    %0 = vector.load %arg0[%c0, %c0_0] : memref<16x32xf32, #tpu.memory_space<vmem>>, vector<16x32xf32>
    %c0_1 = arith.constant 0 : index
    %c0_2 = arith.constant 0 : index
    %1 = vector.load %arg1[%c0_1, %c0_2] : memref<20x32xf32, #tpu.memory_space<vmem>>, vector<20x32xf32>
    %c0_3 = arith.constant 0 : index
    %c0_4 = arith.constant 0 : index
    %2 = vector.load %arg2[%c0_3, %c0_4] : memref<16x32xf32, #tpu.memory_space<vmem>>, vector<16x32xf32>
    %3 = arith.addf %0, %2 : vector<16x32xf32>
    %c0_5 = arith.constant 0 : index
    %c0_6 = arith.constant 0 : index
    %4 = vector.load %arg4[%c0_5, %c0_6] : memref<32x32xf32, #tpu.memory_space<vmem>>, vector<32x32xf32>
    %cst = arith.constant dense<0.000000e+00> : vector<16x32xf32>
    %5 = tpu.matmul %3, %4, %cst {dimension_numbers = #tpu.dot_dimension_numbers<[1], [0], [0], [1], [0, 0, 1, 1], [], []>} : vector<16x32xf32>, vector<32x32xf32>, vector<16x32xf32> -> vector<16x32xf32>
    %c0_7 = arith.constant 0 : index
    %c0_8 = arith.constant 0 : index
    %6 = vector.load %arg7[%c0_7, %c0_8] : memref<1x32xf32, #tpu.memory_space<vmem>>, vector<1x32xf32>
    %7 = vector.broadcast %6 : vector<1x32xf32> to vector<16x32xf32>
    %8 = arith.addf %5, %7 : vector<16x32xf32>
    %cst_9 = arith.constant 0.353553385 : f32
    %9 = vector.broadcast %cst_9 : f32 to vector<16x32xf32>
    %10 = arith.mulf %8, %9 : vector<16x32xf32>
    %c0_10 = arith.constant 0 : index
    %c0_11 = arith.constant 0 : index
    %11 = vector.load %arg5[%c0_10, %c0_11] : memref<32x32xf32, #tpu.memory_space<vmem>>, vector<32x32xf32>
    %cst_12 = arith.constant dense<0.000000e+00> : vector<16x32xf32>
    %12 = tpu.matmul %3, %11, %cst_12 {dimension_numbers = #tpu.dot_dimension_numbers<[1], [0], [0], [1], [0, 0, 1, 1], [], []>} : vector<16x32xf32>, vector<32x32xf32>, vector<16x32xf32> -> vector<16x32xf32>
    %c0_13 = arith.constant 0 : index
    %c0_14 = arith.constant 0 : index
    %13 = vector.load %arg8[%c0_13, %c0_14] : memref<1x32xf32, #tpu.memory_space<vmem>>, vector<1x32xf32>
    %14 = vector.broadcast %13 : vector<1x32xf32> to vector<16x32xf32>
    %15 = arith.addf %12, %14 : vector<16x32xf32>
    %c0_15 = arith.constant 0 : index
    %c0_16 = arith.constant 0 : index
    %16 = vector.load %arg6[%c0_15, %c0_16] : memref<32x32xf32, #tpu.memory_space<vmem>>, vector<32x32xf32>
    %cst_17 = arith.constant dense<0.000000e+00> : vector<16x32xf32>
    %17 = tpu.matmul %0, %16, %cst_17 {dimension_numbers = #tpu.dot_dimension_numbers<[1], [0], [0], [1], [0, 0, 1, 1], [], []>} : vector<16x32xf32>, vector<32x32xf32>, vector<16x32xf32> -> vector<16x32xf32>
    %c0_18 = arith.constant 0 : index
    %c0_19 = arith.constant 0 : index
    %18 = vector.load %arg9[%c0_18, %c0_19] : memref<1x32xf32, #tpu.memory_space<vmem>>, vector<1x32xf32>
    %19 = vector.broadcast %18 : vector<1x32xf32> to vector<16x32xf32>
    %20 = arith.addf %17, %19 : vector<16x32xf32>
    %c0_20 = arith.constant 0 : index
    %c0_21 = arith.constant 0 : index
    %21 = vector.load %arg10[%c0_20, %c0_21] : memref<32x32xf32, #tpu.memory_space<vmem>>, vector<32x32xf32>
    %22 = vector.extract_strided_slice %10 {offsets = [0, 0], sizes = [8, 32], strides = [1, 1]} : vector<16x32xf32> to vector<8x32xf32>
    %23 = vector.extract_strided_slice %15 {offsets = [0, 0], sizes = [8, 32], strides = [1, 1]} : vector<16x32xf32> to vector<8x32xf32>
    %24 = vector.extract_strided_slice %20 {offsets = [0, 0], sizes = [8, 32], strides = [1, 1]} : vector<16x32xf32> to vector<8x32xf32>
    %25 = vector.extract_strided_slice %22 {offsets = [0, 0], sizes = [8, 8], strides = [1, 1]} : vector<8x32xf32> to vector<8x8xf32>
    %26 = vector.extract_strided_slice %23 {offsets = [0, 0], sizes = [8, 8], strides = [1, 1]} : vector<8x32xf32> to vector<8x8xf32>
    %cst_22 = arith.constant dense<0.000000e+00> : vector<8x8xf32>
    %27 = tpu.matmul %25, %26, %cst_22 {dimension_numbers = #tpu.dot_dimension_numbers<[1], [1], [0], [0], [0, 0, 1, 0], [], []>} : vector<8x8xf32>, vector<8x8xf32>, vector<8x8xf32> -> vector<8x8xf32>
    %cst_23 = arith.constant dense<0xFF800000> : vector<8xf32>
    %28 = vector.multi_reduction <maximumf>, %27, %cst_23 [1] : vector<8x8xf32> to vector<8xf32>
    %29 = vector.shape_cast %28 : vector<8xf32> to vector<8x1xf32>
    %30 = vector.broadcast %29 : vector<8x1xf32> to vector<8x8xf32>
    %31 = arith.subf %27, %30 : vector<8x8xf32>
    %32 = math.exp %31 : vector<8x8xf32>
    %cst_24 = arith.constant dense<0.000000e+00> : vector<8xf32>
    %33 = vector.multi_reduction <add>, %32, %cst_24 [1] : vector<8x8xf32> to vector<8xf32>
    %34 = vector.shape_cast %33 : vector<8xf32> to vector<8x1xf32>
    %35 = vector.broadcast %34 : vector<8x1xf32> to vector<8x8xf32>
    %36 = arith.divf %32, %35 : vector<8x8xf32>
    %37 = vector.extract_strided_slice %24 {offsets = [0, 0], sizes = [8, 8], strides = [1, 1]} : vector<8x32xf32> to vector<8x8xf32>
    %cst_25 = arith.constant dense<0.000000e+00> : vector<8x8xf32>
    %38 = tpu.matmul %36, %37, %cst_25 {dimension_numbers = #tpu.dot_dimension_numbers<[1], [0], [0], [1], [0, 0, 1, 1], [], []>} : vector<8x8xf32>, vector<8x8xf32>, vector<8x8xf32> -> vector<8x8xf32>
    %39 = vector.extract_strided_slice %21 {offsets = [0, 0], sizes = [8, 32], strides = [1, 1]} : vector<32x32xf32> to vector<8x32xf32>
    %cst_26 = arith.constant dense<0.000000e+00> : vector<8x32xf32>
    %40 = tpu.matmul %38, %39, %cst_26 {dimension_numbers = #tpu.dot_dimension_numbers<[1], [0], [0], [1], [0, 0, 1, 1], [], []>} : vector<8x8xf32>, vector<8x32xf32>, vector<8x32xf32> -> vector<8x32xf32>
    %41 = vector.extract_strided_slice %22 {offsets = [0, 8], sizes = [8, 8], strides = [1, 1]} : vector<8x32xf32> to vector<8x8xf32>
    %42 = vector.extract_strided_slice %23 {offsets = [0, 8], sizes = [8, 8], strides = [1, 1]} : vector<8x32xf32> to vector<8x8xf32>
    %cst_27 = arith.constant dense<0.000000e+00> : vector<8x8xf32>
    %43 = tpu.matmul %41, %42, %cst_27 {dimension_numbers = #tpu.dot_dimension_numbers<[1], [1], [0], [0], [0, 0, 1, 0], [], []>} : vector<8x8xf32>, vector<8x8xf32>, vector<8x8xf32> -> vector<8x8xf32>
    %cst_28 = arith.constant dense<0xFF800000> : vector<8xf32>
    %44 = vector.multi_reduction <maximumf>, %43, %cst_28 [1] : vector<8x8xf32> to vector<8xf32>
    %45 = vector.shape_cast %44 : vector<8xf32> to vector<8x1xf32>
    %46 = vector.broadcast %45 : vector<8x1xf32> to vector<8x8xf32>
    %47 = arith.subf %43, %46 : vector<8x8xf32>
    %48 = math.exp %47 : vector<8x8xf32>
    %cst_29 = arith.constant dense<0.000000e+00> : vector<8xf32>
    %49 = vector.multi_reduction <add>, %48, %cst_29 [1] : vector<8x8xf32> to vector<8xf32>
    %50 = vector.shape_cast %49 : vector<8xf32> to vector<8x1xf32>
    %51 = vector.broadcast %50 : vector<8x1xf32> to vector<8x8xf32>
    %52 = arith.divf %48, %51 : vector<8x8xf32>
    %53 = vector.extract_strided_slice %24 {offsets = [0, 8], sizes = [8, 8], strides = [1, 1]} : vector<8x32xf32> to vector<8x8xf32>
    %cst_30 = arith.constant dense<0.000000e+00> : vector<8x8xf32>
    %54 = tpu.matmul %52, %53, %cst_30 {dimension_numbers = #tpu.dot_dimension_numbers<[1], [0], [0], [1], [0, 0, 1, 1], [], []>} : vector<8x8xf32>, vector<8x8xf32>, vector<8x8xf32> -> vector<8x8xf32>
    %55 = vector.extract_strided_slice %21 {offsets = [8, 0], sizes = [8, 32], strides = [1, 1]} : vector<32x32xf32> to vector<8x32xf32>
    %cst_31 = arith.constant dense<0.000000e+00> : vector<8x32xf32>
    %56 = tpu.matmul %54, %55, %cst_31 {dimension_numbers = #tpu.dot_dimension_numbers<[1], [0], [0], [1], [0, 0, 1, 1], [], []>} : vector<8x8xf32>, vector<8x32xf32>, vector<8x32xf32> -> vector<8x32xf32>
    %57 = arith.addf %40, %56 : vector<8x32xf32>
    %58 = vector.extract_strided_slice %22 {offsets = [0, 16], sizes = [8, 8], strides = [1, 1]} : vector<8x32xf32> to vector<8x8xf32>
    %59 = vector.extract_strided_slice %23 {offsets = [0, 16], sizes = [8, 8], strides = [1, 1]} : vector<8x32xf32> to vector<8x8xf32>
    %cst_32 = arith.constant dense<0.000000e+00> : vector<8x8xf32>
    %60 = tpu.matmul %58, %59, %cst_32 {dimension_numbers = #tpu.dot_dimension_numbers<[1], [1], [0], [0], [0, 0, 1, 0], [], []>} : vector<8x8xf32>, vector<8x8xf32>, vector<8x8xf32> -> vector<8x8xf32>
    %cst_33 = arith.constant dense<0xFF800000> : vector<8xf32>
    %61 = vector.multi_reduction <maximumf>, %60, %cst_33 [1] : vector<8x8xf32> to vector<8xf32>
    %62 = vector.shape_cast %61 : vector<8xf32> to vector<8x1xf32>
    %63 = vector.broadcast %62 : vector<8x1xf32> to vector<8x8xf32>
    %64 = arith.subf %60, %63 : vector<8x8xf32>
    %65 = math.exp %64 : vector<8x8xf32>
    %cst_34 = arith.constant dense<0.000000e+00> : vector<8xf32>
    %66 = vector.multi_reduction <add>, %65, %cst_34 [1] : vector<8x8xf32> to vector<8xf32>
    %67 = vector.shape_cast %66 : vector<8xf32> to vector<8x1xf32>
    %68 = vector.broadcast %67 : vector<8x1xf32> to vector<8x8xf32>
    %69 = arith.divf %65, %68 : vector<8x8xf32>
    %70 = vector.extract_strided_slice %24 {offsets = [0, 16], sizes = [8, 8], strides = [1, 1]} : vector<8x32xf32> to vector<8x8xf32>
    %cst_35 = arith.constant dense<0.000000e+00> : vector<8x8xf32>
    %71 = tpu.matmul %69, %70, %cst_35 {dimension_numbers = #tpu.dot_dimension_numbers<[1], [0], [0], [1], [0, 0, 1, 1], [], []>} : vector<8x8xf32>, vector<8x8xf32>, vector<8x8xf32> -> vector<8x8xf32>
    %72 = vector.extract_strided_slice %21 {offsets = [16, 0], sizes = [8, 32], strides = [1, 1]} : vector<32x32xf32> to vector<8x32xf32>
    %cst_36 = arith.constant dense<0.000000e+00> : vector<8x32xf32>
    %73 = tpu.matmul %71, %72, %cst_36 {dimension_numbers = #tpu.dot_dimension_numbers<[1], [0], [0], [1], [0, 0, 1, 1], [], []>} : vector<8x8xf32>, vector<8x32xf32>, vector<8x32xf32> -> vector<8x32xf32>
    %74 = arith.addf %57, %73 : vector<8x32xf32>
    %75 = vector.extract_strided_slice %22 {offsets = [0, 24], sizes = [8, 8], strides = [1, 1]} : vector<8x32xf32> to vector<8x8xf32>
    %76 = vector.extract_strided_slice %23 {offsets = [0, 24], sizes = [8, 8], strides = [1, 1]} : vector<8x32xf32> to vector<8x8xf32>
    %cst_37 = arith.constant dense<0.000000e+00> : vector<8x8xf32>
    %77 = tpu.matmul %75, %76, %cst_37 {dimension_numbers = #tpu.dot_dimension_numbers<[1], [1], [0], [0], [0, 0, 1, 0], [], []>} : vector<8x8xf32>, vector<8x8xf32>, vector<8x8xf32> -> vector<8x8xf32>
    %cst_38 = arith.constant dense<0xFF800000> : vector<8xf32>
    %78 = vector.multi_reduction <maximumf>, %77, %cst_38 [1] : vector<8x8xf32> to vector<8xf32>
    %79 = vector.shape_cast %78 : vector<8xf32> to vector<8x1xf32>
    %80 = vector.broadcast %79 : vector<8x1xf32> to vector<8x8xf32>
    %81 = arith.subf %77, %80 : vector<8x8xf32>
    %82 = math.exp %81 : vector<8x8xf32>
    %cst_39 = arith.constant dense<0.000000e+00> : vector<8xf32>
    %83 = vector.multi_reduction <add>, %82, %cst_39 [1] : vector<8x8xf32> to vector<8xf32>
    %84 = vector.shape_cast %83 : vector<8xf32> to vector<8x1xf32>
    %85 = vector.broadcast %84 : vector<8x1xf32> to vector<8x8xf32>
    %86 = arith.divf %82, %85 : vector<8x8xf32>
    %87 = vector.extract_strided_slice %24 {offsets = [0, 24], sizes = [8, 8], strides = [1, 1]} : vector<8x32xf32> to vector<8x8xf32>
    %cst_40 = arith.constant dense<0.000000e+00> : vector<8x8xf32>
    %88 = tpu.matmul %86, %87, %cst_40 {dimension_numbers = #tpu.dot_dimension_numbers<[1], [0], [0], [1], [0, 0, 1, 1], [], []>} : vector<8x8xf32>, vector<8x8xf32>, vector<8x8xf32> -> vector<8x8xf32>
    %89 = vector.extract_strided_slice %21 {offsets = [24, 0], sizes = [8, 32], strides = [1, 1]} : vector<32x32xf32> to vector<8x32xf32>
    %cst_41 = arith.constant dense<0.000000e+00> : vector<8x32xf32>
    %90 = tpu.matmul %88, %89, %cst_41 {dimension_numbers = #tpu.dot_dimension_numbers<[1], [0], [0], [1], [0, 0, 1, 1], [], []>} : vector<8x8xf32>, vector<8x32xf32>, vector<8x32xf32> -> vector<8x32xf32>
    %91 = arith.addf %74, %90 : vector<8x32xf32>
    %92 = vector.extract_strided_slice %10 {offsets = [8, 0], sizes = [8, 32], strides = [1, 1]} : vector<16x32xf32> to vector<8x32xf32>
    %93 = vector.extract_strided_slice %15 {offsets = [8, 0], sizes = [8, 32], strides = [1, 1]} : vector<16x32xf32> to vector<8x32xf32>
    %94 = vector.extract_strided_slice %20 {offsets = [8, 0], sizes = [8, 32], strides = [1, 1]} : vector<16x32xf32> to vector<8x32xf32>
    %95 = vector.extract_strided_slice %92 {offsets = [0, 0], sizes = [8, 8], strides = [1, 1]} : vector<8x32xf32> to vector<8x8xf32>
    %96 = vector.extract_strided_slice %93 {offsets = [0, 0], sizes = [8, 8], strides = [1, 1]} : vector<8x32xf32> to vector<8x8xf32>
    %cst_42 = arith.constant dense<0.000000e+00> : vector<8x8xf32>
    %97 = tpu.matmul %95, %96, %cst_42 {dimension_numbers = #tpu.dot_dimension_numbers<[1], [1], [0], [0], [0, 0, 1, 0], [], []>} : vector<8x8xf32>, vector<8x8xf32>, vector<8x8xf32> -> vector<8x8xf32>
    %cst_43 = arith.constant dense<0xFF800000> : vector<8xf32>
    %98 = vector.multi_reduction <maximumf>, %97, %cst_43 [1] : vector<8x8xf32> to vector<8xf32>
    %99 = vector.shape_cast %98 : vector<8xf32> to vector<8x1xf32>
    %100 = vector.broadcast %99 : vector<8x1xf32> to vector<8x8xf32>
    %101 = arith.subf %97, %100 : vector<8x8xf32>
    %102 = math.exp %101 : vector<8x8xf32>
    %cst_44 = arith.constant dense<0.000000e+00> : vector<8xf32>
    %103 = vector.multi_reduction <add>, %102, %cst_44 [1] : vector<8x8xf32> to vector<8xf32>
    %104 = vector.shape_cast %103 : vector<8xf32> to vector<8x1xf32>
    %105 = vector.broadcast %104 : vector<8x1xf32> to vector<8x8xf32>
    %106 = arith.divf %102, %105 : vector<8x8xf32>
    %107 = vector.extract_strided_slice %94 {offsets = [0, 0], sizes = [8, 8], strides = [1, 1]} : vector<8x32xf32> to vector<8x8xf32>
    %cst_45 = arith.constant dense<0.000000e+00> : vector<8x8xf32>
    %108 = tpu.matmul %106, %107, %cst_45 {dimension_numbers = #tpu.dot_dimension_numbers<[1], [0], [0], [1], [0, 0, 1, 1], [], []>} : vector<8x8xf32>, vector<8x8xf32>, vector<8x8xf32> -> vector<8x8xf32>
    %109 = vector.extract_strided_slice %21 {offsets = [0, 0], sizes = [8, 32], strides = [1, 1]} : vector<32x32xf32> to vector<8x32xf32>
    %cst_46 = arith.constant dense<0.000000e+00> : vector<8x32xf32>
    %110 = tpu.matmul %108, %109, %cst_46 {dimension_numbers = #tpu.dot_dimension_numbers<[1], [0], [0], [1], [0, 0, 1, 1], [], []>} : vector<8x8xf32>, vector<8x32xf32>, vector<8x32xf32> -> vector<8x32xf32>
    %111 = vector.extract_strided_slice %92 {offsets = [0, 8], sizes = [8, 8], strides = [1, 1]} : vector<8x32xf32> to vector<8x8xf32>
    %112 = vector.extract_strided_slice %93 {offsets = [0, 8], sizes = [8, 8], strides = [1, 1]} : vector<8x32xf32> to vector<8x8xf32>
    %cst_47 = arith.constant dense<0.000000e+00> : vector<8x8xf32>
    %113 = tpu.matmul %111, %112, %cst_47 {dimension_numbers = #tpu.dot_dimension_numbers<[1], [1], [0], [0], [0, 0, 1, 0], [], []>} : vector<8x8xf32>, vector<8x8xf32>, vector<8x8xf32> -> vector<8x8xf32>
    %cst_48 = arith.constant dense<0xFF800000> : vector<8xf32>
    %114 = vector.multi_reduction <maximumf>, %113, %cst_48 [1] : vector<8x8xf32> to vector<8xf32>
    %115 = vector.shape_cast %114 : vector<8xf32> to vector<8x1xf32>
    %116 = vector.broadcast %115 : vector<8x1xf32> to vector<8x8xf32>
    %117 = arith.subf %113, %116 : vector<8x8xf32>
    %118 = math.exp %117 : vector<8x8xf32>
    %cst_49 = arith.constant dense<0.000000e+00> : vector<8xf32>
    %119 = vector.multi_reduction <add>, %118, %cst_49 [1] : vector<8x8xf32> to vector<8xf32>
    %120 = vector.shape_cast %119 : vector<8xf32> to vector<8x1xf32>
    %121 = vector.broadcast %120 : vector<8x1xf32> to vector<8x8xf32>
    %122 = arith.divf %118, %121 : vector<8x8xf32>
    %123 = vector.extract_strided_slice %94 {offsets = [0, 8], sizes = [8, 8], strides = [1, 1]} : vector<8x32xf32> to vector<8x8xf32>
    %cst_50 = arith.constant dense<0.000000e+00> : vector<8x8xf32>
    %124 = tpu.matmul %122, %123, %cst_50 {dimension_numbers = #tpu.dot_dimension_numbers<[1], [0], [0], [1], [0, 0, 1, 1], [], []>} : vector<8x8xf32>, vector<8x8xf32>, vector<8x8xf32> -> vector<8x8xf32>
    %125 = vector.extract_strided_slice %21 {offsets = [8, 0], sizes = [8, 32], strides = [1, 1]} : vector<32x32xf32> to vector<8x32xf32>
    %cst_51 = arith.constant dense<0.000000e+00> : vector<8x32xf32>
    %126 = tpu.matmul %124, %125, %cst_51 {dimension_numbers = #tpu.dot_dimension_numbers<[1], [0], [0], [1], [0, 0, 1, 1], [], []>} : vector<8x8xf32>, vector<8x32xf32>, vector<8x32xf32> -> vector<8x32xf32>
    %127 = arith.addf %110, %126 : vector<8x32xf32>
    %128 = vector.extract_strided_slice %92 {offsets = [0, 16], sizes = [8, 8], strides = [1, 1]} : vector<8x32xf32> to vector<8x8xf32>
    %129 = vector.extract_strided_slice %93 {offsets = [0, 16], sizes = [8, 8], strides = [1, 1]} : vector<8x32xf32> to vector<8x8xf32>
    %cst_52 = arith.constant dense<0.000000e+00> : vector<8x8xf32>
    %130 = tpu.matmul %128, %129, %cst_52 {dimension_numbers = #tpu.dot_dimension_numbers<[1], [1], [0], [0], [0, 0, 1, 0], [], []>} : vector<8x8xf32>, vector<8x8xf32>, vector<8x8xf32> -> vector<8x8xf32>
    %cst_53 = arith.constant dense<0xFF800000> : vector<8xf32>
    %131 = vector.multi_reduction <maximumf>, %130, %cst_53 [1] : vector<8x8xf32> to vector<8xf32>
    %132 = vector.shape_cast %131 : vector<8xf32> to vector<8x1xf32>
    %133 = vector.broadcast %132 : vector<8x1xf32> to vector<8x8xf32>
    %134 = arith.subf %130, %133 : vector<8x8xf32>
    %135 = math.exp %134 : vector<8x8xf32>
    %cst_54 = arith.constant dense<0.000000e+00> : vector<8xf32>
    %136 = vector.multi_reduction <add>, %135, %cst_54 [1] : vector<8x8xf32> to vector<8xf32>
    %137 = vector.shape_cast %136 : vector<8xf32> to vector<8x1xf32>
    %138 = vector.broadcast %137 : vector<8x1xf32> to vector<8x8xf32>
    %139 = arith.divf %135, %138 : vector<8x8xf32>
    %140 = vector.extract_strided_slice %94 {offsets = [0, 16], sizes = [8, 8], strides = [1, 1]} : vector<8x32xf32> to vector<8x8xf32>
    %cst_55 = arith.constant dense<0.000000e+00> : vector<8x8xf32>
    %141 = tpu.matmul %139, %140, %cst_55 {dimension_numbers = #tpu.dot_dimension_numbers<[1], [0], [0], [1], [0, 0, 1, 1], [], []>} : vector<8x8xf32>, vector<8x8xf32>, vector<8x8xf32> -> vector<8x8xf32>
    %142 = vector.extract_strided_slice %21 {offsets = [16, 0], sizes = [8, 32], strides = [1, 1]} : vector<32x32xf32> to vector<8x32xf32>
    %cst_56 = arith.constant dense<0.000000e+00> : vector<8x32xf32>
    %143 = tpu.matmul %141, %142, %cst_56 {dimension_numbers = #tpu.dot_dimension_numbers<[1], [0], [0], [1], [0, 0, 1, 1], [], []>} : vector<8x8xf32>, vector<8x32xf32>, vector<8x32xf32> -> vector<8x32xf32>
    %144 = arith.addf %127, %143 : vector<8x32xf32>
    %145 = vector.extract_strided_slice %92 {offsets = [0, 24], sizes = [8, 8], strides = [1, 1]} : vector<8x32xf32> to vector<8x8xf32>
    %146 = vector.extract_strided_slice %93 {offsets = [0, 24], sizes = [8, 8], strides = [1, 1]} : vector<8x32xf32> to vector<8x8xf32>
    %cst_57 = arith.constant dense<0.000000e+00> : vector<8x8xf32>
    %147 = tpu.matmul %145, %146, %cst_57 {dimension_numbers = #tpu.dot_dimension_numbers<[1], [1], [0], [0], [0, 0, 1, 0], [], []>} : vector<8x8xf32>, vector<8x8xf32>, vector<8x8xf32> -> vector<8x8xf32>
    %cst_58 = arith.constant dense<0xFF800000> : vector<8xf32>
    %148 = vector.multi_reduction <maximumf>, %147, %cst_58 [1] : vector<8x8xf32> to vector<8xf32>
    %149 = vector.shape_cast %148 : vector<8xf32> to vector<8x1xf32>
    %150 = vector.broadcast %149 : vector<8x1xf32> to vector<8x8xf32>
    %151 = arith.subf %147, %150 : vector<8x8xf32>
    %152 = math.exp %151 : vector<8x8xf32>
    %cst_59 = arith.constant dense<0.000000e+00> : vector<8xf32>
    %153 = vector.multi_reduction <add>, %152, %cst_59 [1] : vector<8x8xf32> to vector<8xf32>
    %154 = vector.shape_cast %153 : vector<8xf32> to vector<8x1xf32>
    %155 = vector.broadcast %154 : vector<8x1xf32> to vector<8x8xf32>
    %156 = arith.divf %152, %155 : vector<8x8xf32>
    %157 = vector.extract_strided_slice %94 {offsets = [0, 24], sizes = [8, 8], strides = [1, 1]} : vector<8x32xf32> to vector<8x8xf32>
    %cst_60 = arith.constant dense<0.000000e+00> : vector<8x8xf32>
    %158 = tpu.matmul %156, %157, %cst_60 {dimension_numbers = #tpu.dot_dimension_numbers<[1], [0], [0], [1], [0, 0, 1, 1], [], []>} : vector<8x8xf32>, vector<8x8xf32>, vector<8x8xf32> -> vector<8x8xf32>
    %159 = vector.extract_strided_slice %21 {offsets = [24, 0], sizes = [8, 32], strides = [1, 1]} : vector<32x32xf32> to vector<8x32xf32>
    %cst_61 = arith.constant dense<0.000000e+00> : vector<8x32xf32>
    %160 = tpu.matmul %158, %159, %cst_61 {dimension_numbers = #tpu.dot_dimension_numbers<[1], [0], [0], [1], [0, 0, 1, 1], [], []>} : vector<8x8xf32>, vector<8x32xf32>, vector<8x32xf32> -> vector<8x32xf32>
    %161 = arith.addf %144, %160 : vector<8x32xf32>
    %162 = tpu.concatenate %91, %161 in 0 : vector<8x32xf32>, vector<8x32xf32> -> vector<16x32xf32>
    %c0_62 = arith.constant 0 : index
    %c0_63 = arith.constant 0 : index
    %163 = vector.load %arg11[%c0_62, %c0_63] : memref<1x32xf32, #tpu.memory_space<vmem>>, vector<1x32xf32>
    %164 = vector.broadcast %163 : vector<1x32xf32> to vector<16x32xf32>
    %165 = arith.addf %162, %164 : vector<16x32xf32>
    %166 = arith.addf %0, %165 : vector<16x32xf32>
    %cst_64 = arith.constant dense<0.000000e+00> : vector<16xf32>
    %167 = vector.multi_reduction <add>, %166, %cst_64 [1] : vector<16x32xf32> to vector<16xf32>
    %168 = vector.shape_cast %167 : vector<16xf32> to vector<16x1xf32>
    %cst_65 = arith.constant 3.200000e+01 : f32
    %169 = vector.broadcast %cst_65 : f32 to vector<16x1xf32>
    %170 = arith.divf %168, %169 : vector<16x1xf32>
    %171 = vector.broadcast %170 : vector<16x1xf32> to vector<16x32xf32>
    %172 = arith.subf %166, %171 : vector<16x32xf32>
    %173 = arith.mulf %172, %172 : vector<16x32xf32>
    %cst_66 = arith.constant dense<0.000000e+00> : vector<16xf32>
    %174 = vector.multi_reduction <add>, %173, %cst_66 [1] : vector<16x32xf32> to vector<16xf32>
    %175 = vector.shape_cast %174 : vector<16xf32> to vector<16x1xf32>
    %cst_67 = arith.constant 3.200000e+01 : f32
    %176 = vector.broadcast %cst_67 : f32 to vector<16x1xf32>
    %177 = arith.divf %175, %176 : vector<16x1xf32>
    %cst_68 = arith.constant 9.99999974E-6 : f32
    %178 = vector.broadcast %cst_68 : f32 to vector<16x1xf32>
    %179 = arith.addf %177, %178 : vector<16x1xf32>
    %180 = math.rsqrt %179 : vector<16x1xf32>
    %181 = vector.broadcast %180 : vector<16x1xf32> to vector<16x32xf32>
    %182 = arith.mulf %172, %181 : vector<16x32xf32>
    %c0_69 = arith.constant 0 : index
    %c0_70 = arith.constant 0 : index
    %183 = vector.load %arg24[%c0_69, %c0_70] : memref<1x32xf32, #tpu.memory_space<vmem>>, vector<1x32xf32>
    %184 = vector.broadcast %183 : vector<1x32xf32> to vector<16x32xf32>
    %185 = arith.mulf %182, %184 : vector<16x32xf32>
    %c0_71 = arith.constant 0 : index
    %c0_72 = arith.constant 0 : index
    %186 = vector.load %arg25[%c0_71, %c0_72] : memref<1x32xf32, #tpu.memory_space<vmem>>, vector<1x32xf32>
    %187 = vector.broadcast %186 : vector<1x32xf32> to vector<16x32xf32>
    %188 = arith.addf %185, %187 : vector<16x32xf32>
    %c0_73 = arith.constant 0 : index
    %c0_74 = arith.constant 0 : index
    %189 = vector.load %arg2[%c0_73, %c0_74] : memref<16x32xf32, #tpu.memory_space<vmem>>, vector<16x32xf32>
    %190 = arith.addf %188, %189 : vector<16x32xf32>
    %c0_75 = arith.constant 0 : index
    %c0_76 = arith.constant 0 : index
    %191 = vector.load %arg3[%c0_75, %c0_76] : memref<20x32xf32, #tpu.memory_space<vmem>>, vector<20x32xf32>
    %192 = arith.addf %1, %191 : vector<20x32xf32>
    %c0_77 = arith.constant 0 : index
    %c0_78 = arith.constant 0 : index
    %193 = vector.load %arg12[%c0_77, %c0_78] : memref<32x32xf32, #tpu.memory_space<vmem>>, vector<32x32xf32>
    %cst_79 = arith.constant dense<0.000000e+00> : vector<16x32xf32>
    %194 = tpu.matmul %190, %193, %cst_79 {dimension_numbers = #tpu.dot_dimension_numbers<[1], [0], [0], [1], [0, 0, 1, 1], [], []>} : vector<16x32xf32>, vector<32x32xf32>, vector<16x32xf32> -> vector<16x32xf32>
    %c0_80 = arith.constant 0 : index
    %c0_81 = arith.constant 0 : index
    %195 = vector.load %arg15[%c0_80, %c0_81] : memref<1x32xf32, #tpu.memory_space<vmem>>, vector<1x32xf32>
    %196 = vector.broadcast %195 : vector<1x32xf32> to vector<16x32xf32>
    %197 = arith.addf %194, %196 : vector<16x32xf32>
    %cst_82 = arith.constant 0.353553385 : f32
    %198 = vector.broadcast %cst_82 : f32 to vector<16x32xf32>
    %199 = arith.mulf %197, %198 : vector<16x32xf32>
    %c0_83 = arith.constant 0 : index
    %c0_84 = arith.constant 0 : index
    %200 = vector.load %arg13[%c0_83, %c0_84] : memref<32x32xf32, #tpu.memory_space<vmem>>, vector<32x32xf32>
    %cst_85 = arith.constant dense<0.000000e+00> : vector<20x32xf32>
    %201 = tpu.matmul %192, %200, %cst_85 {dimension_numbers = #tpu.dot_dimension_numbers<[1], [0], [0], [1], [0, 0, 1, 1], [], []>} : vector<20x32xf32>, vector<32x32xf32>, vector<20x32xf32> -> vector<20x32xf32>
    %c0_86 = arith.constant 0 : index
    %c0_87 = arith.constant 0 : index
    %202 = vector.load %arg16[%c0_86, %c0_87] : memref<1x32xf32, #tpu.memory_space<vmem>>, vector<1x32xf32>
    %203 = vector.broadcast %202 : vector<1x32xf32> to vector<20x32xf32>
    %204 = arith.addf %201, %203 : vector<20x32xf32>
    %c0_88 = arith.constant 0 : index
    %c0_89 = arith.constant 0 : index
    %205 = vector.load %arg14[%c0_88, %c0_89] : memref<32x32xf32, #tpu.memory_space<vmem>>, vector<32x32xf32>
    %cst_90 = arith.constant dense<0.000000e+00> : vector<20x32xf32>
    %206 = tpu.matmul %1, %205, %cst_90 {dimension_numbers = #tpu.dot_dimension_numbers<[1], [0], [0], [1], [0, 0, 1, 1], [], []>} : vector<20x32xf32>, vector<32x32xf32>, vector<20x32xf32> -> vector<20x32xf32>
    %c0_91 = arith.constant 0 : index
    %c0_92 = arith.constant 0 : index
    %207 = vector.load %arg17[%c0_91, %c0_92] : memref<1x32xf32, #tpu.memory_space<vmem>>, vector<1x32xf32>
    %208 = vector.broadcast %207 : vector<1x32xf32> to vector<20x32xf32>
    %209 = arith.addf %206, %208 : vector<20x32xf32>
    %c0_93 = arith.constant 0 : index
    %c0_94 = arith.constant 0 : index
    %210 = vector.load %arg18[%c0_93, %c0_94] : memref<32x32xf32, #tpu.memory_space<vmem>>, vector<32x32xf32>
    %211 = vector.extract_strided_slice %199 {offsets = [0, 0], sizes = [8, 32], strides = [1, 1]} : vector<16x32xf32> to vector<8x32xf32>
    %212 = vector.extract_strided_slice %204 {offsets = [0, 0], sizes = [10, 32], strides = [1, 1]} : vector<20x32xf32> to vector<10x32xf32>
    %213 = vector.extract_strided_slice %209 {offsets = [0, 0], sizes = [10, 32], strides = [1, 1]} : vector<20x32xf32> to vector<10x32xf32>
    %214 = vector.extract_strided_slice %211 {offsets = [0, 0], sizes = [8, 8], strides = [1, 1]} : vector<8x32xf32> to vector<8x8xf32>
    %215 = vector.extract_strided_slice %212 {offsets = [0, 0], sizes = [10, 8], strides = [1, 1]} : vector<10x32xf32> to vector<10x8xf32>
    %cst_95 = arith.constant dense<0.000000e+00> : vector<8x10xf32>
    %216 = tpu.matmul %214, %215, %cst_95 {dimension_numbers = #tpu.dot_dimension_numbers<[1], [1], [0], [0], [0, 0, 1, 0], [], []>} : vector<8x8xf32>, vector<10x8xf32>, vector<8x10xf32> -> vector<8x10xf32>
    %cst_96 = arith.constant dense<0xFF800000> : vector<8xf32>
    %217 = vector.multi_reduction <maximumf>, %216, %cst_96 [1] : vector<8x10xf32> to vector<8xf32>
    %218 = vector.shape_cast %217 : vector<8xf32> to vector<8x1xf32>
    %219 = vector.broadcast %218 : vector<8x1xf32> to vector<8x10xf32>
    %220 = arith.subf %216, %219 : vector<8x10xf32>
    %221 = math.exp %220 : vector<8x10xf32>
    %cst_97 = arith.constant dense<0.000000e+00> : vector<8xf32>
    %222 = vector.multi_reduction <add>, %221, %cst_97 [1] : vector<8x10xf32> to vector<8xf32>
    %223 = vector.shape_cast %222 : vector<8xf32> to vector<8x1xf32>
    %224 = vector.broadcast %223 : vector<8x1xf32> to vector<8x10xf32>
    %225 = arith.divf %221, %224 : vector<8x10xf32>
    %226 = vector.extract_strided_slice %213 {offsets = [0, 0], sizes = [10, 8], strides = [1, 1]} : vector<10x32xf32> to vector<10x8xf32>
    %cst_98 = arith.constant dense<0.000000e+00> : vector<8x8xf32>
    %227 = tpu.matmul %225, %226, %cst_98 {dimension_numbers = #tpu.dot_dimension_numbers<[1], [0], [0], [1], [0, 0, 1, 1], [], []>} : vector<8x10xf32>, vector<10x8xf32>, vector<8x8xf32> -> vector<8x8xf32>
    %228 = vector.extract_strided_slice %210 {offsets = [0, 0], sizes = [8, 32], strides = [1, 1]} : vector<32x32xf32> to vector<8x32xf32>
    %cst_99 = arith.constant dense<0.000000e+00> : vector<8x32xf32>
    %229 = tpu.matmul %227, %228, %cst_99 {dimension_numbers = #tpu.dot_dimension_numbers<[1], [0], [0], [1], [0, 0, 1, 1], [], []>} : vector<8x8xf32>, vector<8x32xf32>, vector<8x32xf32> -> vector<8x32xf32>
    %230 = vector.extract_strided_slice %211 {offsets = [0, 8], sizes = [8, 8], strides = [1, 1]} : vector<8x32xf32> to vector<8x8xf32>
    %231 = vector.extract_strided_slice %212 {offsets = [0, 8], sizes = [10, 8], strides = [1, 1]} : vector<10x32xf32> to vector<10x8xf32>
    %cst_100 = arith.constant dense<0.000000e+00> : vector<8x10xf32>
    %232 = tpu.matmul %230, %231, %cst_100 {dimension_numbers = #tpu.dot_dimension_numbers<[1], [1], [0], [0], [0, 0, 1, 0], [], []>} : vector<8x8xf32>, vector<10x8xf32>, vector<8x10xf32> -> vector<8x10xf32>
    %cst_101 = arith.constant dense<0xFF800000> : vector<8xf32>
    %233 = vector.multi_reduction <maximumf>, %232, %cst_101 [1] : vector<8x10xf32> to vector<8xf32>
    %234 = vector.shape_cast %233 : vector<8xf32> to vector<8x1xf32>
    %235 = vector.broadcast %234 : vector<8x1xf32> to vector<8x10xf32>
    %236 = arith.subf %232, %235 : vector<8x10xf32>
    %237 = math.exp %236 : vector<8x10xf32>
    %cst_102 = arith.constant dense<0.000000e+00> : vector<8xf32>
    %238 = vector.multi_reduction <add>, %237, %cst_102 [1] : vector<8x10xf32> to vector<8xf32>
    %239 = vector.shape_cast %238 : vector<8xf32> to vector<8x1xf32>
    %240 = vector.broadcast %239 : vector<8x1xf32> to vector<8x10xf32>
    %241 = arith.divf %237, %240 : vector<8x10xf32>
    %242 = vector.extract_strided_slice %213 {offsets = [0, 8], sizes = [10, 8], strides = [1, 1]} : vector<10x32xf32> to vector<10x8xf32>
    %cst_103 = arith.constant dense<0.000000e+00> : vector<8x8xf32>
    %243 = tpu.matmul %241, %242, %cst_103 {dimension_numbers = #tpu.dot_dimension_numbers<[1], [0], [0], [1], [0, 0, 1, 1], [], []>} : vector<8x10xf32>, vector<10x8xf32>, vector<8x8xf32> -> vector<8x8xf32>
    %244 = vector.extract_strided_slice %210 {offsets = [8, 0], sizes = [8, 32], strides = [1, 1]} : vector<32x32xf32> to vector<8x32xf32>
    %cst_104 = arith.constant dense<0.000000e+00> : vector<8x32xf32>
    %245 = tpu.matmul %243, %244, %cst_104 {dimension_numbers = #tpu.dot_dimension_numbers<[1], [0], [0], [1], [0, 0, 1, 1], [], []>} : vector<8x8xf32>, vector<8x32xf32>, vector<8x32xf32> -> vector<8x32xf32>
    %246 = arith.addf %229, %245 : vector<8x32xf32>
    %247 = vector.extract_strided_slice %211 {offsets = [0, 16], sizes = [8, 8], strides = [1, 1]} : vector<8x32xf32> to vector<8x8xf32>
    %248 = vector.extract_strided_slice %212 {offsets = [0, 16], sizes = [10, 8], strides = [1, 1]} : vector<10x32xf32> to vector<10x8xf32>
    %cst_105 = arith.constant dense<0.000000e+00> : vector<8x10xf32>
    %249 = tpu.matmul %247, %248, %cst_105 {dimension_numbers = #tpu.dot_dimension_numbers<[1], [1], [0], [0], [0, 0, 1, 0], [], []>} : vector<8x8xf32>, vector<10x8xf32>, vector<8x10xf32> -> vector<8x10xf32>
    %cst_106 = arith.constant dense<0xFF800000> : vector<8xf32>
    %250 = vector.multi_reduction <maximumf>, %249, %cst_106 [1] : vector<8x10xf32> to vector<8xf32>
    %251 = vector.shape_cast %250 : vector<8xf32> to vector<8x1xf32>
    %252 = vector.broadcast %251 : vector<8x1xf32> to vector<8x10xf32>
    %253 = arith.subf %249, %252 : vector<8x10xf32>
    %254 = math.exp %253 : vector<8x10xf32>
    %cst_107 = arith.constant dense<0.000000e+00> : vector<8xf32>
    %255 = vector.multi_reduction <add>, %254, %cst_107 [1] : vector<8x10xf32> to vector<8xf32>
    %256 = vector.shape_cast %255 : vector<8xf32> to vector<8x1xf32>
    %257 = vector.broadcast %256 : vector<8x1xf32> to vector<8x10xf32>
    %258 = arith.divf %254, %257 : vector<8x10xf32>
    %259 = vector.extract_strided_slice %213 {offsets = [0, 16], sizes = [10, 8], strides = [1, 1]} : vector<10x32xf32> to vector<10x8xf32>
    %cst_108 = arith.constant dense<0.000000e+00> : vector<8x8xf32>
    %260 = tpu.matmul %258, %259, %cst_108 {dimension_numbers = #tpu.dot_dimension_numbers<[1], [0], [0], [1], [0, 0, 1, 1], [], []>} : vector<8x10xf32>, vector<10x8xf32>, vector<8x8xf32> -> vector<8x8xf32>
    %261 = vector.extract_strided_slice %210 {offsets = [16, 0], sizes = [8, 32], strides = [1, 1]} : vector<32x32xf32> to vector<8x32xf32>
    %cst_109 = arith.constant dense<0.000000e+00> : vector<8x32xf32>
    %262 = tpu.matmul %260, %261, %cst_109 {dimension_numbers = #tpu.dot_dimension_numbers<[1], [0], [0], [1], [0, 0, 1, 1], [], []>} : vector<8x8xf32>, vector<8x32xf32>, vector<8x32xf32> -> vector<8x32xf32>
    %263 = arith.addf %246, %262 : vector<8x32xf32>
    %264 = vector.extract_strided_slice %211 {offsets = [0, 24], sizes = [8, 8], strides = [1, 1]} : vector<8x32xf32> to vector<8x8xf32>
    %265 = vector.extract_strided_slice %212 {offsets = [0, 24], sizes = [10, 8], strides = [1, 1]} : vector<10x32xf32> to vector<10x8xf32>
    %cst_110 = arith.constant dense<0.000000e+00> : vector<8x10xf32>
    %266 = tpu.matmul %264, %265, %cst_110 {dimension_numbers = #tpu.dot_dimension_numbers<[1], [1], [0], [0], [0, 0, 1, 0], [], []>} : vector<8x8xf32>, vector<10x8xf32>, vector<8x10xf32> -> vector<8x10xf32>
    %cst_111 = arith.constant dense<0xFF800000> : vector<8xf32>
    %267 = vector.multi_reduction <maximumf>, %266, %cst_111 [1] : vector<8x10xf32> to vector<8xf32>
    %268 = vector.shape_cast %267 : vector<8xf32> to vector<8x1xf32>
    %269 = vector.broadcast %268 : vector<8x1xf32> to vector<8x10xf32>
    %270 = arith.subf %266, %269 : vector<8x10xf32>
    %271 = math.exp %270 : vector<8x10xf32>
    %cst_112 = arith.constant dense<0.000000e+00> : vector<8xf32>
    %272 = vector.multi_reduction <add>, %271, %cst_112 [1] : vector<8x10xf32> to vector<8xf32>
    %273 = vector.shape_cast %272 : vector<8xf32> to vector<8x1xf32>
    %274 = vector.broadcast %273 : vector<8x1xf32> to vector<8x10xf32>
    %275 = arith.divf %271, %274 : vector<8x10xf32>
    %276 = vector.extract_strided_slice %213 {offsets = [0, 24], sizes = [10, 8], strides = [1, 1]} : vector<10x32xf32> to vector<10x8xf32>
    %cst_113 = arith.constant dense<0.000000e+00> : vector<8x8xf32>
    %277 = tpu.matmul %275, %276, %cst_113 {dimension_numbers = #tpu.dot_dimension_numbers<[1], [0], [0], [1], [0, 0, 1, 1], [], []>} : vector<8x10xf32>, vector<10x8xf32>, vector<8x8xf32> -> vector<8x8xf32>
    %278 = vector.extract_strided_slice %210 {offsets = [24, 0], sizes = [8, 32], strides = [1, 1]} : vector<32x32xf32> to vector<8x32xf32>
    %cst_114 = arith.constant dense<0.000000e+00> : vector<8x32xf32>
    %279 = tpu.matmul %277, %278, %cst_114 {dimension_numbers = #tpu.dot_dimension_numbers<[1], [0], [0], [1], [0, 0, 1, 1], [], []>} : vector<8x8xf32>, vector<8x32xf32>, vector<8x32xf32> -> vector<8x32xf32>
    %280 = arith.addf %263, %279 : vector<8x32xf32>
    %281 = vector.extract_strided_slice %199 {offsets = [8, 0], sizes = [8, 32], strides = [1, 1]} : vector<16x32xf32> to vector<8x32xf32>
    %282 = vector.extract_strided_slice %204 {offsets = [10, 0], sizes = [10, 32], strides = [1, 1]} : vector<20x32xf32> to vector<10x32xf32>
    %283 = vector.extract_strided_slice %209 {offsets = [10, 0], sizes = [10, 32], strides = [1, 1]} : vector<20x32xf32> to vector<10x32xf32>
    %284 = vector.extract_strided_slice %281 {offsets = [0, 0], sizes = [8, 8], strides = [1, 1]} : vector<8x32xf32> to vector<8x8xf32>
    %285 = vector.extract_strided_slice %282 {offsets = [0, 0], sizes = [10, 8], strides = [1, 1]} : vector<10x32xf32> to vector<10x8xf32>
    %cst_115 = arith.constant dense<0.000000e+00> : vector<8x10xf32>
    %286 = tpu.matmul %284, %285, %cst_115 {dimension_numbers = #tpu.dot_dimension_numbers<[1], [1], [0], [0], [0, 0, 1, 0], [], []>} : vector<8x8xf32>, vector<10x8xf32>, vector<8x10xf32> -> vector<8x10xf32>
    %cst_116 = arith.constant dense<0xFF800000> : vector<8xf32>
    %287 = vector.multi_reduction <maximumf>, %286, %cst_116 [1] : vector<8x10xf32> to vector<8xf32>
    %288 = vector.shape_cast %287 : vector<8xf32> to vector<8x1xf32>
    %289 = vector.broadcast %288 : vector<8x1xf32> to vector<8x10xf32>
    %290 = arith.subf %286, %289 : vector<8x10xf32>
    %291 = math.exp %290 : vector<8x10xf32>
    %cst_117 = arith.constant dense<0.000000e+00> : vector<8xf32>
    %292 = vector.multi_reduction <add>, %291, %cst_117 [1] : vector<8x10xf32> to vector<8xf32>
    %293 = vector.shape_cast %292 : vector<8xf32> to vector<8x1xf32>
    %294 = vector.broadcast %293 : vector<8x1xf32> to vector<8x10xf32>
    %295 = arith.divf %291, %294 : vector<8x10xf32>
    %296 = vector.extract_strided_slice %283 {offsets = [0, 0], sizes = [10, 8], strides = [1, 1]} : vector<10x32xf32> to vector<10x8xf32>
    %cst_118 = arith.constant dense<0.000000e+00> : vector<8x8xf32>
    %297 = tpu.matmul %295, %296, %cst_118 {dimension_numbers = #tpu.dot_dimension_numbers<[1], [0], [0], [1], [0, 0, 1, 1], [], []>} : vector<8x10xf32>, vector<10x8xf32>, vector<8x8xf32> -> vector<8x8xf32>
    %298 = vector.extract_strided_slice %210 {offsets = [0, 0], sizes = [8, 32], strides = [1, 1]} : vector<32x32xf32> to vector<8x32xf32>
    %cst_119 = arith.constant dense<0.000000e+00> : vector<8x32xf32>
    %299 = tpu.matmul %297, %298, %cst_119 {dimension_numbers = #tpu.dot_dimension_numbers<[1], [0], [0], [1], [0, 0, 1, 1], [], []>} : vector<8x8xf32>, vector<8x32xf32>, vector<8x32xf32> -> vector<8x32xf32>
    %300 = vector.extract_strided_slice %281 {offsets = [0, 8], sizes = [8, 8], strides = [1, 1]} : vector<8x32xf32> to vector<8x8xf32>
    %301 = vector.extract_strided_slice %282 {offsets = [0, 8], sizes = [10, 8], strides = [1, 1]} : vector<10x32xf32> to vector<10x8xf32>
    %cst_120 = arith.constant dense<0.000000e+00> : vector<8x10xf32>
    %302 = tpu.matmul %300, %301, %cst_120 {dimension_numbers = #tpu.dot_dimension_numbers<[1], [1], [0], [0], [0, 0, 1, 0], [], []>} : vector<8x8xf32>, vector<10x8xf32>, vector<8x10xf32> -> vector<8x10xf32>
    %cst_121 = arith.constant dense<0xFF800000> : vector<8xf32>
    %303 = vector.multi_reduction <maximumf>, %302, %cst_121 [1] : vector<8x10xf32> to vector<8xf32>
    %304 = vector.shape_cast %303 : vector<8xf32> to vector<8x1xf32>
    %305 = vector.broadcast %304 : vector<8x1xf32> to vector<8x10xf32>
    %306 = arith.subf %302, %305 : vector<8x10xf32>
    %307 = math.exp %306 : vector<8x10xf32>
    %cst_122 = arith.constant dense<0.000000e+00> : vector<8xf32>
    %308 = vector.multi_reduction <add>, %307, %cst_122 [1] : vector<8x10xf32> to vector<8xf32>
    %309 = vector.shape_cast %308 : vector<8xf32> to vector<8x1xf32>
    %310 = vector.broadcast %309 : vector<8x1xf32> to vector<8x10xf32>
    %311 = arith.divf %307, %310 : vector<8x10xf32>
    %312 = vector.extract_strided_slice %283 {offsets = [0, 8], sizes = [10, 8], strides = [1, 1]} : vector<10x32xf32> to vector<10x8xf32>
    %cst_123 = arith.constant dense<0.000000e+00> : vector<8x8xf32>
    %313 = tpu.matmul %311, %312, %cst_123 {dimension_numbers = #tpu.dot_dimension_numbers<[1], [0], [0], [1], [0, 0, 1, 1], [], []>} : vector<8x10xf32>, vector<10x8xf32>, vector<8x8xf32> -> vector<8x8xf32>
    %314 = vector.extract_strided_slice %210 {offsets = [8, 0], sizes = [8, 32], strides = [1, 1]} : vector<32x32xf32> to vector<8x32xf32>
    %cst_124 = arith.constant dense<0.000000e+00> : vector<8x32xf32>
    %315 = tpu.matmul %313, %314, %cst_124 {dimension_numbers = #tpu.dot_dimension_numbers<[1], [0], [0], [1], [0, 0, 1, 1], [], []>} : vector<8x8xf32>, vector<8x32xf32>, vector<8x32xf32> -> vector<8x32xf32>
    %316 = arith.addf %299, %315 : vector<8x32xf32>
    %317 = vector.extract_strided_slice %281 {offsets = [0, 16], sizes = [8, 8], strides = [1, 1]} : vector<8x32xf32> to vector<8x8xf32>
    %318 = vector.extract_strided_slice %282 {offsets = [0, 16], sizes = [10, 8], strides = [1, 1]} : vector<10x32xf32> to vector<10x8xf32>
    %cst_125 = arith.constant dense<0.000000e+00> : vector<8x10xf32>
    %319 = tpu.matmul %317, %318, %cst_125 {dimension_numbers = #tpu.dot_dimension_numbers<[1], [1], [0], [0], [0, 0, 1, 0], [], []>} : vector<8x8xf32>, vector<10x8xf32>, vector<8x10xf32> -> vector<8x10xf32>
    %cst_126 = arith.constant dense<0xFF800000> : vector<8xf32>
    %320 = vector.multi_reduction <maximumf>, %319, %cst_126 [1] : vector<8x10xf32> to vector<8xf32>
    %321 = vector.shape_cast %320 : vector<8xf32> to vector<8x1xf32>
    %322 = vector.broadcast %321 : vector<8x1xf32> to vector<8x10xf32>
    %323 = arith.subf %319, %322 : vector<8x10xf32>
    %324 = math.exp %323 : vector<8x10xf32>
    %cst_127 = arith.constant dense<0.000000e+00> : vector<8xf32>
    %325 = vector.multi_reduction <add>, %324, %cst_127 [1] : vector<8x10xf32> to vector<8xf32>
    %326 = vector.shape_cast %325 : vector<8xf32> to vector<8x1xf32>
    %327 = vector.broadcast %326 : vector<8x1xf32> to vector<8x10xf32>
    %328 = arith.divf %324, %327 : vector<8x10xf32>
    %329 = vector.extract_strided_slice %283 {offsets = [0, 16], sizes = [10, 8], strides = [1, 1]} : vector<10x32xf32> to vector<10x8xf32>
    %cst_128 = arith.constant dense<0.000000e+00> : vector<8x8xf32>
    %330 = tpu.matmul %328, %329, %cst_128 {dimension_numbers = #tpu.dot_dimension_numbers<[1], [0], [0], [1], [0, 0, 1, 1], [], []>} : vector<8x10xf32>, vector<10x8xf32>, vector<8x8xf32> -> vector<8x8xf32>
    %331 = vector.extract_strided_slice %210 {offsets = [16, 0], sizes = [8, 32], strides = [1, 1]} : vector<32x32xf32> to vector<8x32xf32>
    %cst_129 = arith.constant dense<0.000000e+00> : vector<8x32xf32>
    %332 = tpu.matmul %330, %331, %cst_129 {dimension_numbers = #tpu.dot_dimension_numbers<[1], [0], [0], [1], [0, 0, 1, 1], [], []>} : vector<8x8xf32>, vector<8x32xf32>, vector<8x32xf32> -> vector<8x32xf32>
    %333 = arith.addf %316, %332 : vector<8x32xf32>
    %334 = vector.extract_strided_slice %281 {offsets = [0, 24], sizes = [8, 8], strides = [1, 1]} : vector<8x32xf32> to vector<8x8xf32>
    %335 = vector.extract_strided_slice %282 {offsets = [0, 24], sizes = [10, 8], strides = [1, 1]} : vector<10x32xf32> to vector<10x8xf32>
    %cst_130 = arith.constant dense<0.000000e+00> : vector<8x10xf32>
    %336 = tpu.matmul %334, %335, %cst_130 {dimension_numbers = #tpu.dot_dimension_numbers<[1], [1], [0], [0], [0, 0, 1, 0], [], []>} : vector<8x8xf32>, vector<10x8xf32>, vector<8x10xf32> -> vector<8x10xf32>
    %cst_131 = arith.constant dense<0xFF800000> : vector<8xf32>
    %337 = vector.multi_reduction <maximumf>, %336, %cst_131 [1] : vector<8x10xf32> to vector<8xf32>
    %338 = vector.shape_cast %337 : vector<8xf32> to vector<8x1xf32>
    %339 = vector.broadcast %338 : vector<8x1xf32> to vector<8x10xf32>
    %340 = arith.subf %336, %339 : vector<8x10xf32>
    %341 = math.exp %340 : vector<8x10xf32>
    %cst_132 = arith.constant dense<0.000000e+00> : vector<8xf32>
    %342 = vector.multi_reduction <add>, %341, %cst_132 [1] : vector<8x10xf32> to vector<8xf32>
    %343 = vector.shape_cast %342 : vector<8xf32> to vector<8x1xf32>
    %344 = vector.broadcast %343 : vector<8x1xf32> to vector<8x10xf32>
    %345 = arith.divf %341, %344 : vector<8x10xf32>
    %346 = vector.extract_strided_slice %283 {offsets = [0, 24], sizes = [10, 8], strides = [1, 1]} : vector<10x32xf32> to vector<10x8xf32>
    %cst_133 = arith.constant dense<0.000000e+00> : vector<8x8xf32>
    %347 = tpu.matmul %345, %346, %cst_133 {dimension_numbers = #tpu.dot_dimension_numbers<[1], [0], [0], [1], [0, 0, 1, 1], [], []>} : vector<8x10xf32>, vector<10x8xf32>, vector<8x8xf32> -> vector<8x8xf32>
    %348 = vector.extract_strided_slice %210 {offsets = [24, 0], sizes = [8, 32], strides = [1, 1]} : vector<32x32xf32> to vector<8x32xf32>
    %cst_134 = arith.constant dense<0.000000e+00> : vector<8x32xf32>
    %349 = tpu.matmul %347, %348, %cst_134 {dimension_numbers = #tpu.dot_dimension_numbers<[1], [0], [0], [1], [0, 0, 1, 1], [], []>} : vector<8x8xf32>, vector<8x32xf32>, vector<8x32xf32> -> vector<8x32xf32>
    %350 = arith.addf %333, %349 : vector<8x32xf32>
    %351 = tpu.concatenate %280, %350 in 0 : vector<8x32xf32>, vector<8x32xf32> -> vector<16x32xf32>
    %c0_135 = arith.constant 0 : index
    %c0_136 = arith.constant 0 : index
    %352 = vector.load %arg19[%c0_135, %c0_136] : memref<1x32xf32, #tpu.memory_space<vmem>>, vector<1x32xf32>
    %353 = vector.broadcast %352 : vector<1x32xf32> to vector<16x32xf32>
    %354 = arith.addf %351, %353 : vector<16x32xf32>
    %355 = arith.addf %188, %354 : vector<16x32xf32>
    %cst_137 = arith.constant dense<0.000000e+00> : vector<16xf32>
    %356 = vector.multi_reduction <add>, %355, %cst_137 [1] : vector<16x32xf32> to vector<16xf32>
    %357 = vector.shape_cast %356 : vector<16xf32> to vector<16x1xf32>
    %cst_138 = arith.constant 3.200000e+01 : f32
    %358 = vector.broadcast %cst_138 : f32 to vector<16x1xf32>
    %359 = arith.divf %357, %358 : vector<16x1xf32>
    %360 = vector.broadcast %359 : vector<16x1xf32> to vector<16x32xf32>
    %361 = arith.subf %355, %360 : vector<16x32xf32>
    %362 = arith.mulf %361, %361 : vector<16x32xf32>
    %cst_139 = arith.constant dense<0.000000e+00> : vector<16xf32>
    %363 = vector.multi_reduction <add>, %362, %cst_139 [1] : vector<16x32xf32> to vector<16xf32>
    %364 = vector.shape_cast %363 : vector<16xf32> to vector<16x1xf32>
    %cst_140 = arith.constant 3.200000e+01 : f32
    %365 = vector.broadcast %cst_140 : f32 to vector<16x1xf32>
    %366 = arith.divf %364, %365 : vector<16x1xf32>
    %cst_141 = arith.constant 9.99999974E-6 : f32
    %367 = vector.broadcast %cst_141 : f32 to vector<16x1xf32>
    %368 = arith.addf %366, %367 : vector<16x1xf32>
    %369 = math.rsqrt %368 : vector<16x1xf32>
    %370 = vector.broadcast %369 : vector<16x1xf32> to vector<16x32xf32>
    %371 = arith.mulf %361, %370 : vector<16x32xf32>
    %c0_142 = arith.constant 0 : index
    %c0_143 = arith.constant 0 : index
    %372 = vector.load %arg26[%c0_142, %c0_143] : memref<1x32xf32, #tpu.memory_space<vmem>>, vector<1x32xf32>
    %373 = vector.broadcast %372 : vector<1x32xf32> to vector<16x32xf32>
    %374 = arith.mulf %371, %373 : vector<16x32xf32>
    %c0_144 = arith.constant 0 : index
    %c0_145 = arith.constant 0 : index
    %375 = vector.load %arg27[%c0_144, %c0_145] : memref<1x32xf32, #tpu.memory_space<vmem>>, vector<1x32xf32>
    %376 = vector.broadcast %375 : vector<1x32xf32> to vector<16x32xf32>
    %377 = arith.addf %374, %376 : vector<16x32xf32>
    %c0_146 = arith.constant 0 : index
    %c0_147 = arith.constant 0 : index
    %378 = vector.load %arg20[%c0_146, %c0_147] : memref<32x64xf32, #tpu.memory_space<vmem>>, vector<32x64xf32>
    %cst_148 = arith.constant dense<0.000000e+00> : vector<16x64xf32>
    %379 = tpu.matmul %377, %378, %cst_148 {dimension_numbers = #tpu.dot_dimension_numbers<[1], [0], [0], [1], [0, 0, 1, 1], [], []>} : vector<16x32xf32>, vector<32x64xf32>, vector<16x64xf32> -> vector<16x64xf32>
    %c0_149 = arith.constant 0 : index
    %c0_150 = arith.constant 0 : index
    %380 = vector.load %arg21[%c0_149, %c0_150] : memref<1x64xf32, #tpu.memory_space<vmem>>, vector<1x64xf32>
    %381 = vector.broadcast %380 : vector<1x64xf32> to vector<16x64xf32>
    %382 = arith.addf %379, %381 : vector<16x64xf32>
    %cst_151 = arith.constant 0.000000e+00 : f32
    %383 = vector.broadcast %cst_151 : f32 to vector<16x64xf32>
    %384 = arith.maximumf %382, %383 : vector<16x64xf32>
    %c0_152 = arith.constant 0 : index
    %c0_153 = arith.constant 0 : index
    %385 = vector.load %arg22[%c0_152, %c0_153] : memref<64x32xf32, #tpu.memory_space<vmem>>, vector<64x32xf32>
    %cst_154 = arith.constant dense<0.000000e+00> : vector<16x32xf32>
    %386 = tpu.matmul %384, %385, %cst_154 {dimension_numbers = #tpu.dot_dimension_numbers<[1], [0], [0], [1], [0, 0, 1, 1], [], []>} : vector<16x64xf32>, vector<64x32xf32>, vector<16x32xf32> -> vector<16x32xf32>
    %c0_155 = arith.constant 0 : index
    %c0_156 = arith.constant 0 : index
    %387 = vector.load %arg23[%c0_155, %c0_156] : memref<1x32xf32, #tpu.memory_space<vmem>>, vector<1x32xf32>
    %388 = vector.broadcast %387 : vector<1x32xf32> to vector<16x32xf32>
    %389 = arith.addf %386, %388 : vector<16x32xf32>
    %390 = arith.addf %377, %389 : vector<16x32xf32>
    %cst_157 = arith.constant dense<0.000000e+00> : vector<16xf32>
    %391 = vector.multi_reduction <add>, %390, %cst_157 [1] : vector<16x32xf32> to vector<16xf32>
    %392 = vector.shape_cast %391 : vector<16xf32> to vector<16x1xf32>
    %cst_158 = arith.constant 3.200000e+01 : f32
    %393 = vector.broadcast %cst_158 : f32 to vector<16x1xf32>
    %394 = arith.divf %392, %393 : vector<16x1xf32>
    %395 = vector.broadcast %394 : vector<16x1xf32> to vector<16x32xf32>
    %396 = arith.subf %390, %395 : vector<16x32xf32>
    %397 = arith.mulf %396, %396 : vector<16x32xf32>
    %cst_159 = arith.constant dense<0.000000e+00> : vector<16xf32>
    %398 = vector.multi_reduction <add>, %397, %cst_159 [1] : vector<16x32xf32> to vector<16xf32>
    %399 = vector.shape_cast %398 : vector<16xf32> to vector<16x1xf32>
    %cst_160 = arith.constant 3.200000e+01 : f32
    %400 = vector.broadcast %cst_160 : f32 to vector<16x1xf32>
    %401 = arith.divf %399, %400 : vector<16x1xf32>
    %cst_161 = arith.constant 9.99999974E-6 : f32
    %402 = vector.broadcast %cst_161 : f32 to vector<16x1xf32>
    %403 = arith.addf %401, %402 : vector<16x1xf32>
    %404 = math.rsqrt %403 : vector<16x1xf32>
    %405 = vector.broadcast %404 : vector<16x1xf32> to vector<16x32xf32>
    %406 = arith.mulf %396, %405 : vector<16x32xf32>
    %c0_162 = arith.constant 0 : index
    %c0_163 = arith.constant 0 : index
    %407 = vector.load %arg28[%c0_162, %c0_163] : memref<1x32xf32, #tpu.memory_space<vmem>>, vector<1x32xf32>
    %408 = vector.broadcast %407 : vector<1x32xf32> to vector<16x32xf32>
    %409 = arith.mulf %406, %408 : vector<16x32xf32>
    %c0_164 = arith.constant 0 : index
    %c0_165 = arith.constant 0 : index
    %410 = vector.load %arg29[%c0_164, %c0_165] : memref<1x32xf32, #tpu.memory_space<vmem>>, vector<1x32xf32>
    %411 = vector.broadcast %410 : vector<1x32xf32> to vector<16x32xf32>
    %412 = arith.addf %409, %411 : vector<16x32xf32>
    %c0_166 = arith.constant 0 : index
    %c0_167 = arith.constant 0 : index
    %413 = vector.load %arg30[%c0_166, %c0_167] : memref<16x32xf32, #tpu.memory_space<vmem>>, vector<16x32xf32>
    tpu.vector_store %arg30[%c0_166, %c0_167], %412 {strides = array<i32>} : memref<16x32xf32, #tpu.memory_space<vmem>>, vector<16x32xf32>,
    return
  }
}

</mosaic_0001>

<llo_original>
// kernel: transformer_decoder_layer.1
$region0: #{transformer_decoder_layer.1}
  #allocation0 [shape = 'u32[]', space=smem, size = 0x4, offset = 0x4, fixed_abs, tag = 'smem constant byte address 0x4 - core index']
  #allocation1 [shape = 'u32[144,128]{1,0:T(1,128)}', space=vmem, size = 0x12000, scoped, tag = 'internal scratch']
  %s0 = inlined_call_operand.smem [shape: u32[31], index: -1, kind: input, shape index: {}]
  %s1 = sld [smem:[%s0]]
  %s2 = scalar_lea.smem %s0, 1
  %s3 = sld [smem:[%s2]]
  %s4 = scalar_lea.smem %s0, 2
  %s5 = sld [smem:[%s4]]
  %s6 = scalar_lea.smem %s0, 3
  %s7 = sld [smem:[%s6]]
  %s8 = scalar_lea.smem %s0, 4
  %s9 = sld [smem:[%s8]]
  %s10 = scalar_lea.smem %s0, 5
  %s11 = sld [smem:[%s10]]
  %s12 = scalar_lea.smem %s0, 6
  %s13 = sld [smem:[%s12]]
  %s14 = scalar_lea.smem %s0, 7
  %s15 = sld [smem:[%s14]]
  %s16 = scalar_lea.smem %s0, 8
  %s17 = sld [smem:[%s16]]
  %s18 = scalar_lea.smem %s0, 9
  %s19 = sld [smem:[%s18]]
  %s20 = scalar_lea.smem %s0, 10
  %s21 = sld [smem:[%s20]]
  %s22 = scalar_lea.smem %s0, 11
  %s23 = sld [smem:[%s22]]
  %s24 = scalar_lea.smem %s0, 12
  %s25 = sld [smem:[%s24]]
  %s26 = scalar_lea.smem %s0, 13
  %s27 = sld [smem:[%s26]]
  %s28 = scalar_lea.smem %s0, 14
  %s29 = sld [smem:[%s28]]
  %s30 = scalar_lea.smem %s0, 15
  %s31 = sld [smem:[%s30]]
  %s32 = scalar_lea.smem %s0, 16
  %s33 = sld [smem:[%s32]]
  %s34 = scalar_lea.smem %s0, 17
  %s35 = sld [smem:[%s34]]
  %s36 = scalar_lea.smem %s0, 18
  %s37 = sld [smem:[%s36]]
  %s38 = scalar_lea.smem %s0, 19
  %s39 = sld [smem:[%s38]]
  %s40 = scalar_lea.smem %s0, 20
  %s41 = sld [smem:[%s40]]
  %s42 = scalar_lea.smem %s0, 21
  %s43 = sld [smem:[%s42]]
  %s44 = scalar_lea.smem %s0, 22
  %s45 = sld [smem:[%s44]]
  %s46 = scalar_lea.smem %s0, 23
  %s47 = sld [smem:[%s46]]
  %s48 = scalar_lea.smem %s0, 24
  %s49 = sld [smem:[%s48]]
  %s50 = scalar_lea.smem %s0, 25
  %s51 = sld [smem:[%s50]]
  %s52 = scalar_lea.smem %s0, 26
  %s53 = sld [smem:[%s52]]
  %s54 = scalar_lea.smem %s0, 27
  %s55 = sld [smem:[%s54]]
  %s56 = scalar_lea.smem %s0, 28
  %s57 = sld [smem:[%s56]]
  %s58 = scalar_lea.smem %s0, 29
  %s59 = sld [smem:[%s58]]
  %s60 = scalar_lea.smem %s0, 30
  %s61 = sld [smem:[%s60]]
  %s62 = sld [smem:[#allocation0]]
  $region130: #{transformer_decoder_layer.1} parent=0
    _
  %s64 = ssub.s32 1, %s62
  %s65 = scalar_select 0, %s64, %s62
  // Predicated region
  $region2: #{transformer_decoder_layer.1} parent=0 // pred_check
    _
  $region3: #{transformer_decoder_layer.1} parent=0 // pred_check_branch
    %67 = sbr.rel (0) target = $region5
  $region4: #{transformer_decoder_layer.1} parent=0 // pred_region
    _
  $region5: #{transformer_decoder_layer.1} parent=0 // pred_fallthru
    _
  // Predicated region
  $region6: #{transformer_decoder_layer.1} parent=0 // pred_check
    _
  $region7: #{transformer_decoder_layer.1} parent=0 // pred_check_branch
    %69 = sbr.rel (0) target = $region9
  $region8: #{transformer_decoder_layer.1} parent=0 // pred_region
    _
  $region9: #{transformer_decoder_layer.1} parent=0 // pred_fallthru
    _
  // Predicated region
  $region10: #{transformer_decoder_layer.1} parent=0 // pred_check
    _
  $region11: #{transformer_decoder_layer.1} parent=0 // pred_check_branch
    %71 = sbr.rel (0) target = $region13
  $region12: #{transformer_decoder_layer.1} parent=0 // pred_region
    _
  $region13: #{transformer_decoder_layer.1} parent=0 // pred_fallthru
    _
  // Predicated region
  $region14: #{transformer_decoder_layer.1} parent=0 // pred_check
    _
  $region15: #{transformer_decoder_layer.1} parent=0 // pred_check_branch
    %73 = sbr.rel (0) target = $region17
  $region16: #{transformer_decoder_layer.1} parent=0 // pred_region
    _
  $region17: #{transformer_decoder_layer.1} parent=0 // pred_fallthru
    _
  // Predicated region
  $region18: #{transformer_decoder_layer.1} parent=0 // pred_check
    _
  $region19: #{transformer_decoder_layer.1} parent=0 // pred_check_branch
    %75 = sbr.rel (0) target = $region21
  $region20: #{transformer_decoder_layer.1} parent=0 // pred_region
    _
  $region21: #{transformer_decoder_layer.1} parent=0 // pred_fallthru
    _
  // Predicated region
  $region22: #{transformer_decoder_layer.1} parent=0 // pred_check
    _
  $region23: #{transformer_decoder_layer.1} parent=0 // pred_check_branch
    %77 = sbr.rel (0) target = $region25
  $region24: #{transformer_decoder_layer.1} parent=0 // pred_region
    _
  $region25: #{transformer_decoder_layer.1} parent=0 // pred_fallthru
    _
  // Predicated region
  $region26: #{transformer_decoder_layer.1} parent=0 // pred_check
    _
  $region27: #{transformer_decoder_layer.1} parent=0 // pred_check_branch
    %79 = sbr.rel (0) target = $region29
  $region28: #{transformer_decoder_layer.1} parent=0 // pred_region
    _
  $region29: #{transformer_decoder_layer.1} parent=0 // pred_fallthru
    _
  // Predicated region
  $region30: #{transformer_decoder_layer.1} parent=0 // pred_check
    _
  $region31: #{transformer_decoder_layer.1} parent=0 // pred_check_branch
    %81 = sbr.rel (0) target = $region33
  $region32: #{transformer_decoder_layer.1} parent=0 // pred_region
    _
  $region33: #{transformer_decoder_layer.1} parent=0 // pred_fallthru
    _
  // Predicated region
  $region34: #{transformer_decoder_layer.1} parent=0 // pred_check
    _
  $region35: #{transformer_decoder_layer.1} parent=0 // pred_check_branch
    %83 = sbr.rel (0) target = $region37
  $region36: #{transformer_decoder_layer.1} parent=0 // pred_region
    _
  $region37: #{transformer_decoder_layer.1} parent=0 // pred_fallthru
    _
  // Predicated region
  $region38: #{transformer_decoder_layer.1} parent=0 // pred_check
    _
  $region39: #{transformer_decoder_layer.1} parent=0 // pred_check_branch
    %85 = sbr.rel (0) target = $region41
  $region40: #{transformer_decoder_layer.1} parent=0 // pred_region
    _
  $region41: #{transformer_decoder_layer.1} parent=0 // pred_fallthru
    _
  // Predicated region
  $region42: #{transformer_decoder_layer.1} parent=0 // pred_check
    _
  $region43: #{transformer_decoder_layer.1} parent=0 // pred_check_branch
    %87 = sbr.rel (0) target = $region45
  $region44: #{transformer_decoder_layer.1} parent=0 // pred_region
    _
  $region45: #{transformer_decoder_layer.1} parent=0 // pred_fallthru
    _
  // Predicated region
  $region46: #{transformer_decoder_layer.1} parent=0 // pred_check
    _
  $region47: #{transformer_decoder_layer.1} parent=0 // pred_check_branch
    %89 = sbr.rel (0) target = $region49
  $region48: #{transformer_decoder_layer.1} parent=0 // pred_region
    _
  $region49: #{transformer_decoder_layer.1} parent=0 // pred_fallthru
    _
  // Predicated region
  $region50: #{transformer_decoder_layer.1} parent=0 // pred_check
    _
  $region51: #{transformer_decoder_layer.1} parent=0 // pred_check_branch
    %91 = sbr.rel (0) target = $region53
  $region52: #{transformer_decoder_layer.1} parent=0 // pred_region
    _
  $region53: #{transformer_decoder_layer.1} parent=0 // pred_fallthru
    _
  // Predicated region
  $region54: #{transformer_decoder_layer.1} parent=0 // pred_check
    _
  $region55: #{transformer_decoder_layer.1} parent=0 // pred_check_branch
    %93 = sbr.rel (0) target = $region57
  $region56: #{transformer_decoder_layer.1} parent=0 // pred_region
    _
  $region57: #{transformer_decoder_layer.1} parent=0 // pred_fallthru
    _
  // Predicated region
  $region58: #{transformer_decoder_layer.1} parent=0 // pred_check
    _
  $region59: #{transformer_decoder_layer.1} parent=0 // pred_check_branch
    %95 = sbr.rel (0) target = $region61
  $region60: #{transformer_decoder_layer.1} parent=0 // pred_region
    _
  $region61: #{transformer_decoder_layer.1} parent=0 // pred_fallthru
    _
  // Predicated region
  $region62: #{transformer_decoder_layer.1} parent=0 // pred_check
    _
  $region63: #{transformer_decoder_layer.1} parent=0 // pred_check_branch
    %97 = sbr.rel (0) target = $region65
  $region64: #{transformer_decoder_layer.1} parent=0 // pred_region
    _
  $region65: #{transformer_decoder_layer.1} parent=0 // pred_fallthru
    _
  // Predicated region
  $region66: #{transformer_decoder_layer.1} parent=0 // pred_check
    _
  $region67: #{transformer_decoder_layer.1} parent=0 // pred_check_branch
    %99 = sbr.rel (0) target = $region69
  $region68: #{transformer_decoder_layer.1} parent=0 // pred_region
    _
  $region69: #{transformer_decoder_layer.1} parent=0 // pred_fallthru
    _
  // Predicated region
  $region70: #{transformer_decoder_layer.1} parent=0 // pred_check
    _
  $region71: #{transformer_decoder_layer.1} parent=0 // pred_check_branch
    %101 = sbr.rel (0) target = $region73
  $region72: #{transformer_decoder_layer.1} parent=0 // pred_region
    _
  $region73: #{transformer_decoder_layer.1} parent=0 // pred_fallthru
    _
  // Predicated region
  $region74: #{transformer_decoder_layer.1} parent=0 // pred_check
    _
  $region75: #{transformer_decoder_layer.1} parent=0 // pred_check_branch
    %103 = sbr.rel (0) target = $region77
  $region76: #{transformer_decoder_layer.1} parent=0 // pred_region
    _
  $region77: #{transformer_decoder_layer.1} parent=0 // pred_fallthru
    _
  // Predicated region
  $region78: #{transformer_decoder_layer.1} parent=0 // pred_check
    _
  $region79: #{transformer_decoder_layer.1} parent=0 // pred_check_branch
    %105 = sbr.rel (0) target = $region81
  $region80: #{transformer_decoder_layer.1} parent=0 // pred_region
    _
  $region81: #{transformer_decoder_layer.1} parent=0 // pred_fallthru
    _
  // Predicated region
  $region82: #{transformer_decoder_layer.1} parent=0 // pred_check
    _
  $region83: #{transformer_decoder_layer.1} parent=0 // pred_check_branch
    %107 = sbr.rel (0) target = $region85
  $region84: #{transformer_decoder_layer.1} parent=0 // pred_region
    _
  $region85: #{transformer_decoder_layer.1} parent=0 // pred_fallthru
    _
  // Predicated region
  $region86: #{transformer_decoder_layer.1} parent=0 // pred_check
    _
  $region87: #{transformer_decoder_layer.1} parent=0 // pred_check_branch
    %109 = sbr.rel (0) target = $region89
  $region88: #{transformer_decoder_layer.1} parent=0 // pred_region
    _
  $region89: #{transformer_decoder_layer.1} parent=0 // pred_fallthru
    _
  // Predicated region
  $region90: #{transformer_decoder_layer.1} parent=0 // pred_check
    _
  $region91: #{transformer_decoder_layer.1} parent=0 // pred_check_branch
    %111 = sbr.rel (0) target = $region93
  $region92: #{transformer_decoder_layer.1} parent=0 // pred_region
    _
  $region93: #{transformer_decoder_layer.1} parent=0 // pred_fallthru
    _
  // Predicated region
  $region94: #{transformer_decoder_layer.1} parent=0 // pred_check
    _
  $region95: #{transformer_decoder_layer.1} parent=0 // pred_check_branch
    %113 = sbr.rel (0) target = $region97
  $region96: #{transformer_decoder_layer.1} parent=0 // pred_region
    _
  $region97: #{transformer_decoder_layer.1} parent=0 // pred_fallthru
    _
  // Predicated region
  $region98: #{transformer_decoder_layer.1} parent=0 // pred_check
    _
  $region99: #{transformer_decoder_layer.1} parent=0 // pred_check_branch
    %115 = sbr.rel (0) target = $region101
  $region100: #{transformer_decoder_layer.1} parent=0 // pred_region
    _
  $region101: #{transformer_decoder_layer.1} parent=0 // pred_fallthru
    _
  // Predicated region
  $region102: #{transformer_decoder_layer.1} parent=0 // pred_check
    _
  $region103: #{transformer_decoder_layer.1} parent=0 // pred_check_branch
    %117 = sbr.rel (0) target = $region105
  $region104: #{transformer_decoder_layer.1} parent=0 // pred_region
    _
  $region105: #{transformer_decoder_layer.1} parent=0 // pred_fallthru
    _
  // Predicated region
  $region106: #{transformer_decoder_layer.1} parent=0 // pred_check
    _
  $region107: #{transformer_decoder_layer.1} parent=0 // pred_check_branch
    %119 = sbr.rel (0) target = $region109
  $region108: #{transformer_decoder_layer.1} parent=0 // pred_region
    _
  $region109: #{transformer_decoder_layer.1} parent=0 // pred_fallthru
    _
  // Predicated region
  $region110: #{transformer_decoder_layer.1} parent=0 // pred_check
    _
  $region111: #{transformer_decoder_layer.1} parent=0 // pred_check_branch
    %121 = sbr.rel (0) target = $region113
  $region112: #{transformer_decoder_layer.1} parent=0 // pred_region
    _
  $region113: #{transformer_decoder_layer.1} parent=0 // pred_fallthru
    _
  // Predicated region
  $region114: #{transformer_decoder_layer.1} parent=0 // pred_check
    _
  $region115: #{transformer_decoder_layer.1} parent=0 // pred_check_branch
    %123 = sbr.rel (0) target = $region117
  $region116: #{transformer_decoder_layer.1} parent=0 // pred_region
    _
  $region117: #{transformer_decoder_layer.1} parent=0 // pred_fallthru
    _
  // Predicated region
  $region118: #{transformer_decoder_layer.1} parent=0 // pred_check
    _
  $region119: #{transformer_decoder_layer.1} parent=0 // pred_check_branch
    %125 = sbr.rel (0) target = $region121
  $region120: #{transformer_decoder_layer.1} parent=0 // pred_region
    _
  $region121: #{transformer_decoder_layer.1} parent=0 // pred_fallthru
    _
  %v126 = vld [vmem:[%s1] sm:$0xff]
  %v127 = vld [vmem:[%s1 + $0x8] sm:$0xff]
  %v128 = vld [vmem:[%s3] sm:$0xff]
  %v129 = vld [vmem:[%s3 + $0x8] sm:$0xff]
  %v130 = vld [vmem:[%s3 + $0x10] sm:$0xf]
  %v131 = vld [vmem:[%s5] sm:$0xff]
  %v132 = vld [vmem:[%s5 + $0x8] sm:$0xff]
  %v133 = vadd.f32 %v126, %v131
  %v134 = vadd.f32 %v127, %v132
  %v135 = vld [vmem:[%s9] sm:$0xff]
  %v136 = vld [vmem:[%s9 + $0x8] sm:$0xff]
  %v137 = vld [vmem:[%s9 + $0x10] sm:$0xff]
  %v138 = vld [vmem:[%s9 + $0x18] sm:$0xff]
  %v139 = vld [vmem:[%s15] sm:$0x1]
  %v141 = vlaneseq
  %v142 = vshrl.u32 %v141, 7
  %v143 = vsub.s32 0, %v142
  %v144 = vrot.slane %v139, %v143
  %vm146 = vcmask 261120
  %v148 = vsel %vm146, %v133, 0
  %v151 = vsel %vm146, %v134, 0
  %153 = vmatprep.subr.mxu0 0.0
  %154 = vmatpush1.msra.mxu0 %v135
  %155 = vmatprep.subr.mxu0 0.0
  %156 = vmatpush1.msra.mxu0 %v136
  %157 = vmatprep.subr.mxu0 0.0
  %158 = vmatpush1.msra.mxu0 %v137
  %159 = vmatprep.subr.mxu0 0.0
  %160 = vmatpush1.msra.mxu0 %v138
  %161 = vmatprep.subr.mxu0 0.0
  %162 = vmatpush1.msra.mxu0 0.0
  %163 = vmatprep.subr.mxu0 0.0
  %164 = vmatpush1.msra.mxu0 0.0
  %165 = vmatprep.subr.mxu0 0.0
  %166 = vmatpush1.msra.mxu0 0.0
  %167 = vmatprep.subr.mxu0 0.0
  %168 = vmatpush1.msra.mxu0 0.0
  %169 = vmatprep.subr.mxu0 0.0
  %170 = vmatpush1.msra.mxu0 0.0
  %171 = vmatprep.subr.mxu0 0.0
  %172 = vmatpush1.msra.mxu0 0.0
  %173 = vmatprep.subr.mxu0 0.0
  %174 = vmatpush1.msra.mxu0 0.0
  %175 = vmatprep.subr.mxu0 0.0
  %176 = vmatpush1.msra.mxu0 0.0
  %177 = vmatprep.subr.mxu0 0.0
  %178 = vmatpush1.msra.mxu0 0.0
  %179 = vmatprep.subr.mxu0 0.0
  %180 = vmatpush1.msra.mxu0 0.0
  %181 = vmatprep.subr.mxu0 0.0
  %182 = vmatpush1.msra.mxu0 0.0
  %183 = vmatprep.subr.mxu0 0.0
  %184 = vmatpush1.msra.mxu0 0.0
  %185 = vmatprep.subr.mxu0 0.0
  %186 = vmatpush1.msra.mxu0 0.0
  %187 = vmatprep.subr.mxu0 0.0
  %188 = vmatpush1.msra.mxu0 0.0
  %189 = vmatprep.subr.mxu0 0.0
  %190 = vmatpush1.msra.mxu0 0.0
  %191 = vmatprep.subr.mxu0 0.0
  %192 = vmatpush1.msra.mxu0 0.0
  %193 = vmatprep.subr.mxu0 0.0
  %194 = vmatpush1.msra.mxu0 0.0
  %195 = vmatprep.subr.mxu0 0.0
  %196 = vmatpush1.msra.mxu0 0.0
  %197 = vmatprep.subr.mxu0 0.0
  %198 = vmatpush1.msra.mxu0 0.0
  %199 = vmatprep.subr.mxu0 0.0
  %200 = vmatpush1.msra.mxu0 0.0
  %201 = vmatprep.subr.mxu0 0.0
  %202 = vmatpush1.msra.mxu0 0.0
  %203 = vmatprep.subr.mxu0 0.0
  %204 = vmatpush1.msra.mxu0 0.0
  %205 = vmatprep.subr.mxu0 0.0
  %206 = vmatpush1.msra.mxu0 0.0
  %207 = vmatprep.subr.mxu0 0.0
  %208 = vmatpush1.msra.mxu0 0.0
  %209 = vmatprep.subr.mxu0 0.0
  %210 = vmatpush1.msra.mxu0 0.0
  %211 = vmatprep.subr.mxu0 0.0
  %212 = vmatpush1.msra.mxu0 0.0
  %213 = vmatprep.subr.mxu0 0.0
  %214 = vmatpush1.msra.mxu0 0.0
  %215 = vmatprep.subr.mxu0 0.0
  %216 = vmatpush1.msra.mxu0 0.0
  %217 = vmatprep.mubr.f32.mxu0 0.0
  %218 = vmatmul.mubr.f32.gmra.mrb[0].mxu0 %v148
  %v219 = vpop.f32.mrb[0].mxu0
  %v220 = vadd.f32 %v144, %v219
  %v221 = vpop.f32.mrb[0].mxu0
  %222 = vmatprep.mubr.f32.mxu0 0.0
  %223 = vmatmul.mubr.f32.gmra.mrb[0].mxu0 %v151
  %v224 = vpop.f32.mrb[0].mxu0
  %v225 = vadd.f32 %v144, %v224
  %v226 = vpop.f32.mrb[0].mxu0
  %227 = vdwg.mxu0
  %v228 = vmul.f32 %v220, 0.35355338
  %v229 = vmul.f32 %v225, 0.35355338
  %v230 = vld [vmem:[%s11] sm:$0xff]
  %v231 = vld [vmem:[%s11 + $0x8] sm:$0xff]
  %v232 = vld [vmem:[%s11 + $0x10] sm:$0xff]
  %v233 = vld [vmem:[%s11 + $0x18] sm:$0xff]
  %v234 = vld [vmem:[%s17] sm:$0x1]
  %v236 = vlaneseq
  %v237 = vshrl.u32 %v236, 7
  %v238 = vsub.s32 0, %v237
  %v239 = vrot.slane %v234, %v238
  %241 = vmatprep.subr.mxu0 0.0
  %242 = vmatpush1.msra.mxu0 %v230
  %243 = vmatprep.subr.mxu0 0.0
  %244 = vmatpush1.msra.mxu0 %v231
  %245 = vmatprep.subr.mxu0 0.0
  %246 = vmatpush1.msra.mxu0 %v232
  %247 = vmatprep.subr.mxu0 0.0
  %248 = vmatpush1.msra.mxu0 %v233
  %249 = vmatprep.subr.mxu0 0.0
  %250 = vmatpush1.msra.mxu0 0.0
  %251 = vmatprep.subr.mxu0 0.0
  %252 = vmatpush1.msra.mxu0 0.0
  %253 = vmatprep.subr.mxu0 0.0
  %254 = vmatpush1.msra.mxu0 0.0
  %255 = vmatprep.subr.mxu0 0.0
  %256 = vmatpush1.msra.mxu0 0.0
  %257 = vmatprep.subr.mxu0 0.0
  %258 = vmatpush1.msra.mxu0 0.0
  %259 = vmatprep.subr.mxu0 0.0
  %260 = vmatpush1.msra.mxu0 0.0
  %261 = vmatprep.subr.mxu0 0.0
  %262 = vmatpush1.msra.mxu0 0.0
  %263 = vmatprep.subr.mxu0 0.0
  %264 = vmatpush1.msra.mxu0 0.0
  %265 = vmatprep.subr.mxu0 0.0
  %266 = vmatpush1.msra.mxu0 0.0
  %267 = vmatprep.subr.mxu0 0.0
  %268 = vmatpush1.msra.mxu0 0.0
  %269 = vmatprep.subr.mxu0 0.0
  %270 = vmatpush1.msra.mxu0 0.0
  %271 = vmatprep.subr.mxu0 0.0
  %272 = vmatpush1.msra.mxu0 0.0
  %273 = vmatprep.subr.mxu0 0.0
  %274 = vmatpush1.msra.mxu0 0.0
  %275 = vmatprep.subr.mxu0 0.0
  %276 = vmatpush1.msra.mxu0 0.0
  %277 = vmatprep.subr.mxu0 0.0
  %278 = vmatpush1.msra.mxu0 0.0
  %279 = vmatprep.subr.mxu0 0.0
  %280 = vmatpush1.msra.mxu0 0.0
  %281 = vmatprep.subr.mxu0 0.0
  %282 = vmatpush1.msra.mxu0 0.0
  %283 = vmatprep.subr.mxu0 0.0
  %284 = vmatpush1.msra.mxu0 0.0
  %285 = vmatprep.subr.mxu0 0.0
  %286 = vmatpush1.msra.mxu0 0.0
  %287 = vmatprep.subr.mxu0 0.0
  %288 = vmatpush1.msra.mxu0 0.0
  %289 = vmatprep.subr.mxu0 0.0
  %290 = vmatpush1.msra.mxu0 0.0
  %291 = vmatprep.subr.mxu0 0.0
  %292 = vmatpush1.msra.mxu0 0.0
  %293 = vmatprep.subr.mxu0 0.0
  %294 = vmatpush1.msra.mxu0 0.0
  %295 = vmatprep.subr.mxu0 0.0
  %296 = vmatpush1.msra.mxu0 0.0
  %297 = vmatprep.subr.mxu0 0.0
  %298 = vmatpush1.msra.mxu0 0.0
  %299 = vmatprep.subr.mxu0 0.0
  %300 = vmatpush1.msra.mxu0 0.0
  %301 = vmatprep.subr.mxu0 0.0
  %302 = vmatpush1.msra.mxu0 0.0
  %303 = vmatprep.subr.mxu0 0.0
  %304 = vmatpush1.msra.mxu0 0.0
  %305 = vmatprep.mubr.f32.mxu0 0.0
  %306 = vmatmul.mubr.f32.gmra.mrb[0].mxu0 %v148
  %v307 = vpop.f32.mrb[0].mxu0
  %v308 = vadd.f32 %v239, %v307
  %v309 = vpop.f32.mrb[0].mxu0
  %310 = vmatprep.mubr.f32.mxu0 0.0
  %311 = vmatmul.mubr.f32.gmra.mrb[0].mxu0 %v151
  %v312 = vpop.f32.mrb[0].mxu0
  %v313 = vadd.f32 %v239, %v312
  %v314 = vpop.f32.mrb[0].mxu0
  %315 = vdwg.mxu0
  %v316 = vld [vmem:[%s13] sm:$0xff]
  %v317 = vld [vmem:[%s13 + $0x8] sm:$0xff]
  %v318 = vld [vmem:[%s13 + $0x10] sm:$0xff]
  %v319 = vld [vmem:[%s13 + $0x18] sm:$0xff]
  %v320 = vld [vmem:[%s19] sm:$0x1]
  %v322 = vlaneseq
  %v323 = vshrl.u32 %v322, 7
  %v324 = vsub.s32 0, %v323
  %v325 = vrot.slane %v320, %v324
  %v328 = vsel %vm146, %v126, 0
  %v331 = vsel %vm146, %v127, 0
  %333 = vmatprep.subr.mxu0 0.0
  %334 = vmatpush1.msra.mxu0 %v316
  %335 = vmatprep.subr.mxu0 0.0
  %336 = vmatpush1.msra.mxu0 %v317
  %337 = vmatprep.subr.mxu0 0.0
  %338 = vmatpush1.msra.mxu0 %v318
  %339 = vmatprep.subr.mxu0 0.0
  %340 = vmatpush1.msra.mxu0 %v319
  %341 = vmatprep.subr.mxu0 0.0
  %342 = vmatpush1.msra.mxu0 0.0
  %343 = vmatprep.subr.mxu0 0.0
  %344 = vmatpush1.msra.mxu0 0.0
  %345 = vmatprep.subr.mxu0 0.0
  %346 = vmatpush1.msra.mxu0 0.0
  %347 = vmatprep.subr.mxu0 0.0
  %348 = vmatpush1.msra.mxu0 0.0
  %349 = vmatprep.subr.mxu0 0.0
  %350 = vmatpush1.msra.mxu0 0.0
  %351 = vmatprep.subr.mxu0 0.0
  %352 = vmatpush1.msra.mxu0 0.0
  %353 = vmatprep.subr.mxu0 0.0
  %354 = vmatpush1.msra.mxu0 0.0
  %355 = vmatprep.subr.mxu0 0.0
  %356 = vmatpush1.msra.mxu0 0.0
  %357 = vmatprep.subr.mxu0 0.0
  %358 = vmatpush1.msra.mxu0 0.0
  %359 = vmatprep.subr.mxu0 0.0
  %360 = vmatpush1.msra.mxu0 0.0
  %361 = vmatprep.subr.mxu0 0.0
  %362 = vmatpush1.msra.mxu0 0.0
  %363 = vmatprep.subr.mxu0 0.0
  %364 = vmatpush1.msra.mxu0 0.0
  %365 = vmatprep.subr.mxu0 0.0
  %366 = vmatpush1.msra.mxu0 0.0
  %367 = vmatprep.subr.mxu0 0.0
  %368 = vmatpush1.msra.mxu0 0.0
  %369 = vmatprep.subr.mxu0 0.0
  %370 = vmatpush1.msra.mxu0 0.0
  %371 = vmatprep.subr.mxu0 0.0
  %372 = vmatpush1.msra.mxu0 0.0
  %373 = vmatprep.subr.mxu0 0.0
  %374 = vmatpush1.msra.mxu0 0.0
  %375 = vmatprep.subr.mxu0 0.0
  %376 = vmatpush1.msra.mxu0 0.0
  %377 = vmatprep.subr.mxu0 0.0
  %378 = vmatpush1.msra.mxu0 0.0
  %379 = vmatprep.subr.mxu0 0.0
  %380 = vmatpush1.msra.mxu0 0.0
  %381 = vmatprep.subr.mxu0 0.0
  %382 = vmatpush1.msra.mxu0 0.0
  %383 = vmatprep.subr.mxu0 0.0
  %384 = vmatpush1.msra.mxu0 0.0
  %385 = vmatprep.subr.mxu0 0.0
  %386 = vmatpush1.msra.mxu0 0.0
  %387 = vmatprep.subr.mxu0 0.0
  %388 = vmatpush1.msra.mxu0 0.0
  %389 = vmatprep.subr.mxu0 0.0
  %390 = vmatpush1.msra.mxu0 0.0
  %391 = vmatprep.subr.mxu0 0.0
  %392 = vmatpush1.msra.mxu0 0.0
  %393 = vmatprep.subr.mxu0 0.0
  %394 = vmatpush1.msra.mxu0 0.0
  %395 = vmatprep.subr.mxu0 0.0
  %396 = vmatpush1.msra.mxu0 0.0
  %397 = vmatprep.mubr.f32.mxu0 0.0
  %398 = vmatmul.mubr.f32.gmra.mrb[0].mxu0 %v328
  %v399 = vpop.f32.mrb[0].mxu0
  %v400 = vadd.f32 %v325, %v399
  %v401 = vpop.f32.mrb[0].mxu0
  %402 = vmatprep.mubr.f32.mxu0 0.0
  %403 = vmatmul.mubr.f32.gmra.mrb[0].mxu0 %v331
  %v404 = vpop.f32.mrb[0].mxu0
  %v405 = vadd.f32 %v325, %v404
  %v406 = vpop.f32.mrb[0].mxu0
  %407 = vdwg.mxu0
  %v408 = vld [vmem:[%s21] sm:$0xff]
  %v409 = vld [vmem:[%s21 + $0x8] sm:$0xff]
  %v410 = vld [vmem:[%s21 + $0x10] sm:$0xff]
  %v411 = vld [vmem:[%s21 + $0x18] sm:$0xff]
  %vm412 = vcmask 64512
  %v414 = vsel %vm412, %v228, 0
  %v417 = vsel %vm412, %v308, 0
  %419 = vmatprep.subr.mxu0 0.0
  %420 = vmatpush1.xpose.msra.mxu0 %v417
  %421 = vmatprep.subr.mxu0 0.0
  %422 = vmatpush1.xpose.msra.mxu0 0.0
  %423 = vmatprep.subr.mxu0 0.0
  %424 = vmatpush1.xpose.msra.mxu0 0.0
  %425 = vmatprep.subr.mxu0 0.0
  %426 = vmatpush1.xpose.msra.mxu0 0.0
  %427 = vmatprep.subr.mxu0 0.0
  %428 = vmatpush1.xpose.msra.mxu0 0.0
  %429 = vmatprep.subr.mxu0 0.0
  %430 = vmatpush1.xpose.msra.mxu0 0.0
  %431 = vmatprep.subr.mxu0 0.0
  %432 = vmatpush1.xpose.msra.mxu0 0.0
  %433 = vmatprep.subr.mxu0 0.0
  %434 = vmatpush1.xpose.msra.mxu0 0.0
  %435 = vmatprep.subr.mxu0 0.0
  %436 = vmatpush1.xpose.msra.mxu0 0.0
  %437 = vmatprep.subr.mxu0 0.0
  %438 = vmatpush1.xpose.msra.mxu0 0.0
  %439 = vmatprep.subr.mxu0 0.0
  %440 = vmatpush1.xpose.msra.mxu0 0.0
  %441 = vmatprep.subr.mxu0 0.0
  %442 = vmatpush1.xpose.msra.mxu0 0.0
  %443 = vmatprep.subr.mxu0 0.0
  %444 = vmatpush1.xpose.msra.mxu0 0.0
  %445 = vmatprep.subr.mxu0 0.0
  %446 = vmatpush1.xpose.msra.mxu0 0.0
  %447 = vmatprep.subr.mxu0 0.0
  %448 = vmatpush1.xpose.msra.mxu0 0.0
  %449 = vmatprep.subr.mxu0 0.0
  %450 = vmatpush1.xpose.msra.mxu0 0.0
  %451 = vmatprep.subr.mxu0 0.0
  %452 = vmatpush1.xpose.msra.mxu0 0.0
  %453 = vmatprep.subr.mxu0 0.0
  %454 = vmatpush1.xpose.msra.mxu0 0.0
  %455 = vmatprep.subr.mxu0 0.0
  %456 = vmatpush1.xpose.msra.mxu0 0.0
  %457 = vmatprep.subr.mxu0 0.0
  %458 = vmatpush1.xpose.msra.mxu0 0.0
  %459 = vmatprep.subr.mxu0 0.0
  %460 = vmatpush1.xpose.msra.mxu0 0.0
  %461 = vmatprep.subr.mxu0 0.0
  %462 = vmatpush1.xpose.msra.mxu0 0.0
  %463 = vmatprep.subr.mxu0 0.0
  %464 = vmatpush1.xpose.msra.mxu0 0.0
  %465 = vmatprep.subr.mxu0 0.0
  %466 = vmatpush1.xpose.msra.mxu0 0.0
  %467 = vmatprep.subr.mxu0 0.0
  %468 = vmatpush1.xpose.msra.mxu0 0.0
  %469 = vmatprep.subr.mxu0 0.0
  %470 = vmatpush1.xpose.msra.mxu0 0.0
  %471 = vmatprep.subr.mxu0 0.0
  %472 = vmatpush1.xpose.msra.mxu0 0.0
  %473 = vmatprep.subr.mxu0 0.0
  %474 = vmatpush1.xpose.msra.mxu0 0.0
  %475 = vmatprep.subr.mxu0 0.0
  %476 = vmatpush1.xpose.msra.mxu0 0.0
  %477 = vmatprep.subr.mxu0 0.0
  %478 = vmatpush1.xpose.msra.mxu0 0.0
  %479 = vmatprep.subr.mxu0 0.0
  %480 = vmatpush1.xpose.msra.mxu0 0.0
  %481 = vmatprep.subr.mxu0 0.0
  %482 = vmatpush1.xpose.msra.mxu0 0.0
  %483 = vmatprep.mubr.f32.mxu0 0.0
  %484 = vmatmul.mubr.f32.gmra.mrb[0].mxu0 %v414
  %v485 = vpop.f32.mrb[0].mxu0
  %v486 = vadd.f32 0.0, %v485
  %v487 = vpop.f32.mrb[0].mxu0
  %488 = vdwg.mxu0
  %v489 = vsel %vm412, %v486, -inf
  %490 = vmax.xlane.f32.xlu0 %v489
  %v491 = vpop.xlane.xlu0 %490
  %v492 = vsub.f32 %v486, %v491
  %v493 = vmul.f32 %v492, 1.442695
  %v494 = vpow.pop %v493
  %v495 = vsel %vm412, %v494, 0.0
  %496 = vadd.xlane.f32.xlu0 %v495
  %v497 = vpop.xlane.xlu0 %496
  %v498 = vrcp.pop %v497
  %v499 = vmul.f32 %v494, %v498
  %v501 = vsel %vm412, %v499, 0
  %503 = vmatprep.subr.mxu0 0.0
  %504 = vmatpush1.msra.mxu0 %v400
  %505 = vmatprep.subr.mxu0 0.0
  %506 = vmatpush1.msra.mxu0 0.0
  %507 = vmatprep.subr.mxu0 0.0
  %508 = vmatpush1.msra.mxu0 0.0
  %509 = vmatprep.subr.mxu0 0.0
  %510 = vmatpush1.msra.mxu0 0.0
  %511 = vmatprep.subr.mxu0 0.0
  %512 = vmatpush1.msra.mxu0 0.0
  %513 = vmatprep.subr.mxu0 0.0
  %514 = vmatpush1.msra.mxu0 0.0
  %515 = vmatprep.subr.mxu0 0.0
  %516 = vmatpush1.msra.mxu0 0.0
  %517 = vmatprep.subr.mxu0 0.0
  %518 = vmatpush1.msra.mxu0 0.0
  %519 = vmatprep.subr.mxu0 0.0
  %520 = vmatpush1.msra.mxu0 0.0
  %521 = vmatprep.subr.mxu0 0.0
  %522 = vmatpush1.msra.mxu0 0.0
  %523 = vmatprep.subr.mxu0 0.0
  %524 = vmatpush1.msra.mxu0 0.0
  %525 = vmatprep.subr.mxu0 0.0
  %526 = vmatpush1.msra.mxu0 0.0
  %527 = vmatprep.subr.mxu0 0.0
  %528 = vmatpush1.msra.mxu0 0.0
  %529 = vmatprep.subr.mxu0 0.0
  %530 = vmatpush1.msra.mxu0 0.0
  %531 = vmatprep.subr.mxu0 0.0
  %532 = vmatpush1.msra.mxu0 0.0
  %533 = vmatprep.subr.mxu0 0.0
  %534 = vmatpush1.msra.mxu0 0.0
  %535 = vmatprep.subr.mxu0 0.0
  %536 = vmatpush1.msra.mxu0 0.0
  %537 = vmatprep.subr.mxu0 0.0
  %538 = vmatpush1.msra.mxu0 0.0
  %539 = vmatprep.subr.mxu0 0.0
  %540 = vmatpush1.msra.mxu0 0.0
  %541 = vmatprep.subr.mxu0 0.0
  %542 = vmatpush1.msra.mxu0 0.0
  %543 = vmatprep.subr.mxu0 0.0
  %544 = vmatpush1.msra.mxu0 0.0
  %545 = vmatprep.subr.mxu0 0.0
  %546 = vmatpush1.msra.mxu0 0.0
  %547 = vmatprep.subr.mxu0 0.0
  %548 = vmatpush1.msra.mxu0 0.0
  %549 = vmatprep.subr.mxu0 0.0
  %550 = vmatpush1.msra.mxu0 0.0
  %551 = vmatprep.subr.mxu0 0.0
  %552 = vmatpush1.msra.mxu0 0.0
  %553 = vmatprep.subr.mxu0 0.0
  %554 = vmatpush1.msra.mxu0 0.0
  %555 = vmatprep.subr.mxu0 0.0
  %556 = vmatpush1.msra.mxu0 0.0
  %557 = vmatprep.subr.mxu0 0.0
  %558 = vmatpush1.msra.mxu0 0.0
  %559 = vmatprep.subr.mxu0 0.0
  %560 = vmatpush1.msra.mxu0 0.0
  %561 = vmatprep.subr.mxu0 0.0
  %562 = vmatpush1.msra.mxu0 0.0
  %563 = vmatprep.subr.mxu0 0.0
  %564 = vmatpush1.msra.mxu0 0.0
  %565 = vmatprep.subr.mxu0 0.0
  %566 = vmatpush1.msra.mxu0 0.0
  %567 = vmatprep.mubr.f32.mxu0 0.0
  %568 = vmatmul.mubr.f32.gmra.mrb[0].mxu0 %v501
  %v569 = vpop.f32.mrb[0].mxu0
  %v570 = vadd.f32 0.0, %v569
  %v571 = vpop.f32.mrb[0].mxu0
  %572 = vdwg.mxu0
  %573 = vrot.lane.b32.xlu0 %v228, 120
  %v574 = vpop.permute.xlu0 %573
  %575 = vrot.lane.b32.xlu0 %v308, 120
  %v576 = vpop.permute.xlu0 %575
  %v577 = vsel %vm412, %v574, 0
  %v579 = vsel %vm412, %v576, 0
  %581 = vmatprep.subr.mxu0 0.0
  %582 = vmatpush1.xpose.msra.mxu0 %v579
  %583 = vmatprep.subr.mxu0 0.0
  %584 = vmatpush1.xpose.msra.mxu0 0.0
  %585 = vmatprep.subr.mxu0 0.0
  %586 = vmatpush1.xpose.msra.mxu0 0.0
  %587 = vmatprep.subr.mxu0 0.0
  %588 = vmatpush1.xpose.msra.mxu0 0.0
  %589 = vmatprep.subr.mxu0 0.0
  %590 = vmatpush1.xpose.msra.mxu0 0.0
  %591 = vmatprep.subr.mxu0 0.0
  %592 = vmatpush1.xpose.msra.mxu0 0.0
  %593 = vmatprep.subr.mxu0 0.0
  %594 = vmatpush1.xpose.msra.mxu0 0.0
  %595 = vmatprep.subr.mxu0 0.0
  %596 = vmatpush1.xpose.msra.mxu0 0.0
  %597 = vmatprep.subr.mxu0 0.0
  %598 = vmatpush1.xpose.msra.mxu0 0.0
  %599 = vmatprep.subr.mxu0 0.0
  %600 = vmatpush1.xpose.msra.mxu0 0.0
  %601 = vmatprep.subr.mxu0 0.0
  %602 = vmatpush1.xpose.msra.mxu0 0.0
  %603 = vmatprep.subr.mxu0 0.0
  %604 = vmatpush1.xpose.msra.mxu0 0.0
  %605 = vmatprep.subr.mxu0 0.0
  %606 = vmatpush1.xpose.msra.mxu0 0.0
  %607 = vmatprep.subr.mxu0 0.0
  %608 = vmatpush1.xpose.msra.mxu0 0.0
  %609 = vmatprep.subr.mxu0 0.0
  %610 = vmatpush1.xpose.msra.mxu0 0.0
  %611 = vmatprep.subr.mxu0 0.0
  %612 = vmatpush1.xpose.msra.mxu0 0.0
  %613 = vmatprep.subr.mxu0 0.0
  %614 = vmatpush1.xpose.msra.mxu0 0.0
  %615 = vmatprep.subr.mxu0 0.0
  %616 = vmatpush1.xpose.msra.mxu0 0.0
  %617 = vmatprep.subr.mxu0 0.0
  %618 = vmatpush1.xpose.msra.mxu0 0.0
  %619 = vmatprep.subr.mxu0 0.0
  %620 = vmatpush1.xpose.msra.mxu0 0.0
  %621 = vmatprep.subr.mxu0 0.0
  %622 = vmatpush1.xpose.msra.mxu0 0.0
  %623 = vmatprep.subr.mxu0 0.0
  %624 = vmatpush1.xpose.msra.mxu0 0.0
  %625 = vmatprep.subr.mxu0 0.0
  %626 = vmatpush1.xpose.msra.mxu0 0.0
  %627 = vmatprep.subr.mxu0 0.0
  %628 = vmatpush1.xpose.msra.mxu0 0.0
  %629 = vmatprep.subr.mxu0 0.0
  %630 = vmatpush1.xpose.msra.mxu0 0.0
  %631 = vmatprep.subr.mxu0 0.0
  %632 = vmatpush1.xpose.msra.mxu0 0.0
  %633 = vmatprep.subr.mxu0 0.0
  %634 = vmatpush1.xpose.msra.mxu0 0.0
  %635 = vmatprep.subr.mxu0 0.0
  %636 = vmatpush1.xpose.msra.mxu0 0.0
  %637 = vmatprep.subr.mxu0 0.0
  %638 = vmatpush1.xpose.msra.mxu0 0.0
  %639 = vmatprep.subr.mxu0 0.0
  %640 = vmatpush1.xpose.msra.mxu0 0.0
  %641 = vmatprep.subr.mxu0 0.0
  %642 = vmatpush1.xpose.msra.mxu0 0.0
  %643 = vmatprep.subr.mxu0 0.0
  %644 = vmatpush1.xpose.msra.mxu0 0.0
  %645 = vmatprep.mubr.f32.mxu0 0.0
  %646 = vmatmul.mubr.f32.gmra.mrb[0].mxu0 %v577
  %v647 = vpop.f32.mrb[0].mxu0
  %v648 = vadd.f32 0.0, %v647
  %v649 = vpop.f32.mrb[0].mxu0
  %650 = vdwg.mxu0
  %v651 = vsel %vm412, %v648, -inf
  %652 = vmax.xlane.f32.xlu0 %v651
  %v653 = vpop.xlane.xlu0 %652
  %v654 = vsub.f32 %v648, %v653
  %v655 = vmul.f32 %v654, 1.442695
  %v656 = vpow.pop %v655
  %v657 = vsel %vm412, %v656, 0.0
  %658 = vadd.xlane.f32.xlu0 %v657
  %v659 = vpop.xlane.xlu0 %658
  %v660 = vrcp.pop %v659
  %v661 = vmul.f32 %v656, %v660
  %663 = vrot.lane.b32.xlu0 %v400, 120
  %v664 = vpop.permute.xlu0 %663
  %v667 = vsel %vm412, %v661, 0
  %669 = vmatprep.subr.mxu0 0.0
  %670 = vmatpush1.msra.mxu0 %v664
  %671 = vmatprep.subr.mxu0 0.0
  %672 = vmatpush1.msra.mxu0 0.0
  %673 = vmatprep.subr.mxu0 0.0
  %674 = vmatpush1.msra.mxu0 0.0
  %675 = vmatprep.subr.mxu0 0.0
  %676 = vmatpush1.msra.mxu0 0.0
  %677 = vmatprep.subr.mxu0 0.0
  %678 = vmatpush1.msra.mxu0 0.0
  %679 = vmatprep.subr.mxu0 0.0
  %680 = vmatpush1.msra.mxu0 0.0
  %681 = vmatprep.subr.mxu0 0.0
  %682 = vmatpush1.msra.mxu0 0.0
  %683 = vmatprep.subr.mxu0 0.0
  %684 = vmatpush1.msra.mxu0 0.0
  %685 = vmatprep.subr.mxu0 0.0
  %686 = vmatpush1.msra.mxu0 0.0
  %687 = vmatprep.subr.mxu0 0.0
  %688 = vmatpush1.msra.mxu0 0.0
  %689 = vmatprep.subr.mxu0 0.0
  %690 = vmatpush1.msra.mxu0 0.0
  %691 = vmatprep.subr.mxu0 0.0
  %692 = vmatpush1.msra.mxu0 0.0
  %693 = vmatprep.subr.mxu0 0.0
  %694 = vmatpush1.msra.mxu0 0.0
  %695 = vmatprep.subr.mxu0 0.0
  %696 = vmatpush1.msra.mxu0 0.0
  %697 = vmatprep.subr.mxu0 0.0
  %698 = vmatpush1.msra.mxu0 0.0
  %699 = vmatprep.subr.mxu0 0.0
  %700 = vmatpush1.msra.mxu0 0.0
  %701 = vmatprep.subr.mxu0 0.0
  %702 = vmatpush1.msra.mxu0 0.0
  %703 = vmatprep.subr.mxu0 0.0
  %704 = vmatpush1.msra.mxu0 0.0
  %705 = vmatprep.subr.mxu0 0.0
  %706 = vmatpush1.msra.mxu0 0.0
  %707 = vmatprep.subr.mxu0 0.0
  %708 = vmatpush1.msra.mxu0 0.0
  %709 = vmatprep.subr.mxu0 0.0
  %710 = vmatpush1.msra.mxu0 0.0
  %711 = vmatprep.subr.mxu0 0.0
  %712 = vmatpush1.msra.mxu0 0.0
  %713 = vmatprep.subr.mxu0 0.0
  %714 = vmatpush1.msra.mxu0 0.0
  %715 = vmatprep.subr.mxu0 0.0
  %716 = vmatpush1.msra.mxu0 0.0
  %717 = vmatprep.subr.mxu0 0.0
  %718 = vmatpush1.msra.mxu0 0.0
  %719 = vmatprep.subr.mxu0 0.0
  %720 = vmatpush1.msra.mxu0 0.0
  %721 = vmatprep.subr.mxu0 0.0
  %722 = vmatpush1.msra.mxu0 0.0
  %723 = vmatprep.subr.mxu0 0.0
  %724 = vmatpush1.msra.mxu0 0.0
  %725 = vmatprep.subr.mxu0 0.0
  %726 = vmatpush1.msra.mxu0 0.0
  %727 = vmatprep.subr.mxu0 0.0
  %728 = vmatpush1.msra.mxu0 0.0
  %729 = vmatprep.subr.mxu0 0.0
  %730 = vmatpush1.msra.mxu0 0.0
  %731 = vmatprep.subr.mxu0 0.0
  %732 = vmatpush1.msra.mxu0 0.0
  %733 = vmatprep.mubr.f32.mxu0 0.0
  %734 = vmatmul.mubr.f32.gmra.mrb[0].mxu0 %v667
  %v735 = vpop.f32.mrb[0].mxu0
  %v736 = vadd.f32 0.0, %v735
  %v737 = vpop.f32.mrb[0].mxu0
  %738 = vdwg.mxu0
  %v740 = vsel %vm412, %v736, 0
  %742 = vmatprep.subr.mxu0 0.0
  %743 = vmatpush1.msra.mxu0 %v409
  %744 = vmatprep.subr.mxu0 0.0
  %745 = vmatpush1.msra.mxu0 0.0
  %746 = vmatprep.subr.mxu0 0.0
  %747 = vmatpush1.msra.mxu0 0.0
  %748 = vmatprep.subr.mxu0 0.0
  %749 = vmatpush1.msra.mxu0 0.0
  %750 = vmatprep.subr.mxu0 0.0
  %751 = vmatpush1.msra.mxu0 0.0
  %752 = vmatprep.subr.mxu0 0.0
  %753 = vmatpush1.msra.mxu0 0.0
  %754 = vmatprep.subr.mxu0 0.0
  %755 = vmatpush1.msra.mxu0 0.0
  %756 = vmatprep.subr.mxu0 0.0
  %757 = vmatpush1.msra.mxu0 0.0
  %758 = vmatprep.subr.mxu0 0.0
  %759 = vmatpush1.msra.mxu0 0.0
  %760 = vmatprep.subr.mxu0 0.0
  %761 = vmatpush1.msra.mxu0 0.0
  %762 = vmatprep.subr.mxu0 0.0
  %763 = vmatpush1.msra.mxu0 0.0
  %764 = vmatprep.subr.mxu0 0.0
  %765 = vmatpush1.msra.mxu0 0.0
  %766 = vmatprep.subr.mxu0 0.0
  %767 = vmatpush1.msra.mxu0 0.0
  %768 = vmatprep.subr.mxu0 0.0
  %769 = vmatpush1.msra.mxu0 0.0
  %770 = vmatprep.subr.mxu0 0.0
  %771 = vmatpush1.msra.mxu0 0.0
  %772 = vmatprep.subr.mxu0 0.0
  %773 = vmatpush1.msra.mxu0 0.0
  %774 = vmatprep.subr.mxu0 0.0
  %775 = vmatpush1.msra.mxu0 0.0
  %776 = vmatprep.subr.mxu0 0.0
  %777 = vmatpush1.msra.mxu0 0.0
  %778 = vmatprep.subr.mxu0 0.0
  %779 = vmatpush1.msra.mxu0 0.0
  %780 = vmatprep.subr.mxu0 0.0
  %781 = vmatpush1.msra.mxu0 0.0
  %782 = vmatprep.subr.mxu0 0.0
  %783 = vmatpush1.msra.mxu0 0.0
  %784 = vmatprep.subr.mxu0 0.0
  %785 = vmatpush1.msra.mxu0 0.0
  %786 = vmatprep.subr.mxu0 0.0
  %787 = vmatpush1.msra.mxu0 0.0
  %788 = vmatprep.subr.mxu0 0.0
  %789 = vmatpush1.msra.mxu0 0.0
  %790 = vmatprep.subr.mxu0 0.0
  %791 = vmatpush1.msra.mxu0 0.0
  %792 = vmatprep.subr.mxu0 0.0
  %793 = vmatpush1.msra.mxu0 0.0
  %794 = vmatprep.subr.mxu0 0.0
  %795 = vmatpush1.msra.mxu0 0.0
  %796 = vmatprep.subr.mxu0 0.0
  %797 = vmatpush1.msra.mxu0 0.0
  %798 = vmatprep.subr.mxu0 0.0
  %799 = vmatpush1.msra.mxu0 0.0
  %800 = vmatprep.subr.mxu0 0.0
  %801 = vmatpush1.msra.mxu0 0.0
  %802 = vmatprep.subr.mxu0 0.0
  %803 = vmatpush1.msra.mxu0 0.0
  %804 = vmatprep.subr.mxu0 0.0
  %805 = vmatpush1.msra.mxu0 0.0
  %806 = vmatprep.mubr.f32.mxu0 0.0
  %807 = vmatmul.mubr.f32.gmra.mrb[0].mxu0 %v740
  %v808 = vpop.f32.mrb[0].mxu0
  %v809 = vadd.f32 0.0, %v808
  %v810 = vpop.f32.mrb[0].mxu0
  %811 = vdwg.mxu0
  %v813 = vsel %vm412, %v570, 0
  %815 = vmatprep.subr.mxu0 0.0
  %816 = vmatpush1.msra.mxu0 %v408
  %817 = vmatprep.subr.mxu0 0.0
  %818 = vmatpush1.msra.mxu0 0.0
  %819 = vmatprep.subr.mxu0 0.0
  %820 = vmatpush1.msra.mxu0 0.0
  %821 = vmatprep.subr.mxu0 0.0
  %822 = vmatpush1.msra.mxu0 0.0
  %823 = vmatprep.subr.mxu0 0.0
  %824 = vmatpush1.msra.mxu0 0.0
  %825 = vmatprep.subr.mxu0 0.0
  %826 = vmatpush1.msra.mxu0 0.0
  %827 = vmatprep.subr.mxu0 0.0
  %828 = vmatpush1.msra.mxu0 0.0
  %829 = vmatprep.subr.mxu0 0.0
  %830 = vmatpush1.msra.mxu0 0.0
  %831 = vmatprep.subr.mxu0 0.0
  %832 = vmatpush1.msra.mxu0 0.0
  %833 = vmatprep.subr.mxu0 0.0
  %834 = vmatpush1.msra.mxu0 0.0
  %835 = vmatprep.subr.mxu0 0.0
  %836 = vmatpush1.msra.mxu0 0.0
  %837 = vmatprep.subr.mxu0 0.0
  %838 = vmatpush1.msra.mxu0 0.0
  %839 = vmatprep.subr.mxu0 0.0
  %840 = vmatpush1.msra.mxu0 0.0
  %841 = vmatprep.subr.mxu0 0.0
  %842 = vmatpush1.msra.mxu0 0.0
  %843 = vmatprep.subr.mxu0 0.0
  %844 = vmatpush1.msra.mxu0 0.0
  %845 = vmatprep.subr.mxu0 0.0
  %846 = vmatpush1.msra.mxu0 0.0
  %847 = vmatprep.subr.mxu0 0.0
  %848 = vmatpush1.msra.mxu0 0.0
  %849 = vmatprep.subr.mxu0 0.0
  %850 = vmatpush1.msra.mxu0 0.0
  %851 = vmatprep.subr.mxu0 0.0
  %852 = vmatpush1.msra.mxu0 0.0
  %853 = vmatprep.subr.mxu0 0.0
  %854 = vmatpush1.msra.mxu0 0.0
  %855 = vmatprep.subr.mxu0 0.0
  %856 = vmatpush1.msra.mxu0 0.0
  %857 = vmatprep.subr.mxu0 0.0
  %858 = vmatpush1.msra.mxu0 0.0
  %859 = vmatprep.subr.mxu0 0.0
  %860 = vmatpush1.msra.mxu0 0.0
  %861 = vmatprep.subr.mxu0 0.0
  %862 = vmatpush1.msra.mxu0 0.0
  %863 = vmatprep.subr.mxu0 0.0
  %864 = vmatpush1.msra.mxu0 0.0
  %865 = vmatprep.subr.mxu0 0.0
  %866 = vmatpush1.msra.mxu0 0.0
  %867 = vmatprep.subr.mxu0 0.0
  %868 = vmatpush1.msra.mxu0 0.0
  %869 = vmatprep.subr.mxu0 0.0
  %870 = vmatpush1.msra.mxu0 0.0
  %871 = vmatprep.subr.mxu0 0.0
  %872 = vmatpush1.msra.mxu0 0.0
  %873 = vmatprep.subr.mxu0 0.0
  %874 = vmatpush1.msra.mxu0 0.0
  %875 = vmatprep.subr.mxu0 0.0
  %876 = vmatpush1.msra.mxu0 0.0
  %877 = vmatprep.subr.mxu0 0.0
  %878 = vmatpush1.msra.mxu0 0.0
  %879 = vmatprep.mubr.f32.mxu0 0.0
  %880 = vmatmul.mubr.f32.gmra.mrb[0].mxu0 %v813
  %v881 = vpop.f32.mrb[0].mxu0
  %v882 = vadd.f32 %v809, %v881
  %v883 = vpop.f32.mrb[0].mxu0
  %884 = vdwg.mxu0
  %885 = vrot.lane.b32.xlu0 %v228, 112
  %v886 = vpop.permute.xlu0 %885
  %887 = vrot.lane.b32.xlu0 %v308, 112
  %v888 = vpop.permute.xlu0 %887
  %v889 = vsel %vm412, %v886, 0
  %v891 = vsel %vm412, %v888, 0
  %893 = vmatprep.subr.mxu0 0.0
  %894 = vmatpush1.xpose.msra.mxu0 %v891
  %895 = vmatprep.subr.mxu0 0.0
  %896 = vmatpush1.xpose.msra.mxu0 0.0
  %897 = vmatprep.subr.mxu0 0.0
  %898 = vmatpush1.xpose.msra.mxu0 0.0
  %899 = vmatprep.subr.mxu0 0.0
  %900 = vmatpush1.xpose.msra.mxu0 0.0
  %901 = vmatprep.subr.mxu0 0.0
  %902 = vmatpush1.xpose.msra.mxu0 0.0
  %903 = vmatprep.subr.mxu0 0.0
  %904 = vmatpush1.xpose.msra.mxu0 0.0
  %905 = vmatprep.subr.mxu0 0.0
  %906 = vmatpush1.xpose.msra.mxu0 0.0
  %907 = vmatprep.subr.mxu0 0.0
  %908 = vmatpush1.xpose.msra.mxu0 0.0
  %909 = vmatprep.subr.mxu0 0.0
  %910 = vmatpush1.xpose.msra.mxu0 0.0
  %911 = vmatprep.subr.mxu0 0.0
  %912 = vmatpush1.xpose.msra.mxu0 0.0
  %913 = vmatprep.subr.mxu0 0.0
  %914 = vmatpush1.xpose.msra.mxu0 0.0
  %915 = vmatprep.subr.mxu0 0.0
  %916 = vmatpush1.xpose.msra.mxu0 0.0
  %917 = vmatprep.subr.mxu0 0.0
  %918 = vmatpush1.xpose.msra.mxu0 0.0
  %919 = vmatprep.subr.mxu0 0.0
  %920 = vmatpush1.xpose.msra.mxu0 0.0
  %921 = vmatprep.subr.mxu0 0.0
  %922 = vmatpush1.xpose.msra.mxu0 0.0
  %923 = vmatprep.subr.mxu0 0.0
  %924 = vmatpush1.xpose.msra.mxu0 0.0
  %925 = vmatprep.subr.mxu0 0.0
  %926 = vmatpush1.xpose.msra.mxu0 0.0
  %927 = vmatprep.subr.mxu0 0.0
  %928 = vmatpush1.xpose.msra.mxu0 0.0
  %929 = vmatprep.subr.mxu0 0.0
  %930 = vmatpush1.xpose.msra.mxu0 0.0
  %931 = vmatprep.subr.mxu0 0.0
  %932 = vmatpush1.xpose.msra.mxu0 0.0
  %933 = vmatprep.subr.mxu0 0.0
  %934 = vmatpush1.xpose.msra.mxu0 0.0
  %935 = vmatprep.subr.mxu0 0.0
  %936 = vmatpush1.xpose.msra.mxu0 0.0
  %937 = vmatprep.subr.mxu0 0.0
  %938 = vmatpush1.xpose.msra.mxu0 0.0
  %939 = vmatprep.subr.mxu0 0.0
  %940 = vmatpush1.xpose.msra.mxu0 0.0
  %941 = vmatprep.subr.mxu0 0.0
  %942 = vmatpush1.xpose.msra.mxu0 0.0
  %943 = vmatprep.subr.mxu0 0.0
  %944 = vmatpush1.xpose.msra.mxu0 0.0
  %945 = vmatprep.subr.mxu0 0.0
  %946 = vmatpush1.xpose.msra.mxu0 0.0
  %947 = vmatprep.subr.mxu0 0.0
  %948 = vmatpush1.xpose.msra.mxu0 0.0
  %949 = vmatprep.subr.mxu0 0.0
  %950 = vmatpush1.xpose.msra.mxu0 0.0
  %951 = vmatprep.subr.mxu0 0.0
  %952 = vmatpush1.xpose.msra.mxu0 0.0
  %953 = vmatprep.subr.mxu0 0.0
  %954 = vmatpush1.xpose.msra.mxu0 0.0
  %955 = vmatprep.subr.mxu0 0.0
  %956 = vmatpush1.xpose.msra.mxu0 0.0
  %957 = vmatprep.mubr.f32.mxu0 0.0
  %958 = vmatmul.mubr.f32.gmra.mrb[0].mxu0 %v889
  %v959 = vpop.f32.mrb[0].mxu0
  %v960 = vadd.f32 0.0, %v959
  %v961 = vpop.f32.mrb[0].mxu0
  %962 = vdwg.mxu0
  %v963 = vsel %vm412, %v960, -inf
  %964 = vmax.xlane.f32.xlu0 %v963
  %v965 = vpop.xlane.xlu0 %964
  %v966 = vsub.f32 %v960, %v965
  %v967 = vmul.f32 %v966, 1.442695
  %v968 = vpow.pop %v967
  %v969 = vsel %vm412, %v968, 0.0
  %970 = vadd.xlane.f32.xlu0 %v969
  %v971 = vpop.xlane.xlu0 %970
  %v972 = vrcp.pop %v971
  %v973 = vmul.f32 %v968, %v972
  %974 = vrot.lane.b32.xlu0 %v400, 112
  %v975 = vpop.permute.xlu0 %974
  %v978 = vsel %vm412, %v973, 0
  %980 = vmatprep.subr.mxu0 0.0
  %981 = vmatpush1.msra.mxu0 %v975
  %982 = vmatprep.subr.mxu0 0.0
  %983 = vmatpush1.msra.mxu0 0.0
  %984 = vmatprep.subr.mxu0 0.0
  %985 = vmatpush1.msra.mxu0 0.0
  %986 = vmatprep.subr.mxu0 0.0
  %987 = vmatpush1.msra.mxu0 0.0
  %988 = vmatprep.subr.mxu0 0.0
  %989 = vmatpush1.msra.mxu0 0.0
  %990 = vmatprep.subr.mxu0 0.0
  %991 = vmatpush1.msra.mxu0 0.0
  %992 = vmatprep.subr.mxu0 0.0
  %993 = vmatpush1.msra.mxu0 0.0
  %994 = vmatprep.subr.mxu0 0.0
  %995 = vmatpush1.msra.mxu0 0.0
  %996 = vmatprep.subr.mxu0 0.0
  %997 = vmatpush1.msra.mxu0 0.0
  %998 = vmatprep.subr.mxu0 0.0
  %999 = vmatpush1.msra.mxu0 0.0
  %1000 = vmatprep.subr.mxu0 0.0
  %1001 = vmatpush1.msra.mxu0 0.0
  %1002 = vmatprep.subr.mxu0 0.0
  %1003 = vmatpush1.msra.mxu0 0.0
  %1004 = vmatprep.subr.mxu0 0.0
  %1005 = vmatpush1.msra.mxu0 0.0
  %1006 = vmatprep.subr.mxu0 0.0
  %1007 = vmatpush1.msra.mxu0 0.0
  %1008 = vmatprep.subr.mxu0 0.0
  %1009 = vmatpush1.msra.mxu0 0.0
  %1010 = vmatprep.subr.mxu0 0.0
  %1011 = vmatpush1.msra.mxu0 0.0
  %1012 = vmatprep.subr.mxu0 0.0
  %1013 = vmatpush1.msra.mxu0 0.0
  %1014 = vmatprep.subr.mxu0 0.0
  %1015 = vmatpush1.msra.mxu0 0.0
  %1016 = vmatprep.subr.mxu0 0.0
  %1017 = vmatpush1.msra.mxu0 0.0
  %1018 = vmatprep.subr.mxu0 0.0
  %1019 = vmatpush1.msra.mxu0 0.0
  %1020 = vmatprep.subr.mxu0 0.0
  %1021 = vmatpush1.msra.mxu0 0.0
  %1022 = vmatprep.subr.mxu0 0.0
  %1023 = vmatpush1.msra.mxu0 0.0
  %1024 = vmatprep.subr.mxu0 0.0
  %1025 = vmatpush1.msra.mxu0 0.0
  %1026 = vmatprep.subr.mxu0 0.0
  %1027 = vmatpush1.msra.mxu0 0.0
  %1028 = vmatprep.subr.mxu0 0.0
  %1029 = vmatpush1.msra.mxu0 0.0
  %1030 = vmatprep.subr.mxu0 0.0
  %1031 = vmatpush1.msra.mxu0 0.0
  %1032 = vmatprep.subr.mxu0 0.0
  %1033 = vmatpush1.msra.mxu0 0.0
  %1034 = vmatprep.subr.mxu0 0.0
  %1035 = vmatpush1.msra.mxu0 0.0
  %1036 = vmatprep.subr.mxu0 0.0
  %1037 = vmatpush1.msra.mxu0 0.0
  %1038 = vmatprep.subr.mxu0 0.0
  %1039 = vmatpush1.msra.mxu0 0.0
  %1040 = vmatprep.subr.mxu0 0.0
  %1041 = vmatpush1.msra.mxu0 0.0
  %1042 = vmatprep.subr.mxu0 0.0
  %1043 = vmatpush1.msra.mxu0 0.0
  %1044 = vmatprep.mubr.f32.mxu0 0.0
  %1045 = vmatmul.mubr.f32.gmra.mrb[0].mxu0 %v978
  %v1046 = vpop.f32.mrb[0].mxu0
  %v1047 = vadd.f32 0.0, %v1046
  %v1048 = vpop.f32.mrb[0].mxu0
  %1049 = vdwg.mxu0
  %v1051 = vsel %vm412, %v1047, 0
  %1053 = vmatprep.subr.mxu0 0.0
  %1054 = vmatpush1.msra.mxu0 %v410
  %1055 = vmatprep.subr.mxu0 0.0
  %1056 = vmatpush1.msra.mxu0 0.0
  %1057 = vmatprep.subr.mxu0 0.0
  %1058 = vmatpush1.msra.mxu0 0.0
  %1059 = vmatprep.subr.mxu0 0.0
  %1060 = vmatpush1.msra.mxu0 0.0
  %1061 = vmatprep.subr.mxu0 0.0
  %1062 = vmatpush1.msra.mxu0 0.0
  %1063 = vmatprep.subr.mxu0 0.0
  %1064 = vmatpush1.msra.mxu0 0.0
  %1065 = vmatprep.subr.mxu0 0.0
  %1066 = vmatpush1.msra.mxu0 0.0
  %1067 = vmatprep.subr.mxu0 0.0
  %1068 = vmatpush1.msra.mxu0 0.0
  %1069 = vmatprep.subr.mxu0 0.0
  %1070 = vmatpush1.msra.mxu0 0.0
  %1071 = vmatprep.subr.mxu0 0.0
  %1072 = vmatpush1.msra.mxu0 0.0
  %1073 = vmatprep.subr.mxu0 0.0
  %1074 = vmatpush1.msra.mxu0 0.0
  %1075 = vmatprep.subr.mxu0 0.0
  %1076 = vmatpush1.msra.mxu0 0.0
  %1077 = vmatprep.subr.mxu0 0.0
  %1078 = vmatpush1.msra.mxu0 0.0
  %1079 = vmatprep.subr.mxu0 0.0
  %1080 = vmatpush1.msra.mxu0 0.0
  %1081 = vmatprep.subr.mxu0 0.0
  %1082 = vmatpush1.msra.mxu0 0.0
  %1083 = vmatprep.subr.mxu0 0.0
  %1084 = vmatpush1.msra.mxu0 0.0
  %1085 = vmatprep.subr.mxu0 0.0
  %1086 = vmatpush1.msra.mxu0 0.0
  %1087 = vmatprep.subr.mxu0 0.0
  %1088 = vmatpush1.msra.mxu0 0.0
  %1089 = vmatprep.subr.mxu0 0.0
  %1090 = vmatpush1.msra.mxu0 0.0
  %1091 = vmatprep.subr.mxu0 0.0
  %1092 = vmatpush1.msra.mxu0 0.0
  %1093 = vmatprep.subr.mxu0 0.0
  %1094 = vmatpush1.msra.mxu0 0.0
  %1095 = vmatprep.subr.mxu0 0.0
  %1096 = vmatpush1.msra.mxu0 0.0
  %1097 = vmatprep.subr.mxu0 0.0
  %1098 = vmatpush1.msra.mxu0 0.0
  %1099 = vmatprep.subr.mxu0 0.0
  %1100 = vmatpush1.msra.mxu0 0.0
  %1101 = vmatprep.subr.mxu0 0.0
  %1102 = vmatpush1.msra.mxu0 0.0
  %1103 = vmatprep.subr.mxu0 0.0
  %1104 = vmatpush1.msra.mxu0 0.0
  %1105 = vmatprep.subr.mxu0 0.0
  %1106 = vmatpush1.msra.mxu0 0.0
  %1107 = vmatprep.subr.mxu0 0.0
  %1108 = vmatpush1.msra.mxu0 0.0
  %1109 = vmatprep.subr.mxu0 0.0
  %1110 = vmatpush1.msra.mxu0 0.0
  %1111 = vmatprep.subr.mxu0 0.0
  %1112 = vmatpush1.msra.mxu0 0.0
  %1113 = vmatprep.subr.mxu0 0.0
  %1114 = vmatpush1.msra.mxu0 0.0
  %1115 = vmatprep.subr.mxu0 0.0
  %1116 = vmatpush1.msra.mxu0 0.0
  %1117 = vmatprep.mubr.f32.mxu0 0.0
  %1118 = vmatmul.mubr.f32.gmra.mrb[0].mxu0 %v1051
  %v1119 = vpop.f32.mrb[0].mxu0
  %v1120 = vadd.f32 0.0, %v1119
  %v1121 = vpop.f32.mrb[0].mxu0
  %1122 = vdwg.mxu0
  %v1123 = vadd.f32 %v882, %v1120
  %1124 = vrot.lane.b32.xlu0 %v228, 104
  %v1125 = vpop.permute.xlu0 %1124
  %1126 = vrot.lane.b32.xlu0 %v308, 104
  %v1127 = vpop.permute.xlu0 %1126
  %v1128 = vsel %vm412, %v1125, 0
  %v1130 = vsel %vm412, %v1127, 0
  %1132 = vmatprep.subr.mxu0 0.0
  %1133 = vmatpush1.xpose.msra.mxu0 %v1130
  %1134 = vmatprep.subr.mxu0 0.0
  %1135 = vmatpush1.xpose.msra.mxu0 0.0
  %1136 = vmatprep.subr.mxu0 0.0
  %1137 = vmatpush1.xpose.msra.mxu0 0.0
  %1138 = vmatprep.subr.mxu0 0.0
  %1139 = vmatpush1.xpose.msra.mxu0 0.0
  %1140 = vmatprep.subr.mxu0 0.0
  %1141 = vmatpush1.xpose.msra.mxu0 0.0
  %1142 = vmatprep.subr.mxu0 0.0
  %1143 = vmatpush1.xpose.msra.mxu0 0.0
  %1144 = vmatprep.subr.mxu0 0.0
  %1145 = vmatpush1.xpose.msra.mxu0 0.0
  %1146 = vmatprep.subr.mxu0 0.0
  %1147 = vmatpush1.xpose.msra.mxu0 0.0
  %1148 = vmatprep.subr.mxu0 0.0
  %1149 = vmatpush1.xpose.msra.mxu0 0.0
  %1150 = vmatprep.subr.mxu0 0.0
  %1151 = vmatpush1.xpose.msra.mxu0 0.0
  %1152 = vmatprep.subr.mxu0 0.0
  %1153 = vmatpush1.xpose.msra.mxu0 0.0
  %1154 = vmatprep.subr.mxu0 0.0
  %1155 = vmatpush1.xpose.msra.mxu0 0.0
  %1156 = vmatprep.subr.mxu0 0.0
  %1157 = vmatpush1.xpose.msra.mxu0 0.0
  %1158 = vmatprep.subr.mxu0 0.0
  %1159 = vmatpush1.xpose.msra.mxu0 0.0
  %1160 = vmatprep.subr.mxu0 0.0
  %1161 = vmatpush1.xpose.msra.mxu0 0.0
  %1162 = vmatprep.subr.mxu0 0.0
  %1163 = vmatpush1.xpose.msra.mxu0 0.0
  %1164 = vmatprep.subr.mxu0 0.0
  %1165 = vmatpush1.xpose.msra.mxu0 0.0
  %1166 = vmatprep.subr.mxu0 0.0
  %1167 = vmatpush1.xpose.msra.mxu0 0.0
  %1168 = vmatprep.subr.mxu0 0.0
  %1169 = vmatpush1.xpose.msra.mxu0 0.0
  %1170 = vmatprep.subr.mxu0 0.0
  %1171 = vmatpush1.xpose.msra.mxu0 0.0
  %1172 = vmatprep.subr.mxu0 0.0
  %1173 = vmatpush1.xpose.msra.mxu0 0.0
  %1174 = vmatprep.subr.mxu0 0.0
  %1175 = vmatpush1.xpose.msra.mxu0 0.0
  %1176 = vmatprep.subr.mxu0 0.0
  %1177 = vmatpush1.xpose.msra.mxu0 0.0
  %1178 = vmatprep.subr.mxu0 0.0
  %1179 = vmatpush1.xpose.msra.mxu0 0.0
  %1180 = vmatprep.subr.mxu0 0.0
  %1181 = vmatpush1.xpose.msra.mxu0 0.0
  %1182 = vmatprep.subr.mxu0 0.0
  %1183 = vmatpush1.xpose.msra.mxu0 0.0
  %1184 = vmatprep.subr.mxu0 0.0
  %1185 = vmatpush1.xpose.msra.mxu0 0.0
  %1186 = vmatprep.subr.mxu0 0.0
  %1187 = vmatpush1.xpose.msra.mxu0 0.0
  %1188 = vmatprep.subr.mxu0 0.0
  %1189 = vmatpush1.xpose.msra.mxu0 0.0
  %1190 = vmatprep.subr.mxu0 0.0
  %1191 = vmatpush1.xpose.msra.mxu0 0.0
  %1192 = vmatprep.subr.mxu0 0.0
  %1193 = vmatpush1.xpose.msra.mxu0 0.0
  %1194 = vmatprep.subr.mxu0 0.0
  %1195 = vmatpush1.xpose.msra.mxu0 0.0
  %1196 = vmatprep.mubr.f32.mxu0 0.0
  %1197 = vmatmul.mubr.f32.gmra.mrb[0].mxu0 %v1128
  %v1198 = vpop.f32.mrb[0].mxu0
  %v1199 = vadd.f32 0.0, %v1198
  %v1200 = vpop.f32.mrb[0].mxu0
  %1201 = vdwg.mxu0
  %v1202 = vsel %vm412, %v1199, -inf
  %1203 = vmax.xlane.f32.xlu0 %v1202
  %v1204 = vpop.xlane.xlu0 %1203
  %v1205 = vsub.f32 %v1199, %v1204
  %v1206 = vmul.f32 %v1205, 1.442695
  %v1207 = vpow.pop %v1206
  %v1208 = vsel %vm412, %v1207, 0.0
  %1209 = vadd.xlane.f32.xlu0 %v1208
  %v1210 = vpop.xlane.xlu0 %1209
  %v1211 = vrcp.pop %v1210
  %v1212 = vmul.f32 %v1207, %v1211
  %1213 = vrot.lane.b32.xlu0 %v400, 104
  %v1214 = vpop.permute.xlu0 %1213
  %v1217 = vsel %vm412, %v1212, 0
  %1219 = vmatprep.subr.mxu0 0.0
  %1220 = vmatpush1.msra.mxu0 %v1214
  %1221 = vmatprep.subr.mxu0 0.0
  %1222 = vmatpush1.msra.mxu0 0.0
  %1223 = vmatprep.subr.mxu0 0.0
  %1224 = vmatpush1.msra.mxu0 0.0
  %1225 = vmatprep.subr.mxu0 0.0
  %1226 = vmatpush1.msra.mxu0 0.0
  %1227 = vmatprep.subr.mxu0 0.0
  %1228 = vmatpush1.msra.mxu0 0.0
  %1229 = vmatprep.subr.mxu0 0.0
  %1230 = vmatpush1.msra.mxu0 0.0
  %1231 = vmatprep.subr.mxu0 0.0
  %1232 = vmatpush1.msra.mxu0 0.0
  %1233 = vmatprep.subr.mxu0 0.0
  %1234 = vmatpush1.msra.mxu0 0.0
  %1235 = vmatprep.subr.mxu0 0.0
  %1236 = vmatpush1.msra.mxu0 0.0
  %1237 = vmatprep.subr.mxu0 0.0
  %1238 = vmatpush1.msra.mxu0 0.0
  %1239 = vmatprep.subr.mxu0 0.0
  %1240 = vmatpush1.msra.mxu0 0.0
  %1241 = vmatprep.subr.mxu0 0.0
  %1242 = vmatpush1.msra.mxu0 0.0
  %1243 = vmatprep.subr.mxu0 0.0
  %1244 = vmatpush1.msra.mxu0 0.0
  %1245 = vmatprep.subr.mxu0 0.0
  %1246 = vmatpush1.msra.mxu0 0.0
  %1247 = vmatprep.subr.mxu0 0.0
  %1248 = vmatpush1.msra.mxu0 0.0
  %1249 = vmatprep.subr.mxu0 0.0
  %1250 = vmatpush1.msra.mxu0 0.0
  %1251 = vmatprep.subr.mxu0 0.0
  %1252 = vmatpush1.msra.mxu0 0.0
  %1253 = vmatprep.subr.mxu0 0.0
  %1254 = vmatpush1.msra.mxu0 0.0
  %1255 = vmatprep.subr.mxu0 0.0
  %1256 = vmatpush1.msra.mxu0 0.0
  %1257 = vmatprep.subr.mxu0 0.0
  %1258 = vmatpush1.msra.mxu0 0.0
  %1259 = vmatprep.subr.mxu0 0.0
  %1260 = vmatpush1.msra.mxu0 0.0
  %1261 = vmatprep.subr.mxu0 0.0
  %1262 = vmatpush1.msra.mxu0 0.0
  %1263 = vmatprep.subr.mxu0 0.0
  %1264 = vmatpush1.msra.mxu0 0.0
  %1265 = vmatprep.subr.mxu0 0.0
  %1266 = vmatpush1.msra.mxu0 0.0
  %1267 = vmatprep.subr.mxu0 0.0
  %1268 = vmatpush1.msra.mxu0 0.0
  %1269 = vmatprep.subr.mxu0 0.0
  %1270 = vmatpush1.msra.mxu0 0.0
  %1271 = vmatprep.subr.mxu0 0.0
  %1272 = vmatpush1.msra.mxu0 0.0
  %1273 = vmatprep.subr.mxu0 0.0
  %1274 = vmatpush1.msra.mxu0 0.0
  %1275 = vmatprep.subr.mxu0 0.0
  %1276 = vmatpush1.msra.mxu0 0.0
  %1277 = vmatprep.subr.mxu0 0.0
  %1278 = vmatpush1.msra.mxu0 0.0
  %1279 = vmatprep.subr.mxu0 0.0
  %1280 = vmatpush1.msra.mxu0 0.0
  %1281 = vmatprep.subr.mxu0 0.0
  %1282 = vmatpush1.msra.mxu0 0.0
  %1283 = vmatprep.mubr.f32.mxu0 0.0
  %1284 = vmatmul.mubr.f32.gmra.mrb[0].mxu0 %v1217
  %v1285 = vpop.f32.mrb[0].mxu0
  %v1286 = vadd.f32 0.0, %v1285
  %v1287 = vpop.f32.mrb[0].mxu0
  %1288 = vdwg.mxu0
  %v1290 = vsel %vm412, %v1286, 0
  %1292 = vmatprep.subr.mxu0 0.0
  %1293 = vmatpush1.msra.mxu0 %v411
  %1294 = vmatprep.subr.mxu0 0.0
  %1295 = vmatpush1.msra.mxu0 0.0
  %1296 = vmatprep.subr.mxu0 0.0
  %1297 = vmatpush1.msra.mxu0 0.0
  %1298 = vmatprep.subr.mxu0 0.0
  %1299 = vmatpush1.msra.mxu0 0.0
  %1300 = vmatprep.subr.mxu0 0.0
  %1301 = vmatpush1.msra.mxu0 0.0
  %1302 = vmatprep.subr.mxu0 0.0
  %1303 = vmatpush1.msra.mxu0 0.0
  %1304 = vmatprep.subr.mxu0 0.0
  %1305 = vmatpush1.msra.mxu0 0.0
  %1306 = vmatprep.subr.mxu0 0.0
  %1307 = vmatpush1.msra.mxu0 0.0
  %1308 = vmatprep.subr.mxu0 0.0
  %1309 = vmatpush1.msra.mxu0 0.0
  %1310 = vmatprep.subr.mxu0 0.0
  %1311 = vmatpush1.msra.mxu0 0.0
  %1312 = vmatprep.subr.mxu0 0.0
  %1313 = vmatpush1.msra.mxu0 0.0
  %1314 = vmatprep.subr.mxu0 0.0
  %1315 = vmatpush1.msra.mxu0 0.0
  %1316 = vmatprep.subr.mxu0 0.0
  %1317 = vmatpush1.msra.mxu0 0.0
  %1318 = vmatprep.subr.mxu0 0.0
  %1319 = vmatpush1.msra.mxu0 0.0
  %1320 = vmatprep.subr.mxu0 0.0
  %1321 = vmatpush1.msra.mxu0 0.0
  %1322 = vmatprep.subr.mxu0 0.0
  %1323 = vmatpush1.msra.mxu0 0.0
  %1324 = vmatprep.subr.mxu0 0.0
  %1325 = vmatpush1.msra.mxu0 0.0
  %1326 = vmatprep.subr.mxu0 0.0
  %1327 = vmatpush1.msra.mxu0 0.0
  %1328 = vmatprep.subr.mxu0 0.0
  %1329 = vmatpush1.msra.mxu0 0.0
  %1330 = vmatprep.subr.mxu0 0.0
  %1331 = vmatpush1.msra.mxu0 0.0
  %1332 = vmatprep.subr.mxu0 0.0
  %1333 = vmatpush1.msra.mxu0 0.0
  %1334 = vmatprep.subr.mxu0 0.0
  %1335 = vmatpush1.msra.mxu0 0.0
  %1336 = vmatprep.subr.mxu0 0.0
  %1337 = vmatpush1.msra.mxu0 0.0
  %1338 = vmatprep.subr.mxu0 0.0
  %1339 = vmatpush1.msra.mxu0 0.0
  %1340 = vmatprep.subr.mxu0 0.0
  %1341 = vmatpush1.msra.mxu0 0.0
  %1342 = vmatprep.subr.mxu0 0.0
  %1343 = vmatpush1.msra.mxu0 0.0
  %1344 = vmatprep.subr.mxu0 0.0
  %1345 = vmatpush1.msra.mxu0 0.0
  %1346 = vmatprep.subr.mxu0 0.0
  %1347 = vmatpush1.msra.mxu0 0.0
  %1348 = vmatprep.subr.mxu0 0.0
  %1349 = vmatpush1.msra.mxu0 0.0
  %1350 = vmatprep.subr.mxu0 0.0
  %1351 = vmatpush1.msra.mxu0 0.0
  %1352 = vmatprep.subr.mxu0 0.0
  %1353 = vmatpush1.msra.mxu0 0.0
  %1354 = vmatprep.subr.mxu0 0.0
  %1355 = vmatpush1.msra.mxu0 0.0
  %1356 = vmatprep.mubr.f32.mxu0 0.0
  %1357 = vmatmul.mubr.f32.gmra.mrb[0].mxu0 %v1290
  %v1358 = vpop.f32.mrb[0].mxu0
  %v1359 = vadd.f32 0.0, %v1358
  %v1360 = vpop.f32.mrb[0].mxu0
  %1361 = vdwg.mxu0
  %v1362 = vadd.f32 %v1123, %v1359
  %v1364 = vsel %vm412, %v229, 0
  %v1367 = vsel %vm412, %v313, 0
  %1369 = vmatprep.subr.mxu0 0.0
  %1370 = vmatpush1.xpose.msra.mxu0 %v1367
  %1371 = vmatprep.subr.mxu0 0.0
  %1372 = vmatpush1.xpose.msra.mxu0 0.0
  %1373 = vmatprep.subr.mxu0 0.0
  %1374 = vmatpush1.xpose.msra.mxu0 0.0
  %1375 = vmatprep.subr.mxu0 0.0
  %1376 = vmatpush1.xpose.msra.mxu0 0.0
  %1377 = vmatprep.subr.mxu0 0.0
  %1378 = vmatpush1.xpose.msra.mxu0 0.0
  %1379 = vmatprep.subr.mxu0 0.0
  %1380 = vmatpush1.xpose.msra.mxu0 0.0
  %1381 = vmatprep.subr.mxu0 0.0
  %1382 = vmatpush1.xpose.msra.mxu0 0.0
  %1383 = vmatprep.subr.mxu0 0.0
  %1384 = vmatpush1.xpose.msra.mxu0 0.0
  %1385 = vmatprep.subr.mxu0 0.0
  %1386 = vmatpush1.xpose.msra.mxu0 0.0
  %1387 = vmatprep.subr.mxu0 0.0
  %1388 = vmatpush1.xpose.msra.mxu0 0.0
  %1389 = vmatprep.subr.mxu0 0.0
  %1390 = vmatpush1.xpose.msra.mxu0 0.0
  %1391 = vmatprep.subr.mxu0 0.0
  %1392 = vmatpush1.xpose.msra.mxu0 0.0
  %1393 = vmatprep.subr.mxu0 0.0
  %1394 = vmatpush1.xpose.msra.mxu0 0.0
  %1395 = vmatprep.subr.mxu0 0.0
  %1396 = vmatpush1.xpose.msra.mxu0 0.0
  %1397 = vmatprep.subr.mxu0 0.0
  %1398 = vmatpush1.xpose.msra.mxu0 0.0
  %1399 = vmatprep.subr.mxu0 0.0
  %1400 = vmatpush1.xpose.msra.mxu0 0.0
  %1401 = vmatprep.subr.mxu0 0.0
  %1402 = vmatpush1.xpose.msra.mxu0 0.0
  %1403 = vmatprep.subr.mxu0 0.0
  %1404 = vmatpush1.xpose.msra.mxu0 0.0
  %1405 = vmatprep.subr.mxu0 0.0
  %1406 = vmatpush1.xpose.msra.mxu0 0.0
  %1407 = vmatprep.subr.mxu0 0.0
  %1408 = vmatpush1.xpose.msra.mxu0 0.0
  %1409 = vmatprep.subr.mxu0 0.0
  %1410 = vmatpush1.xpose.msra.mxu0 0.0
  %1411 = vmatprep.subr.mxu0 0.0
  %1412 = vmatpush1.xpose.msra.mxu0 0.0
  %1413 = vmatprep.subr.mxu0 0.0
  %1414 = vmatpush1.xpose.msra.mxu0 0.0
  %1415 = vmatprep.subr.mxu0 0.0
  %1416 = vmatpush1.xpose.msra.mxu0 0.0
  %1417 = vmatprep.subr.mxu0 0.0
  %1418 = vmatpush1.xpose.msra.mxu0 0.0
  %1419 = vmatprep.subr.mxu0 0.0
  %1420 = vmatpush1.xpose.msra.mxu0 0.0
  %1421 = vmatprep.subr.mxu0 0.0
  %1422 = vmatpush1.xpose.msra.mxu0 0.0
  %1423 = vmatprep.subr.mxu0 0.0
  %1424 = vmatpush1.xpose.msra.mxu0 0.0
  %1425 = vmatprep.subr.mxu0 0.0
  %1426 = vmatpush1.xpose.msra.mxu0 0.0
  %1427 = vmatprep.subr.mxu0 0.0
  %1428 = vmatpush1.xpose.msra.mxu0 0.0
  %1429 = vmatprep.subr.mxu0 0.0
  %1430 = vmatpush1.xpose.msra.mxu0 0.0
  %1431 = vmatprep.subr.mxu0 0.0
  %1432 = vmatpush1.xpose.msra.mxu0 0.0
  %1433 = vmatprep.mubr.f32.mxu0 0.0
  %1434 = vmatmul.mubr.f32.gmra.mrb[0].mxu0 %v1364
  %v1435 = vpop.f32.mrb[0].mxu0
  %v1436 = vadd.f32 0.0, %v1435
  %v1437 = vpop.f32.mrb[0].mxu0
  %1438 = vdwg.mxu0
  %v1439 = vsel %vm412, %v1436, -inf
  %1440 = vmax.xlane.f32.xlu0 %v1439
  %v1441 = vpop.xlane.xlu0 %1440
  %v1442 = vsub.f32 %v1436, %v1441
  %v1443 = vmul.f32 %v1442, 1.442695
  %v1444 = vpow.pop %v1443
  %v1445 = vsel %vm412, %v1444, 0.0
  %1446 = vadd.xlane.f32.xlu0 %v1445
  %v1447 = vpop.xlane.xlu0 %1446
  %v1448 = vrcp.pop %v1447
  %v1449 = vmul.f32 %v1444, %v1448
  %v1451 = vsel %vm412, %v1449, 0
  %1453 = vmatprep.subr.mxu0 0.0
  %1454 = vmatpush1.msra.mxu0 %v405
  %1455 = vmatprep.subr.mxu0 0.0
  %1456 = vmatpush1.msra.mxu0 0.0
  %1457 = vmatprep.subr.mxu0 0.0
  %1458 = vmatpush1.msra.mxu0 0.0
  %1459 = vmatprep.subr.mxu0 0.0
  %1460 = vmatpush1.msra.mxu0 0.0
  %1461 = vmatprep.subr.mxu0 0.0
  %1462 = vmatpush1.msra.mxu0 0.0
  %1463 = vmatprep.subr.mxu0 0.0
  %1464 = vmatpush1.msra.mxu0 0.0
  %1465 = vmatprep.subr.mxu0 0.0
  %1466 = vmatpush1.msra.mxu0 0.0
  %1467 = vmatprep.subr.mxu0 0.0
  %1468 = vmatpush1.msra.mxu0 0.0
  %1469 = vmatprep.subr.mxu0 0.0
  %1470 = vmatpush1.msra.mxu0 0.0
  %1471 = vmatprep.subr.mxu0 0.0
  %1472 = vmatpush1.msra.mxu0 0.0
  %1473 = vmatprep.subr.mxu0 0.0
  %1474 = vmatpush1.msra.mxu0 0.0
  %1475 = vmatprep.subr.mxu0 0.0
  %1476 = vmatpush1.msra.mxu0 0.0
  %1477 = vmatprep.subr.mxu0 0.0
  %1478 = vmatpush1.msra.mxu0 0.0
  %1479 = vmatprep.subr.mxu0 0.0
  %1480 = vmatpush1.msra.mxu0 0.0
  %1481 = vmatprep.subr.mxu0 0.0
  %1482 = vmatpush1.msra.mxu0 0.0
  %1483 = vmatprep.subr.mxu0 0.0
  %1484 = vmatpush1.msra.mxu0 0.0
  %1485 = vmatprep.subr.mxu0 0.0
  %1486 = vmatpush1.msra.mxu0 0.0
  %1487 = vmatprep.subr.mxu0 0.0
  %1488 = vmatpush1.msra.mxu0 0.0
  %1489 = vmatprep.subr.mxu0 0.0
  %1490 = vmatpush1.msra.mxu0 0.0
  %1491 = vmatprep.subr.mxu0 0.0
  %1492 = vmatpush1.msra.mxu0 0.0
  %1493 = vmatprep.subr.mxu0 0.0
  %1494 = vmatpush1.msra.mxu0 0.0
  %1495 = vmatprep.subr.mxu0 0.0
  %1496 = vmatpush1.msra.mxu0 0.0
  %1497 = vmatprep.subr.mxu0 0.0
  %1498 = vmatpush1.msra.mxu0 0.0
  %1499 = vmatprep.subr.mxu0 0.0
  %1500 = vmatpush1.msra.mxu0 0.0
  %1501 = vmatprep.subr.mxu0 0.0
  %1502 = vmatpush1.msra.mxu0 0.0
  %1503 = vmatprep.subr.mxu0 0.0
  %1504 = vmatpush1.msra.mxu0 0.0
  %1505 = vmatprep.subr.mxu0 0.0
  %1506 = vmatpush1.msra.mxu0 0.0
  %1507 = vmatprep.subr.mxu0 0.0
  %1508 = vmatpush1.msra.mxu0 0.0
  %1509 = vmatprep.subr.mxu0 0.0
  %1510 = vmatpush1.msra.mxu0 0.0
  %1511 = vmatprep.subr.mxu0 0.0
  %1512 = vmatpush1.msra.mxu0 0.0
  %1513 = vmatprep.subr.mxu0 0.0
  %1514 = vmatpush1.msra.mxu0 0.0
  %1515 = vmatprep.subr.mxu0 0.0
  %1516 = vmatpush1.msra.mxu0 0.0
  %1517 = vmatprep.mubr.f32.mxu0 0.0
  %1518 = vmatmul.mubr.f32.gmra.mrb[0].mxu0 %v1451
  %v1519 = vpop.f32.mrb[0].mxu0
  %v1520 = vadd.f32 0.0, %v1519
  %v1521 = vpop.f32.mrb[0].mxu0
  %1522 = vdwg.mxu0
  %1523 = vrot.lane.b32.xlu0 %v229, 120
  %v1524 = vpop.permute.xlu0 %1523
  %1525 = vrot.lane.b32.xlu0 %v313, 120
  %v1526 = vpop.permute.xlu0 %1525
  %v1527 = vsel %vm412, %v1524, 0
  %v1529 = vsel %vm412, %v1526, 0
  %1531 = vmatprep.subr.mxu0 0.0
  %1532 = vmatpush1.xpose.msra.mxu0 %v1529
  %1533 = vmatprep.subr.mxu0 0.0
  %1534 = vmatpush1.xpose.msra.mxu0 0.0
  %1535 = vmatprep.subr.mxu0 0.0
  %1536 = vmatpush1.xpose.msra.mxu0 0.0
  %1537 = vmatprep.subr.mxu0 0.0
  %1538 = vmatpush1.xpose.msra.mxu0 0.0
  %1539 = vmatprep.subr.mxu0 0.0
  %1540 = vmatpush1.xpose.msra.mxu0 0.0
  %1541 = vmatprep.subr.mxu0 0.0
  %1542 = vmatpush1.xpose.msra.mxu0 0.0
  %1543 = vmatprep.subr.mxu0 0.0
  %1544 = vmatpush1.xpose.msra.mxu0 0.0
  %1545 = vmatprep.subr.mxu0 0.0
  %1546 = vmatpush1.xpose.msra.mxu0 0.0
  %1547 = vmatprep.subr.mxu0 0.0
  %1548 = vmatpush1.xpose.msra.mxu0 0.0
  %1549 = vmatprep.subr.mxu0 0.0
  %1550 = vmatpush1.xpose.msra.mxu0 0.0
  %1551 = vmatprep.subr.mxu0 0.0
  %1552 = vmatpush1.xpose.msra.mxu0 0.0
  %1553 = vmatprep.subr.mxu0 0.0
  %1554 = vmatpush1.xpose.msra.mxu0 0.0
  %1555 = vmatprep.subr.mxu0 0.0
  %1556 = vmatpush1.xpose.msra.mxu0 0.0
  %1557 = vmatprep.subr.mxu0 0.0
  %1558 = vmatpush1.xpose.msra.mxu0 0.0
  %1559 = vmatprep.subr.mxu0 0.0
  %1560 = vmatpush1.xpose.msra.mxu0 0.0
  %1561 = vmatprep.subr.mxu0 0.0
  %1562 = vmatpush1.xpose.msra.mxu0 0.0
  %1563 = vmatprep.subr.mxu0 0.0
  %1564 = vmatpush1.xpose.msra.mxu0 0.0
  %1565 = vmatprep.subr.mxu0 0.0
  %1566 = vmatpush1.xpose.msra.mxu0 0.0
  %1567 = vmatprep.subr.mxu0 0.0
  %1568 = vmatpush1.xpose.msra.mxu0 0.0
  %1569 = vmatprep.subr.mxu0 0.0
  %1570 = vmatpush1.xpose.msra.mxu0 0.0
  %1571 = vmatprep.subr.mxu0 0.0
  %1572 = vmatpush1.xpose.msra.mxu0 0.0
  %1573 = vmatprep.subr.mxu0 0.0
  %1574 = vmatpush1.xpose.msra.mxu0 0.0
  %1575 = vmatprep.subr.mxu0 0.0
  %1576 = vmatpush1.xpose.msra.mxu0 0.0
  %1577 = vmatprep.subr.mxu0 0.0
  %1578 = vmatpush1.xpose.msra.mxu0 0.0
  %1579 = vmatprep.subr.mxu0 0.0
  %1580 = vmatpush1.xpose.msra.mxu0 0.0
  %1581 = vmatprep.subr.mxu0 0.0
  %1582 = vmatpush1.xpose.msra.mxu0 0.0
  %1583 = vmatprep.subr.mxu0 0.0
  %1584 = vmatpush1.xpose.msra.mxu0 0.0
  %1585 = vmatprep.subr.mxu0 0.0
  %1586 = vmatpush1.xpose.msra.mxu0 0.0
  %1587 = vmatprep.subr.mxu0 0.0
  %1588 = vmatpush1.xpose.msra.mxu0 0.0
  %1589 = vmatprep.subr.mxu0 0.0
  %1590 = vmatpush1.xpose.msra.mxu0 0.0
  %1591 = vmatprep.subr.mxu0 0.0
  %1592 = vmatpush1.xpose.msra.mxu0 0.0
  %1593 = vmatprep.subr.mxu0 0.0
  %1594 = vmatpush1.xpose.msra.mxu0 0.0
  %1595 = vmatprep.mubr.f32.mxu0 0.0
  %1596 = vmatmul.mubr.f32.gmra.mrb[0].mxu0 %v1527
  %v1597 = vpop.f32.mrb[0].mxu0
  %v1598 = vadd.f32 0.0, %v1597
  %v1599 = vpop.f32.mrb[0].mxu0
  %1600 = vdwg.mxu0
  %v1601 = vsel %vm412, %v1598, -inf
  %1602 = vmax.xlane.f32.xlu0 %v1601
  %v1603 = vpop.xlane.xlu0 %1602
  %v1604 = vsub.f32 %v1598, %v1603
  %v1605 = vmul.f32 %v1604, 1.442695
  %v1606 = vpow.pop %v1605
  %v1607 = vsel %vm412, %v1606, 0.0
  %1608 = vadd.xlane.f32.xlu0 %v1607
  %v1609 = vpop.xlane.xlu0 %1608
  %v1610 = vrcp.pop %v1609
  %v1611 = vmul.f32 %v1606, %v1610
  %1613 = vrot.lane.b32.xlu0 %v405, 120
  %v1614 = vpop.permute.xlu0 %1613
  %v1617 = vsel %vm412, %v1611, 0
  %1619 = vmatprep.subr.mxu0 0.0
  %1620 = vmatpush1.msra.mxu0 %v1614
  %1621 = vmatprep.subr.mxu0 0.0
  %1622 = vmatpush1.msra.mxu0 0.0
  %1623 = vmatprep.subr.mxu0 0.0
  %1624 = vmatpush1.msra.mxu0 0.0
  %1625 = vmatprep.subr.mxu0 0.0
  %1626 = vmatpush1.msra.mxu0 0.0
  %1627 = vmatprep.subr.mxu0 0.0
  %1628 = vmatpush1.msra.mxu0 0.0
  %1629 = vmatprep.subr.mxu0 0.0
  %1630 = vmatpush1.msra.mxu0 0.0
  %1631 = vmatprep.subr.mxu0 0.0
  %1632 = vmatpush1.msra.mxu0 0.0
  %1633 = vmatprep.subr.mxu0 0.0
  %1634 = vmatpush1.msra.mxu0 0.0
  %1635 = vmatprep.subr.mxu0 0.0
  %1636 = vmatpush1.msra.mxu0 0.0
  %1637 = vmatprep.subr.mxu0 0.0
  %1638 = vmatpush1.msra.mxu0 0.0
  %1639 = vmatprep.subr.mxu0 0.0
  %1640 = vmatpush1.msra.mxu0 0.0
  %1641 = vmatprep.subr.mxu0 0.0
  %1642 = vmatpush1.msra.mxu0 0.0
  %1643 = vmatprep.subr.mxu0 0.0
  %1644 = vmatpush1.msra.mxu0 0.0
  %1645 = vmatprep.subr.mxu0 0.0
  %1646 = vmatpush1.msra.mxu0 0.0
  %1647 = vmatprep.subr.mxu0 0.0
  %1648 = vmatpush1.msra.mxu0 0.0
  %1649 = vmatprep.subr.mxu0 0.0
  %1650 = vmatpush1.msra.mxu0 0.0
  %1651 = vmatprep.subr.mxu0 0.0
  %1652 = vmatpush1.msra.mxu0 0.0
  %1653 = vmatprep.subr.mxu0 0.0
  %1654 = vmatpush1.msra.mxu0 0.0
  %1655 = vmatprep.subr.mxu0 0.0
  %1656 = vmatpush1.msra.mxu0 0.0
  %1657 = vmatprep.subr.mxu0 0.0
  %1658 = vmatpush1.msra.mxu0 0.0
  %1659 = vmatprep.subr.mxu0 0.0
  %1660 = vmatpush1.msra.mxu0 0.0
  %1661 = vmatprep.subr.mxu0 0.0
  %1662 = vmatpush1.msra.mxu0 0.0
  %1663 = vmatprep.subr.mxu0 0.0
  %1664 = vmatpush1.msra.mxu0 0.0
  %1665 = vmatprep.subr.mxu0 0.0
  %1666 = vmatpush1.msra.mxu0 0.0
  %1667 = vmatprep.subr.mxu0 0.0
  %1668 = vmatpush1.msra.mxu0 0.0
  %1669 = vmatprep.subr.mxu0 0.0
  %1670 = vmatpush1.msra.mxu0 0.0
  %1671 = vmatprep.subr.mxu0 0.0
  %1672 = vmatpush1.msra.mxu0 0.0
  %1673 = vmatprep.subr.mxu0 0.0
  %1674 = vmatpush1.msra.mxu0 0.0
  %1675 = vmatprep.subr.mxu0 0.0
  %1676 = vmatpush1.msra.mxu0 0.0
  %1677 = vmatprep.subr.mxu0 0.0
  %1678 = vmatpush1.msra.mxu0 0.0
  %1679 = vmatprep.subr.mxu0 0.0
  %1680 = vmatpush1.msra.mxu0 0.0
  %1681 = vmatprep.subr.mxu0 0.0
  %1682 = vmatpush1.msra.mxu0 0.0
  %1683 = vmatprep.mubr.f32.mxu0 0.0
  %1684 = vmatmul.mubr.f32.gmra.mrb[0].mxu0 %v1617
  %v1685 = vpop.f32.mrb[0].mxu0
  %v1686 = vadd.f32 0.0, %v1685
  %v1687 = vpop.f32.mrb[0].mxu0
  %1688 = vdwg.mxu0
  %v1690 = vsel %vm412, %v1686, 0
  %1692 = vmatprep.subr.mxu0 0.0
  %1693 = vmatpush1.msra.mxu0 %v409
  %1694 = vmatprep.subr.mxu0 0.0
  %1695 = vmatpush1.msra.mxu0 0.0
  %1696 = vmatprep.subr.mxu0 0.0
  %1697 = vmatpush1.msra.mxu0 0.0
  %1698 = vmatprep.subr.mxu0 0.0
  %1699 = vmatpush1.msra.mxu0 0.0
  %1700 = vmatprep.subr.mxu0 0.0
  %1701 = vmatpush1.msra.mxu0 0.0
  %1702 = vmatprep.subr.mxu0 0.0
  %1703 = vmatpush1.msra.mxu0 0.0
  %1704 = vmatprep.subr.mxu0 0.0
  %1705 = vmatpush1.msra.mxu0 0.0
  %1706 = vmatprep.subr.mxu0 0.0
  %1707 = vmatpush1.msra.mxu0 0.0
  %1708 = vmatprep.subr.mxu0 0.0
  %1709 = vmatpush1.msra.mxu0 0.0
  %1710 = vmatprep.subr.mxu0 0.0
  %1711 = vmatpush1.msra.mxu0 0.0
  %1712 = vmatprep.subr.mxu0 0.0
  %1713 = vmatpush1.msra.mxu0 0.0
  %1714 = vmatprep.subr.mxu0 0.0
  %1715 = vmatpush1.msra.mxu0 0.0
  %1716 = vmatprep.subr.mxu0 0.0
  %1717 = vmatpush1.msra.mxu0 0.0
  %1718 = vmatprep.subr.mxu0 0.0
  %1719 = vmatpush1.msra.mxu0 0.0
  %1720 = vmatprep.subr.mxu0 0.0
  %1721 = vmatpush1.msra.mxu0 0.0
  %1722 = vmatprep.subr.mxu0 0.0
  %1723 = vmatpush1.msra.mxu0 0.0
  %1724 = vmatprep.subr.mxu0 0.0
  %1725 = vmatpush1.msra.mxu0 0.0
  %1726 = vmatprep.subr.mxu0 0.0
  %1727 = vmatpush1.msra.mxu0 0.0
  %1728 = vmatprep.subr.mxu0 0.0
  %1729 = vmatpush1.msra.mxu0 0.0
  %1730 = vmatprep.subr.mxu0 0.0
  %1731 = vmatpush1.msra.mxu0 0.0
  %1732 = vmatprep.subr.mxu0 0.0
  %1733 = vmatpush1.msra.mxu0 0.0
  %1734 = vmatprep.subr.mxu0 0.0
  %1735 = vmatpush1.msra.mxu0 0.0
  %1736 = vmatprep.subr.mxu0 0.0
  %1737 = vmatpush1.msra.mxu0 0.0
  %1738 = vmatprep.subr.mxu0 0.0
  %1739 = vmatpush1.msra.mxu0 0.0
  %1740 = vmatprep.subr.mxu0 0.0
  %1741 = vmatpush1.msra.mxu0 0.0
  %1742 = vmatprep.subr.mxu0 0.0
  %1743 = vmatpush1.msra.mxu0 0.0
  %1744 = vmatprep.subr.mxu0 0.0
  %1745 = vmatpush1.msra.mxu0 0.0
  %1746 = vmatprep.subr.mxu0 0.0
  %1747 = vmatpush1.msra.mxu0 0.0
  %1748 = vmatprep.subr.mxu0 0.0
  %1749 = vmatpush1.msra.mxu0 0.0
  %1750 = vmatprep.subr.mxu0 0.0
  %1751 = vmatpush1.msra.mxu0 0.0
  %1752 = vmatprep.subr.mxu0 0.0
  %1753 = vmatpush1.msra.mxu0 0.0
  %1754 = vmatprep.subr.mxu0 0.0
  %1755 = vmatpush1.msra.mxu0 0.0
  %1756 = vmatprep.mubr.f32.mxu0 0.0
  %1757 = vmatmul.mubr.f32.gmra.mrb[0].mxu0 %v1690
  %v1758 = vpop.f32.mrb[0].mxu0
  %v1759 = vadd.f32 0.0, %v1758
  %v1760 = vpop.f32.mrb[0].mxu0
  %1761 = vdwg.mxu0
  %v1763 = vsel %vm412, %v1520, 0
  %1765 = vmatprep.subr.mxu0 0.0
  %1766 = vmatpush1.msra.mxu0 %v408
  %1767 = vmatprep.subr.mxu0 0.0
  %1768 = vmatpush1.msra.mxu0 0.0
  %1769 = vmatprep.subr.mxu0 0.0
  %1770 = vmatpush1.msra.mxu0 0.0
  %1771 = vmatprep.subr.mxu0 0.0
  %1772 = vmatpush1.msra.mxu0 0.0
  %1773 = vmatprep.subr.mxu0 0.0
  %1774 = vmatpush1.msra.mxu0 0.0
  %1775 = vmatprep.subr.mxu0 0.0
  %1776 = vmatpush1.msra.mxu0 0.0
  %1777 = vmatprep.subr.mxu0 0.0
  %1778 = vmatpush1.msra.mxu0 0.0
  %1779 = vmatprep.subr.mxu0 0.0
  %1780 = vmatpush1.msra.mxu0 0.0
  %1781 = vmatprep.subr.mxu0 0.0
  %1782 = vmatpush1.msra.mxu0 0.0
  %1783 = vmatprep.subr.mxu0 0.0
  %1784 = vmatpush1.msra.mxu0 0.0
  %1785 = vmatprep.subr.mxu0 0.0
  %1786 = vmatpush1.msra.mxu0 0.0
  %1787 = vmatprep.subr.mxu0 0.0
  %1788 = vmatpush1.msra.mxu0 0.0
  %1789 = vmatprep.subr.mxu0 0.0
  %1790 = vmatpush1.msra.mxu0 0.0
  %1791 = vmatprep.subr.mxu0 0.0
  %1792 = vmatpush1.msra.mxu0 0.0
  %1793 = vmatprep.subr.mxu0 0.0
  %1794 = vmatpush1.msra.mxu0 0.0
  %1795 = vmatprep.subr.mxu0 0.0
  %1796 = vmatpush1.msra.mxu0 0.0
  %1797 = vmatprep.subr.mxu0 0.0
  %1798 = vmatpush1.msra.mxu0 0.0
  %1799 = vmatprep.subr.mxu0 0.0
  %1800 = vmatpush1.msra.mxu0 0.0
  %1801 = vmatprep.subr.mxu0 0.0
  %1802 = vmatpush1.msra.mxu0 0.0
  %1803 = vmatprep.subr.mxu0 0.0
  %1804 = vmatpush1.msra.mxu0 0.0
  %1805 = vmatprep.subr.mxu0 0.0
  %1806 = vmatpush1.msra.mxu0 0.0
  %1807 = vmatprep.subr.mxu0 0.0
  %1808 = vmatpush1.msra.mxu0 0.0
  %1809 = vmatprep.subr.mxu0 0.0
  %1810 = vmatpush1.msra.mxu0 0.0
  %1811 = vmatprep.subr.mxu0 0.0
  %1812 = vmatpush1.msra.mxu0 0.0
  %1813 = vmatprep.subr.mxu0 0.0
  %1814 = vmatpush1.msra.mxu0 0.0
  %1815 = vmatprep.subr.mxu0 0.0
  %1816 = vmatpush1.msra.mxu0 0.0
  %1817 = vmatprep.subr.mxu0 0.0
  %1818 = vmatpush1.msra.mxu0 0.0
  %1819 = vmatprep.subr.mxu0 0.0
  %1820 = vmatpush1.msra.mxu0 0.0
  %1821 = vmatprep.subr.mxu0 0.0
  %1822 = vmatpush1.msra.mxu0 0.0
  %1823 = vmatprep.subr.mxu0 0.0
  %1824 = vmatpush1.msra.mxu0 0.0
  %1825 = vmatprep.subr.mxu0 0.0
  %1826 = vmatpush1.msra.mxu0 0.0
  %1827 = vmatprep.subr.mxu0 0.0
  %1828 = vmatpush1.msra.mxu0 0.0
  %1829 = vmatprep.mubr.f32.mxu0 0.0
  %1830 = vmatmul.mubr.f32.gmra.mrb[0].mxu0 %v1763
  %v1831 = vpop.f32.mrb[0].mxu0
  %v1832 = vadd.f32 %v1759, %v1831
  %v1833 = vpop.f32.mrb[0].mxu0
  %1834 = vdwg.mxu0
  %1835 = vrot.lane.b32.xlu0 %v229, 112
  %v1836 = vpop.permute.xlu0 %1835
  %1837 = vrot.lane.b32.xlu0 %v313, 112
  %v1838 = vpop.permute.xlu0 %1837
  %v1839 = vsel %vm412, %v1836, 0
  %v1841 = vsel %vm412, %v1838, 0
  %1843 = vmatprep.subr.mxu0 0.0
  %1844 = vmatpush1.xpose.msra.mxu0 %v1841
  %1845 = vmatprep.subr.mxu0 0.0
  %1846 = vmatpush1.xpose.msra.mxu0 0.0
  %1847 = vmatprep.subr.mxu0 0.0
  %1848 = vmatpush1.xpose.msra.mxu0 0.0
  %1849 = vmatprep.subr.mxu0 0.0
  %1850 = vmatpush1.xpose.msra.mxu0 0.0
  %1851 = vmatprep.subr.mxu0 0.0
  %1852 = vmatpush1.xpose.msra.mxu0 0.0
  %1853 = vmatprep.subr.mxu0 0.0
  %1854 = vmatpush1.xpose.msra.mxu0 0.0
  %1855 = vmatprep.subr.mxu0 0.0
  %1856 = vmatpush1.xpose.msra.mxu0 0.0
  %1857 = vmatprep.subr.mxu0 0.0
  %1858 = vmatpush1.xpose.msra.mxu0 0.0
  %1859 = vmatprep.subr.mxu0 0.0
  %1860 = vmatpush1.xpose.msra.mxu0 0.0
  %1861 = vmatprep.subr.mxu0 0.0
  %1862 = vmatpush1.xpose.msra.mxu0 0.0
  %1863 = vmatprep.subr.mxu0 0.0
  %1864 = vmatpush1.xpose.msra.mxu0 0.0
  %1865 = vmatprep.subr.mxu0 0.0
  %1866 = vmatpush1.xpose.msra.mxu0 0.0
  %1867 = vmatprep.subr.mxu0 0.0
  %1868 = vmatpush1.xpose.msra.mxu0 0.0
  %1869 = vmatprep.subr.mxu0 0.0
  %1870 = vmatpush1.xpose.msra.mxu0 0.0
  %1871 = vmatprep.subr.mxu0 0.0
  %1872 = vmatpush1.xpose.msra.mxu0 0.0
  %1873 = vmatprep.subr.mxu0 0.0
  %1874 = vmatpush1.xpose.msra.mxu0 0.0
  %1875 = vmatprep.subr.mxu0 0.0
  %1876 = vmatpush1.xpose.msra.mxu0 0.0
  %1877 = vmatprep.subr.mxu0 0.0
  %1878 = vmatpush1.xpose.msra.mxu0 0.0
  %1879 = vmatprep.subr.mxu0 0.0
  %1880 = vmatpush1.xpose.msra.mxu0 0.0
  %1881 = vmatprep.subr.mxu0 0.0
  %1882 = vmatpush1.xpose.msra.mxu0 0.0
  %1883 = vmatprep.subr.mxu0 0.0
  %1884 = vmatpush1.xpose.msra.mxu0 0.0
  %1885 = vmatprep.subr.mxu0 0.0
  %1886 = vmatpush1.xpose.msra.mxu0 0.0
  %1887 = vmatprep.subr.mxu0 0.0
  %1888 = vmatpush1.xpose.msra.mxu0 0.0
  %1889 = vmatprep.subr.mxu0 0.0
  %1890 = vmatpush1.xpose.msra.mxu0 0.0
  %1891 = vmatprep.subr.mxu0 0.0
  %1892 = vmatpush1.xpose.msra.mxu0 0.0
  %1893 = vmatprep.subr.mxu0 0.0
  %1894 = vmatpush1.xpose.msra.mxu0 0.0
  %1895 = vmatprep.subr.mxu0 0.0
  %1896 = vmatpush1.xpose.msra.mxu0 0.0
  %1897 = vmatprep.subr.mxu0 0.0
  %1898 = vmatpush1.xpose.msra.mxu0 0.0
  %1899 = vmatprep.subr.mxu0 0.0
  %1900 = vmatpush1.xpose.msra.mxu0 0.0
  %1901 = vmatprep.subr.mxu0 0.0
  %1902 = vmatpush1.xpose.msra.mxu0 0.0
  %1903 = vmatprep.subr.mxu0 0.0
  %1904 = vmatpush1.xpose.msra.mxu0 0.0
  %1905 = vmatprep.subr.mxu0 0.0
  %1906 = vmatpush1.xpose.msra.mxu0 0.0
  %1907 = vmatprep.mubr.f32.mxu0 0.0
  %1908 = vmatmul.mubr.f32.gmra.mrb[0].mxu0 %v1839
  %v1909 = vpop.f32.mrb[0].mxu0
  %v1910 = vadd.f32 0.0, %v1909
  %v1911 = vpop.f32.mrb[0].mxu0
  %1912 = vdwg.mxu0
  %v1913 = vsel %vm412, %v1910, -inf
  %1914 = vmax.xlane.f32.xlu0 %v1913
  %v1915 = vpop.xlane.xlu0 %1914
  %v1916 = vsub.f32 %v1910, %v1915
  %v1917 = vmul.f32 %v1916, 1.442695
  %v1918 = vpow.pop %v1917
  %v1919 = vsel %vm412, %v1918, 0.0
  %1920 = vadd.xlane.f32.xlu0 %v1919
  %v1921 = vpop.xlane.xlu0 %1920
  %v1922 = vrcp.pop %v1921
  %v1923 = vmul.f32 %v1918, %v1922
  %1924 = vrot.lane.b32.xlu0 %v405, 112
  %v1925 = vpop.permute.xlu0 %1924
  %v1928 = vsel %vm412, %v1923, 0
  %1930 = vmatprep.subr.mxu0 0.0
  %1931 = vmatpush1.msra.mxu0 %v1925
  %1932 = vmatprep.subr.mxu0 0.0
  %1933 = vmatpush1.msra.mxu0 0.0
  %1934 = vmatprep.subr.mxu0 0.0
  %1935 = vmatpush1.msra.mxu0 0.0
  %1936 = vmatprep.subr.mxu0 0.0
  %1937 = vmatpush1.msra.mxu0 0.0
  %1938 = vmatprep.subr.mxu0 0.0
  %1939 = vmatpush1.msra.mxu0 0.0
  %1940 = vmatprep.subr.mxu0 0.0
  %1941 = vmatpush1.msra.mxu0 0.0
  %1942 = vmatprep.subr.mxu0 0.0
  %1943 = vmatpush1.msra.mxu0 0.0
  %1944 = vmatprep.subr.mxu0 0.0
  %1945 = vmatpush1.msra.mxu0 0.0
  %1946 = vmatprep.subr.mxu0 0.0
  %1947 = vmatpush1.msra.mxu0 0.0
  %1948 = vmatprep.subr.mxu0 0.0
  %1949 = vmatpush1.msra.mxu0 0.0
  %1950 = vmatprep.subr.mxu0 0.0
  %1951 = vmatpush1.msra.mxu0 0.0
  %1952 = vmatprep.subr.mxu0 0.0
  %1953 = vmatpush1.msra.mxu0 0.0
  %1954 = vmatprep.subr.mxu0 0.0
  %1955 = vmatpush1.msra.mxu0 0.0
  %1956 = vmatprep.subr.mxu0 0.0
  %1957 = vmatpush1.msra.mxu0 0.0
  %1958 = vmatprep.subr.mxu0 0.0
  %1959 = vmatpush1.msra.mxu0 0.0
  %1960 = vmatprep.subr.mxu0 0.0
  %1961 = vmatpush1.msra.mxu0 0.0
  %1962 = vmatprep.subr.mxu0 0.0
  %1963 = vmatpush1.msra.mxu0 0.0
  %1964 = vmatprep.subr.mxu0 0.0
  %1965 = vmatpush1.msra.mxu0 0.0
  %1966 = vmatprep.subr.mxu0 0.0
  %1967 = vmatpush1.msra.mxu0 0.0
  %1968 = vmatprep.subr.mxu0 0.0
  %1969 = vmatpush1.msra.mxu0 0.0
  %1970 = vmatprep.subr.mxu0 0.0
  %1971 = vmatpush1.msra.mxu0 0.0
  %1972 = vmatprep.subr.mxu0 0.0
  %1973 = vmatpush1.msra.mxu0 0.0
  %1974 = vmatprep.subr.mxu0 0.0
  %1975 = vmatpush1.msra.mxu0 0.0
  %1976 = vmatprep.subr.mxu0 0.0
  %1977 = vmatpush1.msra.mxu0 0.0
  %1978 = vmatprep.subr.mxu0 0.0
  %1979 = vmatpush1.msra.mxu0 0.0
  %1980 = vmatprep.subr.mxu0 0.0
  %1981 = vmatpush1.msra.mxu0 0.0
  %1982 = vmatprep.subr.mxu0 0.0
  %1983 = vmatpush1.msra.mxu0 0.0
  %1984 = vmatprep.subr.mxu0 0.0
  %1985 = vmatpush1.msra.mxu0 0.0
  %1986 = vmatprep.subr.mxu0 0.0
  %1987 = vmatpush1.msra.mxu0 0.0
  %1988 = vmatprep.subr.mxu0 0.0
  %1989 = vmatpush1.msra.mxu0 0.0
  %1990 = vmatprep.subr.mxu0 0.0
  %1991 = vmatpush1.msra.mxu0 0.0
  %1992 = vmatprep.subr.mxu0 0.0
  %1993 = vmatpush1.msra.mxu0 0.0
  %1994 = vmatprep.mubr.f32.mxu0 0.0
  %1995 = vmatmul.mubr.f32.gmra.mrb[0].mxu0 %v1928
  %v1996 = vpop.f32.mrb[0].mxu0
  %v1997 = vadd.f32 0.0, %v1996
  %v1998 = vpop.f32.mrb[0].mxu0
  %1999 = vdwg.mxu0
  %v2001 = vsel %vm412, %v1997, 0
  %2003 = vmatprep.subr.mxu0 0.0
  %2004 = vmatpush1.msra.mxu0 %v410
  %2005 = vmatprep.subr.mxu0 0.0
  %2006 = vmatpush1.msra.mxu0 0.0
  %2007 = vmatprep.subr.mxu0 0.0
  %2008 = vmatpush1.msra.mxu0 0.0
  %2009 = vmatprep.subr.mxu0 0.0
  %2010 = vmatpush1.msra.mxu0 0.0
  %2011 = vmatprep.subr.mxu0 0.0
  %2012 = vmatpush1.msra.mxu0 0.0
  %2013 = vmatprep.subr.mxu0 0.0
  %2014 = vmatpush1.msra.mxu0 0.0
  %2015 = vmatprep.subr.mxu0 0.0
  %2016 = vmatpush1.msra.mxu0 0.0
  %2017 = vmatprep.subr.mxu0 0.0
  %2018 = vmatpush1.msra.mxu0 0.0
  %2019 = vmatprep.subr.mxu0 0.0
  %2020 = vmatpush1.msra.mxu0 0.0
  %2021 = vmatprep.subr.mxu0 0.0
  %2022 = vmatpush1.msra.mxu0 0.0
  %2023 = vmatprep.subr.mxu0 0.0
  %2024 = vmatpush1.msra.mxu0 0.0
  %2025 = vmatprep.subr.mxu0 0.0
  %2026 = vmatpush1.msra.mxu0 0.0
  %2027 = vmatprep.subr.mxu0 0.0
  %2028 = vmatpush1.msra.mxu0 0.0
  %2029 = vmatprep.subr.mxu0 0.0
  %2030 = vmatpush1.msra.mxu0 0.0
  %2031 = vmatprep.subr.mxu0 0.0
  %2032 = vmatpush1.msra.mxu0 0.0
  %2033 = vmatprep.subr.mxu0 0.0
  %2034 = vmatpush1.msra.mxu0 0.0
  %2035 = vmatprep.subr.mxu0 0.0
  %2036 = vmatpush1.msra.mxu0 0.0
  %2037 = vmatprep.subr.mxu0 0.0
  %2038 = vmatpush1.msra.mxu0 0.0
  %2039 = vmatprep.subr.mxu0 0.0
  %2040 = vmatpush1.msra.mxu0 0.0
  %2041 = vmatprep.subr.mxu0 0.0
  %2042 = vmatpush1.msra.mxu0 0.0
  %2043 = vmatprep.subr.mxu0 0.0
  %2044 = vmatpush1.msra.mxu0 0.0
  %2045 = vmatprep.subr.mxu0 0.0
  %2046 = vmatpush1.msra.mxu0 0.0
  %2047 = vmatprep.subr.mxu0 0.0
  %2048 = vmatpush1.msra.mxu0 0.0
  %2049 = vmatprep.subr.mxu0 0.0
  %2050 = vmatpush1.msra.mxu0 0.0
  %2051 = vmatprep.subr.mxu0 0.0
  %2052 = vmatpush1.msra.mxu0 0.0
  %2053 = vmatprep.subr.mxu0 0.0
  %2054 = vmatpush1.msra.mxu0 0.0
  %2055 = vmatprep.subr.mxu0 0.0
  %2056 = vmatpush1.msra.mxu0 0.0
  %2057 = vmatprep.subr.mxu0 0.0
  %2058 = vmatpush1.msra.mxu0 0.0
  %2059 = vmatprep.subr.mxu0 0.0
  %2060 = vmatpush1.msra.mxu0 0.0
  %2061 = vmatprep.subr.mxu0 0.0
  %2062 = vmatpush1.msra.mxu0 0.0
  %2063 = vmatprep.subr.mxu0 0.0
  %2064 = vmatpush1.msra.mxu0 0.0
  %2065 = vmatprep.subr.mxu0 0.0
  %2066 = vmatpush1.msra.mxu0 0.0
  %2067 = vmatprep.mubr.f32.mxu0 0.0
  %2068 = vmatmul.mubr.f32.gmra.mrb[0].mxu0 %v2001
  %v2069 = vpop.f32.mrb[0].mxu0
  %v2070 = vadd.f32 0.0, %v2069
  %v2071 = vpop.f32.mrb[0].mxu0
  %2072 = vdwg.mxu0
  %v2073 = vadd.f32 %v1832, %v2070
  %2074 = vrot.lane.b32.xlu0 %v229, 104
  %v2075 = vpop.permute.xlu0 %2074
  %2076 = vrot.lane.b32.xlu0 %v313, 104
  %v2077 = vpop.permute.xlu0 %2076
  %v2078 = vsel %vm412, %v2075, 0
  %v2080 = vsel %vm412, %v2077, 0
  %2082 = vmatprep.subr.mxu0 0.0
  %2083 = vmatpush1.xpose.msra.mxu0 %v2080
  %2084 = vmatprep.subr.mxu0 0.0
  %2085 = vmatpush1.xpose.msra.mxu0 0.0
  %2086 = vmatprep.subr.mxu0 0.0
  %2087 = vmatpush1.xpose.msra.mxu0 0.0
  %2088 = vmatprep.subr.mxu0 0.0
  %2089 = vmatpush1.xpose.msra.mxu0 0.0
  %2090 = vmatprep.subr.mxu0 0.0
  %2091 = vmatpush1.xpose.msra.mxu0 0.0
  %2092 = vmatprep.subr.mxu0 0.0
  %2093 = vmatpush1.xpose.msra.mxu0 0.0
  %2094 = vmatprep.subr.mxu0 0.0
  %2095 = vmatpush1.xpose.msra.mxu0 0.0
  %2096 = vmatprep.subr.mxu0 0.0
  %2097 = vmatpush1.xpose.msra.mxu0 0.0
  %2098 = vmatprep.subr.mxu0 0.0
  %2099 = vmatpush1.xpose.msra.mxu0 0.0
  %2100 = vmatprep.subr.mxu0 0.0
  %2101 = vmatpush1.xpose.msra.mxu0 0.0
  %2102 = vmatprep.subr.mxu0 0.0
  %2103 = vmatpush1.xpose.msra.mxu0 0.0
  %2104 = vmatprep.subr.mxu0 0.0
  %2105 = vmatpush1.xpose.msra.mxu0 0.0
  %2106 = vmatprep.subr.mxu0 0.0
  %2107 = vmatpush1.xpose.msra.mxu0 0.0
  %2108 = vmatprep.subr.mxu0 0.0
  %2109 = vmatpush1.xpose.msra.mxu0 0.0
  %2110 = vmatprep.subr.mxu0 0.0
  %2111 = vmatpush1.xpose.msra.mxu0 0.0
  %2112 = vmatprep.subr.mxu0 0.0
  %2113 = vmatpush1.xpose.msra.mxu0 0.0
  %2114 = vmatprep.subr.mxu0 0.0
  %2115 = vmatpush1.xpose.msra.mxu0 0.0
  %2116 = vmatprep.subr.mxu0 0.0
  %2117 = vmatpush1.xpose.msra.mxu0 0.0
  %2118 = vmatprep.subr.mxu0 0.0
  %2119 = vmatpush1.xpose.msra.mxu0 0.0
  %2120 = vmatprep.subr.mxu0 0.0
  %2121 = vmatpush1.xpose.msra.mxu0 0.0
  %2122 = vmatprep.subr.mxu0 0.0
  %2123 = vmatpush1.xpose.msra.mxu0 0.0
  %2124 = vmatprep.subr.mxu0 0.0
  %2125 = vmatpush1.xpose.msra.mxu0 0.0
  %2126 = vmatprep.subr.mxu0 0.0
  %2127 = vmatpush1.xpose.msra.mxu0 0.0
  %2128 = vmatprep.subr.mxu0 0.0
  %2129 = vmatpush1.xpose.msra.mxu0 0.0
  %2130 = vmatprep.subr.mxu0 0.0
  %2131 = vmatpush1.xpose.msra.mxu0 0.0
  %2132 = vmatprep.subr.mxu0 0.0
  %2133 = vmatpush1.xpose.msra.mxu0 0.0
  %2134 = vmatprep.subr.mxu0 0.0
  %2135 = vmatpush1.xpose.msra.mxu0 0.0
  %2136 = vmatprep.subr.mxu0 0.0
  %2137 = vmatpush1.xpose.msra.mxu0 0.0
  %2138 = vmatprep.subr.mxu0 0.0
  %2139 = vmatpush1.xpose.msra.mxu0 0.0
  %2140 = vmatprep.subr.mxu0 0.0
  %2141 = vmatpush1.xpose.msra.mxu0 0.0
  %2142 = vmatprep.subr.mxu0 0.0
  %2143 = vmatpush1.xpose.msra.mxu0 0.0
  %2144 = vmatprep.subr.mxu0 0.0
  %2145 = vmatpush1.xpose.msra.mxu0 0.0
  %2146 = vmatprep.mubr.f32.mxu0 0.0
  %2147 = vmatmul.mubr.f32.gmra.mrb[0].mxu0 %v2078
  %v2148 = vpop.f32.mrb[0].mxu0
  %v2149 = vadd.f32 0.0, %v2148
  %v2150 = vpop.f32.mrb[0].mxu0
  %2151 = vdwg.mxu0
  %v2152 = vsel %vm412, %v2149, -inf
  %2153 = vmax.xlane.f32.xlu0 %v2152
  %v2154 = vpop.xlane.xlu0 %2153
  %v2155 = vsub.f32 %v2149, %v2154
  %v2156 = vmul.f32 %v2155, 1.442695
  %v2157 = vpow.pop %v2156
  %v2158 = vsel %vm412, %v2157, 0.0
  %2159 = vadd.xlane.f32.xlu0 %v2158
  %v2160 = vpop.xlane.xlu0 %2159
  %v2161 = vrcp.pop %v2160
  %v2162 = vmul.f32 %v2157, %v2161
  %2163 = vrot.lane.b32.xlu0 %v405, 104
  %v2164 = vpop.permute.xlu0 %2163
  %v2167 = vsel %vm412, %v2162, 0
  %2169 = vmatprep.subr.mxu0 0.0
  %2170 = vmatpush1.msra.mxu0 %v2164
  %2171 = vmatprep.subr.mxu0 0.0
  %2172 = vmatpush1.msra.mxu0 0.0
  %2173 = vmatprep.subr.mxu0 0.0
  %2174 = vmatpush1.msra.mxu0 0.0
  %2175 = vmatprep.subr.mxu0 0.0
  %2176 = vmatpush1.msra.mxu0 0.0
  %2177 = vmatprep.subr.mxu0 0.0
  %2178 = vmatpush1.msra.mxu0 0.0
  %2179 = vmatprep.subr.mxu0 0.0
  %2180 = vmatpush1.msra.mxu0 0.0
  %2181 = vmatprep.subr.mxu0 0.0
  %2182 = vmatpush1.msra.mxu0 0.0
  %2183 = vmatprep.subr.mxu0 0.0
  %2184 = vmatpush1.msra.mxu0 0.0
  %2185 = vmatprep.subr.mxu0 0.0
  %2186 = vmatpush1.msra.mxu0 0.0
  %2187 = vmatprep.subr.mxu0 0.0
  %2188 = vmatpush1.msra.mxu0 0.0
  %2189 = vmatprep.subr.mxu0 0.0
  %2190 = vmatpush1.msra.mxu0 0.0
  %2191 = vmatprep.subr.mxu0 0.0
  %2192 = vmatpush1.msra.mxu0 0.0
  %2193 = vmatprep.subr.mxu0 0.0
  %2194 = vmatpush1.msra.mxu0 0.0
  %2195 = vmatprep.subr.mxu0 0.0
  %2196 = vmatpush1.msra.mxu0 0.0
  %2197 = vmatprep.subr.mxu0 0.0
  %2198 = vmatpush1.msra.mxu0 0.0
  %2199 = vmatprep.subr.mxu0 0.0
  %2200 = vmatpush1.msra.mxu0 0.0
  %2201 = vmatprep.subr.mxu0 0.0
  %2202 = vmatpush1.msra.mxu0 0.0
  %2203 = vmatprep.subr.mxu0 0.0
  %2204 = vmatpush1.msra.mxu0 0.0
  %2205 = vmatprep.subr.mxu0 0.0
  %2206 = vmatpush1.msra.mxu0 0.0
  %2207 = vmatprep.subr.mxu0 0.0
  %2208 = vmatpush1.msra.mxu0 0.0
  %2209 = vmatprep.subr.mxu0 0.0
  %2210 = vmatpush1.msra.mxu0 0.0
  %2211 = vmatprep.subr.mxu0 0.0
  %2212 = vmatpush1.msra.mxu0 0.0
  %2213 = vmatprep.subr.mxu0 0.0
  %2214 = vmatpush1.msra.mxu0 0.0
  %2215 = vmatprep.subr.mxu0 0.0
  %2216 = vmatpush1.msra.mxu0 0.0
  %2217 = vmatprep.subr.mxu0 0.0
  %2218 = vmatpush1.msra.mxu0 0.0
  %2219 = vmatprep.subr.mxu0 0.0
  %2220 = vmatpush1.msra.mxu0 0.0
  %2221 = vmatprep.subr.mxu0 0.0
  %2222 = vmatpush1.msra.mxu0 0.0
  %2223 = vmatprep.subr.mxu0 0.0
  %2224 = vmatpush1.msra.mxu0 0.0
  %2225 = vmatprep.subr.mxu0 0.0
  %2226 = vmatpush1.msra.mxu0 0.0
  %2227 = vmatprep.subr.mxu0 0.0
  %2228 = vmatpush1.msra.mxu0 0.0
  %2229 = vmatprep.subr.mxu0 0.0
  %2230 = vmatpush1.msra.mxu0 0.0
  %2231 = vmatprep.subr.mxu0 0.0
  %2232 = vmatpush1.msra.mxu0 0.0
  %2233 = vmatprep.mubr.f32.mxu0 0.0
  %2234 = vmatmul.mubr.f32.gmra.mrb[0].mxu0 %v2167
  %v2235 = vpop.f32.mrb[0].mxu0
  %v2236 = vadd.f32 0.0, %v2235
  %v2237 = vpop.f32.mrb[0].mxu0
  %2238 = vdwg.mxu0
  %v2240 = vsel %vm412, %v2236, 0
  %2242 = vmatprep.subr.mxu0 0.0
  %2243 = vmatpush1.msra.mxu0 %v411
  %2244 = vmatprep.subr.mxu0 0.0
  %2245 = vmatpush1.msra.mxu0 0.0
  %2246 = vmatprep.subr.mxu0 0.0
  %2247 = vmatpush1.msra.mxu0 0.0
  %2248 = vmatprep.subr.mxu0 0.0
  %2249 = vmatpush1.msra.mxu0 0.0
  %2250 = vmatprep.subr.mxu0 0.0
  %2251 = vmatpush1.msra.mxu0 0.0
  %2252 = vmatprep.subr.mxu0 0.0
  %2253 = vmatpush1.msra.mxu0 0.0
  %2254 = vmatprep.subr.mxu0 0.0
  %2255 = vmatpush1.msra.mxu0 0.0
  %2256 = vmatprep.subr.mxu0 0.0
  %2257 = vmatpush1.msra.mxu0 0.0
  %2258 = vmatprep.subr.mxu0 0.0
  %2259 = vmatpush1.msra.mxu0 0.0
  %2260 = vmatprep.subr.mxu0 0.0
  %2261 = vmatpush1.msra.mxu0 0.0
  %2262 = vmatprep.subr.mxu0 0.0
  %2263 = vmatpush1.msra.mxu0 0.0
  %2264 = vmatprep.subr.mxu0 0.0
  %2265 = vmatpush1.msra.mxu0 0.0
  %2266 = vmatprep.subr.mxu0 0.0
  %2267 = vmatpush1.msra.mxu0 0.0
  %2268 = vmatprep.subr.mxu0 0.0
  %2269 = vmatpush1.msra.mxu0 0.0
  %2270 = vmatprep.subr.mxu0 0.0
  %2271 = vmatpush1.msra.mxu0 0.0
  %2272 = vmatprep.subr.mxu0 0.0
  %2273 = vmatpush1.msra.mxu0 0.0
  %2274 = vmatprep.subr.mxu0 0.0
  %2275 = vmatpush1.msra.mxu0 0.0
  %2276 = vmatprep.subr.mxu0 0.0
  %2277 = vmatpush1.msra.mxu0 0.0
  %2278 = vmatprep.subr.mxu0 0.0
  %2279 = vmatpush1.msra.mxu0 0.0
  %2280 = vmatprep.subr.mxu0 0.0
  %2281 = vmatpush1.msra.mxu0 0.0
  %2282 = vmatprep.subr.mxu0 0.0
  %2283 = vmatpush1.msra.mxu0 0.0
  %2284 = vmatprep.subr.mxu0 0.0
  %2285 = vmatpush1.msra.mxu0 0.0
  %2286 = vmatprep.subr.mxu0 0.0
  %2287 = vmatpush1.msra.mxu0 0.0
  %2288 = vmatprep.subr.mxu0 0.0
  %2289 = vmatpush1.msra.mxu0 0.0
  %2290 = vmatprep.subr.mxu0 0.0
  %2291 = vmatpush1.msra.mxu0 0.0
  %2292 = vmatprep.subr.mxu0 0.0
  %2293 = vmatpush1.msra.mxu0 0.0
  %2294 = vmatprep.subr.mxu0 0.0
  %2295 = vmatpush1.msra.mxu0 0.0
  %2296 = vmatprep.subr.mxu0 0.0
  %2297 = vmatpush1.msra.mxu0 0.0
  %2298 = vmatprep.subr.mxu0 0.0
  %2299 = vmatpush1.msra.mxu0 0.0
  %2300 = vmatprep.subr.mxu0 0.0
  %2301 = vmatpush1.msra.mxu0 0.0
  %2302 = vmatprep.subr.mxu0 0.0
  %2303 = vmatpush1.msra.mxu0 0.0
  %2304 = vmatprep.subr.mxu0 0.0
  %2305 = vmatpush1.msra.mxu0 0.0
  %2306 = vmatprep.mubr.f32.mxu0 0.0
  %2307 = vmatmul.mubr.f32.gmra.mrb[0].mxu0 %v2240
  %v2308 = vpop.f32.mrb[0].mxu0
  %v2309 = vadd.f32 0.0, %v2308
  %v2310 = vpop.f32.mrb[0].mxu0
  %2311 = vdwg.mxu0
  %v2312 = vadd.f32 %v2073, %v2309
  %v2313 = vld [vmem:[%s23] sm:$0x1]
  %v2315 = vlaneseq
  %v2316 = vshrl.u32 %v2315, 7
  %v2317 = vsub.s32 0, %v2316
  %v2318 = vrot.slane %v2313, %v2317
  %v2320 = vadd.f32 %v1362, %v2318
  %v2321 = vadd.f32 %v2312, %v2318
  %v2322 = vadd.f32 %v126, %v2320
  %v2323 = vadd.f32 %v127, %v2321
  %v2324 = vsel %vm146, %v2322, 0.0
  %2325 = vadd.xlane.f32.xlu0 %v2324
  %v2326 = vpop.xlane.xlu0 %2325
  %v2327 = vsel %vm146, %v2323, 0.0
  %2328 = vadd.xlane.f32.xlu0 %v2327
  %v2329 = vpop.xlane.xlu0 %2328
  %v2330 = vrcp.pop 32.0
  %v2331 = vmul.f32 %v2326, %v2330
  %v2332 = vmul.f32 %v2329, %v2330
  %v2333 = vsub.f32 %v2322, %v2331
  %v2334 = vsub.f32 %v2323, %v2332
  %v2335 = vmul.f32 %v2333, %v2333
  %v2336 = vmul.f32 %v2334, %v2334
  %v2337 = vsel %vm146, %v2335, 0.0
  %2338 = vadd.xlane.f32.xlu0 %v2337
  %v2339 = vpop.xlane.xlu0 %2338
  %v2340 = vsel %vm146, %v2336, 0.0
  %2341 = vadd.xlane.f32.xlu0 %v2340
  %v2342 = vpop.xlane.xlu0 %2341
  %v2343 = vmul.f32 %v2339, %v2330
  %v2344 = vmul.f32 %v2342, %v2330
  %v2345 = vadd.f32 %v2343, 1e-05
  %v2346 = vadd.f32 %v2344, 1e-05
  %v2347 = vrsqrt.pop %v2345
  %v2348 = vrsqrt.pop %v2346
  %v2349 = vmul.f32 %v2333, %v2347
  %v2350 = vmul.f32 %v2334, %v2348
  %v2351 = vld [vmem:[%s49] sm:$0x1]
  %v2353 = vlaneseq
  %v2354 = vshrl.u32 %v2353, 7
  %v2355 = vsub.s32 0, %v2354
  %v2356 = vrot.slane %v2351, %v2355
  %v2358 = vmul.f32 %v2349, %v2356
  %v2359 = vmul.f32 %v2350, %v2356
  %v2360 = vld [vmem:[%s51] sm:$0x1]
  %v2362 = vlaneseq
  %v2363 = vshrl.u32 %v2362, 7
  %v2364 = vsub.s32 0, %v2363
  %v2365 = vrot.slane %v2360, %v2364
  %v2367 = vadd.f32 %v2358, %v2365
  %v2368 = vadd.f32 %v2359, %v2365
  %v2369 = vadd.f32 %v2367, %v131
  %v2370 = vadd.f32 %v2368, %v132
  %v2371 = vld [vmem:[%s7] sm:$0xff]
  %v2372 = vld [vmem:[%s7 + $0x8] sm:$0xff]
  %v2373 = vld [vmem:[%s7 + $0x10] sm:$0xf]
  %v2374 = vadd.f32 %v128, %v2371
  %v2375 = vadd.f32 %v129, %v2372
  %v2376 = vadd.f32 %v130, %v2373
  %v2377 = vld [vmem:[%s25] sm:$0xff]
  %v2378 = vld [vmem:[%s25 + $0x8] sm:$0xff]
  %v2379 = vld [vmem:[%s25 + $0x10] sm:$0xff]
  %v2380 = vld [vmem:[%s25 + $0x18] sm:$0xff]
  %v2381 = vld [vmem:[%s31] sm:$0x1]
  %v2383 = vlaneseq
  %v2384 = vshrl.u32 %v2383, 7
  %v2385 = vsub.s32 0, %v2384
  %v2386 = vrot.slane %v2381, %v2385
  %v2389 = vsel %vm146, %v2369, 0
  %v2392 = vsel %vm146, %v2370, 0
  %2394 = vmatprep.subr.mxu0 0.0
  %2395 = vmatpush1.msra.mxu0 %v2377
  %2396 = vmatprep.subr.mxu0 0.0
  %2397 = vmatpush1.msra.mxu0 %v2378
  %2398 = vmatprep.subr.mxu0 0.0
  %2399 = vmatpush1.msra.mxu0 %v2379
  %2400 = vmatprep.subr.mxu0 0.0
  %2401 = vmatpush1.msra.mxu0 %v2380
  %2402 = vmatprep.subr.mxu0 0.0
  %2403 = vmatpush1.msra.mxu0 0.0
  %2404 = vmatprep.subr.mxu0 0.0
  %2405 = vmatpush1.msra.mxu0 0.0
  %2406 = vmatprep.subr.mxu0 0.0
  %2407 = vmatpush1.msra.mxu0 0.0
  %2408 = vmatprep.subr.mxu0 0.0
  %2409 = vmatpush1.msra.mxu0 0.0
  %2410 = vmatprep.subr.mxu0 0.0
  %2411 = vmatpush1.msra.mxu0 0.0
  %2412 = vmatprep.subr.mxu0 0.0
  %2413 = vmatpush1.msra.mxu0 0.0
  %2414 = vmatprep.subr.mxu0 0.0
  %2415 = vmatpush1.msra.mxu0 0.0
  %2416 = vmatprep.subr.mxu0 0.0
  %2417 = vmatpush1.msra.mxu0 0.0
  %2418 = vmatprep.subr.mxu0 0.0
  %2419 = vmatpush1.msra.mxu0 0.0
  %2420 = vmatprep.subr.mxu0 0.0
  %2421 = vmatpush1.msra.mxu0 0.0
  %2422 = vmatprep.subr.mxu0 0.0
  %2423 = vmatpush1.msra.mxu0 0.0
  %2424 = vmatprep.subr.mxu0 0.0
  %2425 = vmatpush1.msra.mxu0 0.0
  %2426 = vmatprep.subr.mxu0 0.0
  %2427 = vmatpush1.msra.mxu0 0.0
  %2428 = vmatprep.subr.mxu0 0.0
  %2429 = vmatpush1.msra.mxu0 0.0
  %2430 = vmatprep.subr.mxu0 0.0
  %2431 = vmatpush1.msra.mxu0 0.0
  %2432 = vmatprep.subr.mxu0 0.0
  %2433 = vmatpush1.msra.mxu0 0.0
  %2434 = vmatprep.subr.mxu0 0.0
  %2435 = vmatpush1.msra.mxu0 0.0
  %2436 = vmatprep.subr.mxu0 0.0
  %2437 = vmatpush1.msra.mxu0 0.0
  %2438 = vmatprep.subr.mxu0 0.0
  %2439 = vmatpush1.msra.mxu0 0.0
  %2440 = vmatprep.subr.mxu0 0.0
  %2441 = vmatpush1.msra.mxu0 0.0
  %2442 = vmatprep.subr.mxu0 0.0
  %2443 = vmatpush1.msra.mxu0 0.0
  %2444 = vmatprep.subr.mxu0 0.0
  %2445 = vmatpush1.msra.mxu0 0.0
  %2446 = vmatprep.subr.mxu0 0.0
  %2447 = vmatpush1.msra.mxu0 0.0
  %2448 = vmatprep.subr.mxu0 0.0
  %2449 = vmatpush1.msra.mxu0 0.0
  %2450 = vmatprep.subr.mxu0 0.0
  %2451 = vmatpush1.msra.mxu0 0.0
  %2452 = vmatprep.subr.mxu0 0.0
  %2453 = vmatpush1.msra.mxu0 0.0
  %2454 = vmatprep.subr.mxu0 0.0
  %2455 = vmatpush1.msra.mxu0 0.0
  %2456 = vmatprep.subr.mxu0 0.0
  %2457 = vmatpush1.msra.mxu0 0.0
  %2458 = vmatprep.mubr.f32.mxu0 0.0
  %2459 = vmatmul.mubr.f32.gmra.mrb[0].mxu0 %v2389
  %v2460 = vpop.f32.mrb[0].mxu0
  %v2461 = vadd.f32 %v2386, %v2460
  %v2462 = vpop.f32.mrb[0].mxu0
  %2463 = vmatprep.mubr.f32.mxu0 0.0
  %2464 = vmatmul.mubr.f32.gmra.mrb[0].mxu0 %v2392
  %v2465 = vpop.f32.mrb[0].mxu0
  %v2466 = vadd.f32 %v2386, %v2465
  %v2467 = vpop.f32.mrb[0].mxu0
  %2468 = vdwg.mxu0
  %v2469 = vmul.f32 %v2461, 0.35355338
  %v2470 = vmul.f32 %v2466, 0.35355338
  %v2471 = vld [vmem:[%s27] sm:$0xff]
  %v2472 = vld [vmem:[%s27 + $0x8] sm:$0xff]
  %v2473 = vld [vmem:[%s27 + $0x10] sm:$0xff]
  %v2474 = vld [vmem:[%s27 + $0x18] sm:$0xff]
  %v2475 = vld [vmem:[%s33] sm:$0x1]
  %v2477 = vlaneseq
  %v2478 = vshrl.u32 %v2477, 7
  %v2479 = vsub.s32 0, %v2478
  %v2480 = vrot.slane %v2475, %v2479
  %v2483 = vsel %vm146, %v2374, 0
  %v2486 = vsel %vm146, %v2375, 0
  %v2489 = vsel %vm146, %v2376, 0
  %2491 = vmatprep.subr.mxu0 0.0
  %2492 = vmatpush1.msra.mxu0 %v2471
  %2493 = vmatprep.subr.mxu0 0.0
  %2494 = vmatpush1.msra.mxu0 %v2472
  %2495 = vmatprep.subr.mxu0 0.0
  %2496 = vmatpush1.msra.mxu0 %v2473
  %2497 = vmatprep.subr.mxu0 0.0
  %2498 = vmatpush1.msra.mxu0 %v2474
  %2499 = vmatprep.subr.mxu0 0.0
  %2500 = vmatpush1.msra.mxu0 0.0
  %2501 = vmatprep.subr.mxu0 0.0
  %2502 = vmatpush1.msra.mxu0 0.0
  %2503 = vmatprep.subr.mxu0 0.0
  %2504 = vmatpush1.msra.mxu0 0.0
  %2505 = vmatprep.subr.mxu0 0.0
  %2506 = vmatpush1.msra.mxu0 0.0
  %2507 = vmatprep.subr.mxu0 0.0
  %2508 = vmatpush1.msra.mxu0 0.0
  %2509 = vmatprep.subr.mxu0 0.0
  %2510 = vmatpush1.msra.mxu0 0.0
  %2511 = vmatprep.subr.mxu0 0.0
  %2512 = vmatpush1.msra.mxu0 0.0
  %2513 = vmatprep.subr.mxu0 0.0
  %2514 = vmatpush1.msra.mxu0 0.0
  %2515 = vmatprep.subr.mxu0 0.0
  %2516 = vmatpush1.msra.mxu0 0.0
  %2517 = vmatprep.subr.mxu0 0.0
  %2518 = vmatpush1.msra.mxu0 0.0
  %2519 = vmatprep.subr.mxu0 0.0
  %2520 = vmatpush1.msra.mxu0 0.0
  %2521 = vmatprep.subr.mxu0 0.0
  %2522 = vmatpush1.msra.mxu0 0.0
  %2523 = vmatprep.subr.mxu0 0.0
  %2524 = vmatpush1.msra.mxu0 0.0
  %2525 = vmatprep.subr.mxu0 0.0
  %2526 = vmatpush1.msra.mxu0 0.0
  %2527 = vmatprep.subr.mxu0 0.0
  %2528 = vmatpush1.msra.mxu0 0.0
  %2529 = vmatprep.subr.mxu0 0.0
  %2530 = vmatpush1.msra.mxu0 0.0
  %2531 = vmatprep.subr.mxu0 0.0
  %2532 = vmatpush1.msra.mxu0 0.0
  %2533 = vmatprep.subr.mxu0 0.0
  %2534 = vmatpush1.msra.mxu0 0.0
  %2535 = vmatprep.subr.mxu0 0.0
  %2536 = vmatpush1.msra.mxu0 0.0
  %2537 = vmatprep.subr.mxu0 0.0
  %2538 = vmatpush1.msra.mxu0 0.0
  %2539 = vmatprep.subr.mxu0 0.0
  %2540 = vmatpush1.msra.mxu0 0.0
  %2541 = vmatprep.subr.mxu0 0.0
  %2542 = vmatpush1.msra.mxu0 0.0
  %2543 = vmatprep.subr.mxu0 0.0
  %2544 = vmatpush1.msra.mxu0 0.0
  %2545 = vmatprep.subr.mxu0 0.0
  %2546 = vmatpush1.msra.mxu0 0.0
  %2547 = vmatprep.subr.mxu0 0.0
  %2548 = vmatpush1.msra.mxu0 0.0
  %2549 = vmatprep.subr.mxu0 0.0
  %2550 = vmatpush1.msra.mxu0 0.0
  %2551 = vmatprep.subr.mxu0 0.0
  %2552 = vmatpush1.msra.mxu0 0.0
  %2553 = vmatprep.subr.mxu0 0.0
  %2554 = vmatpush1.msra.mxu0 0.0
  %2555 = vmatprep.mubr.f32.mxu0 0.0
  %2556 = vmatmul.mubr.f32.gmra.mrb[0].mxu0 %v2483
  %v2557 = vpop.f32.mrb[0].mxu0
  %v2558 = vadd.f32 %v2480, %v2557
  %v2559 = vpop.f32.mrb[0].mxu0
  %2560 = vmatprep.mubr.f32.mxu0 0.0
  %2561 = vmatmul.mubr.f32.gmra.mrb[0].mxu0 %v2486
  %v2562 = vpop.f32.mrb[0].mxu0
  %v2563 = vadd.f32 %v2480, %v2562
  %v2564 = vpop.f32.mrb[0].mxu0
  %2565 = vmatprep.mubr.f32.mxu0 0.0
  %2566 = vmatmul.mubr.f32.gmra.mrb[0].mxu0 %v2489
  %v2567 = vpop.f32.mrb[0].mxu0
  %v2568 = vadd.f32 %v2480, %v2567
  %v2569 = vpop.f32.mrb[0].mxu0
  %2570 = vdwg.mxu0
  %v2571 = vld [vmem:[%s29] sm:$0xff]
  %v2572 = vld [vmem:[%s29 + $0x8] sm:$0xff]
  %v2573 = vld [vmem:[%s29 + $0x10] sm:$0xff]
  %v2574 = vld [vmem:[%s29 + $0x18] sm:$0xff]
  %v2575 = vld [vmem:[%s35] sm:$0x1]
  %v2577 = vlaneseq
  %v2578 = vshrl.u32 %v2577, 7
  %v2579 = vsub.s32 0, %v2578
  %v2580 = vrot.slane %v2575, %v2579
  %v2583 = vsel %vm146, %v128, 0
  %v2586 = vsel %vm146, %v129, 0
  %v2589 = vsel %vm146, %v130, 0
  %2591 = vmatprep.subr.mxu0 0.0
  %2592 = vmatpush1.msra.mxu0 %v2571
  %2593 = vmatprep.subr.mxu0 0.0
  %2594 = vmatpush1.msra.mxu0 %v2572
  %2595 = vmatprep.subr.mxu0 0.0
  %2596 = vmatpush1.msra.mxu0 %v2573
  %2597 = vmatprep.subr.mxu0 0.0
  %2598 = vmatpush1.msra.mxu0 %v2574
  %2599 = vmatprep.subr.mxu0 0.0
  %2600 = vmatpush1.msra.mxu0 0.0
  %2601 = vmatprep.subr.mxu0 0.0
  %2602 = vmatpush1.msra.mxu0 0.0
  %2603 = vmatprep.subr.mxu0 0.0
  %2604 = vmatpush1.msra.mxu0 0.0
  %2605 = vmatprep.subr.mxu0 0.0
  %2606 = vmatpush1.msra.mxu0 0.0
  %2607 = vmatprep.subr.mxu0 0.0
  %2608 = vmatpush1.msra.mxu0 0.0
  %2609 = vmatprep.subr.mxu0 0.0
  %2610 = vmatpush1.msra.mxu0 0.0
  %2611 = vmatprep.subr.mxu0 0.0
  %2612 = vmatpush1.msra.mxu0 0.0
  %2613 = vmatprep.subr.mxu0 0.0
  %2614 = vmatpush1.msra.mxu0 0.0
  %2615 = vmatprep.subr.mxu0 0.0
  %2616 = vmatpush1.msra.mxu0 0.0
  %2617 = vmatprep.subr.mxu0 0.0
  %2618 = vmatpush1.msra.mxu0 0.0
  %2619 = vmatprep.subr.mxu0 0.0
  %2620 = vmatpush1.msra.mxu0 0.0
  %2621 = vmatprep.subr.mxu0 0.0
  %2622 = vmatpush1.msra.mxu0 0.0
  %2623 = vmatprep.subr.mxu0 0.0
  %2624 = vmatpush1.msra.mxu0 0.0
  %2625 = vmatprep.subr.mxu0 0.0
  %2626 = vmatpush1.msra.mxu0 0.0
  %2627 = vmatprep.subr.mxu0 0.0
  %2628 = vmatpush1.msra.mxu0 0.0
  %2629 = vmatprep.subr.mxu0 0.0
  %2630 = vmatpush1.msra.mxu0 0.0
  %2631 = vmatprep.subr.mxu0 0.0
  %2632 = vmatpush1.msra.mxu0 0.0
  %2633 = vmatprep.subr.mxu0 0.0
  %2634 = vmatpush1.msra.mxu0 0.0
  %2635 = vmatprep.subr.mxu0 0.0
  %2636 = vmatpush1.msra.mxu0 0.0
  %2637 = vmatprep.subr.mxu0 0.0
  %2638 = vmatpush1.msra.mxu0 0.0
  %2639 = vmatprep.subr.mxu0 0.0
  %2640 = vmatpush1.msra.mxu0 0.0
  %2641 = vmatprep.subr.mxu0 0.0
  %2642 = vmatpush1.msra.mxu0 0.0
  %2643 = vmatprep.subr.mxu0 0.0
  %2644 = vmatpush1.msra.mxu0 0.0
  %2645 = vmatprep.subr.mxu0 0.0
  %2646 = vmatpush1.msra.mxu0 0.0
  %2647 = vmatprep.subr.mxu0 0.0
  %2648 = vmatpush1.msra.mxu0 0.0
  %2649 = vmatprep.subr.mxu0 0.0
  %2650 = vmatpush1.msra.mxu0 0.0
  %2651 = vmatprep.subr.mxu0 0.0
  %2652 = vmatpush1.msra.mxu0 0.0
  %2653 = vmatprep.subr.mxu0 0.0
  %2654 = vmatpush1.msra.mxu0 0.0
  %2655 = vmatprep.mubr.f32.mxu0 0.0
  %2656 = vmatmul.mubr.f32.gmra.mrb[0].mxu0 %v2583
  %v2657 = vpop.f32.mrb[0].mxu0
  %v2658 = vadd.f32 %v2580, %v2657
  %v2659 = vpop.f32.mrb[0].mxu0
  %2660 = vmatprep.mubr.f32.mxu0 0.0
  %2661 = vmatmul.mubr.f32.gmra.mrb[0].mxu0 %v2586
  %v2662 = vpop.f32.mrb[0].mxu0
  %v2663 = vadd.f32 %v2580, %v2662
  %v2664 = vpop.f32.mrb[0].mxu0
  %2665 = vmatprep.mubr.f32.mxu0 0.0
  %2666 = vmatmul.mubr.f32.gmra.mrb[0].mxu0 %v2589
  %v2667 = vpop.f32.mrb[0].mxu0
  %v2668 = vadd.f32 %v2580, %v2667
  %v2669 = vpop.f32.mrb[0].mxu0
  %2670 = vdwg.mxu0
  %v2671 = vld [vmem:[%s37] sm:$0xff]
  %v2672 = vld [vmem:[%s37 + $0x8] sm:$0xff]
  %v2673 = vld [vmem:[%s37 + $0x10] sm:$0xff]
  %v2674 = vld [vmem:[%s37 + $0x18] sm:$0xff]
  %v2676 = vsel %vm412, %v2469, 0
  %v2679 = vsel %vm412, %v2558, 0
  %v2682 = vsel %vm412, %v2563, 0
  %2684 = vmatprep.subr.mxu0 0.0
  %2685 = vmatpush1.xpose.msra.mxu0 %v2679
  %2686 = vmatprep.subr.mxu0 0.0
  %2687 = vmatpush1.xpose.msra.mxu0 %v2682
  %2688 = vmatprep.subr.mxu0 0.0
  %2689 = vmatpush1.xpose.msra.mxu0 0.0
  %2690 = vmatprep.subr.mxu0 0.0
  %2691 = vmatpush1.xpose.msra.mxu0 0.0
  %2692 = vmatprep.subr.mxu0 0.0
  %2693 = vmatpush1.xpose.msra.mxu0 0.0
  %2694 = vmatprep.subr.mxu0 0.0
  %2695 = vmatpush1.xpose.msra.mxu0 0.0
  %2696 = vmatprep.subr.mxu0 0.0
  %2697 = vmatpush1.xpose.msra.mxu0 0.0
  %2698 = vmatprep.subr.mxu0 0.0
  %2699 = vmatpush1.xpose.msra.mxu0 0.0
  %2700 = vmatprep.subr.mxu0 0.0
  %2701 = vmatpush1.xpose.msra.mxu0 0.0
  %2702 = vmatprep.subr.mxu0 0.0
  %2703 = vmatpush1.xpose.msra.mxu0 0.0
  %2704 = vmatprep.subr.mxu0 0.0
  %2705 = vmatpush1.xpose.msra.mxu0 0.0
  %2706 = vmatprep.subr.mxu0 0.0
  %2707 = vmatpush1.xpose.msra.mxu0 0.0
  %2708 = vmatprep.subr.mxu0 0.0
  %2709 = vmatpush1.xpose.msra.mxu0 0.0
  %2710 = vmatprep.subr.mxu0 0.0
  %2711 = vmatpush1.xpose.msra.mxu0 0.0
  %2712 = vmatprep.subr.mxu0 0.0
  %2713 = vmatpush1.xpose.msra.mxu0 0.0
  %2714 = vmatprep.subr.mxu0 0.0
  %2715 = vmatpush1.xpose.msra.mxu0 0.0
  %2716 = vmatprep.subr.mxu0 0.0
  %2717 = vmatpush1.xpose.msra.mxu0 0.0
  %2718 = vmatprep.subr.mxu0 0.0
  %2719 = vmatpush1.xpose.msra.mxu0 0.0
  %2720 = vmatprep.subr.mxu0 0.0
  %2721 = vmatpush1.xpose.msra.mxu0 0.0
  %2722 = vmatprep.subr.mxu0 0.0
  %2723 = vmatpush1.xpose.msra.mxu0 0.0
  %2724 = vmatprep.subr.mxu0 0.0
  %2725 = vmatpush1.xpose.msra.mxu0 0.0
  %2726 = vmatprep.subr.mxu0 0.0
  %2727 = vmatpush1.xpose.msra.mxu0 0.0
  %2728 = vmatprep.subr.mxu0 0.0
  %2729 = vmatpush1.xpose.msra.mxu0 0.0
  %2730 = vmatprep.subr.mxu0 0.0
  %2731 = vmatpush1.xpose.msra.mxu0 0.0
  %2732 = vmatprep.subr.mxu0 0.0
  %2733 = vmatpush1.xpose.msra.mxu0 0.0
  %2734 = vmatprep.subr.mxu0 0.0
  %2735 = vmatpush1.xpose.msra.mxu0 0.0
  %2736 = vmatprep.subr.mxu0 0.0
  %2737 = vmatpush1.xpose.msra.mxu0 0.0
  %2738 = vmatprep.subr.mxu0 0.0
  %2739 = vmatpush1.xpose.msra.mxu0 0.0
  %2740 = vmatprep.subr.mxu0 0.0
  %2741 = vmatpush1.xpose.msra.mxu0 0.0
  %2742 = vmatprep.subr.mxu0 0.0
  %2743 = vmatpush1.xpose.msra.mxu0 0.0
  %2744 = vmatprep.subr.mxu0 0.0
  %2745 = vmatpush1.xpose.msra.mxu0 0.0
  %2746 = vmatprep.subr.mxu0 0.0
  %2747 = vmatpush1.xpose.msra.mxu0 0.0
  %2748 = vmatprep.mubr.f32.mxu0 0.0
  %2749 = vmatmul.mubr.f32.gmra.mrb[0].mxu0 %v2676
  %v2750 = vpop.f32.mrb[0].mxu0
  %v2751 = vadd.f32 0.0, %v2750
  %v2752 = vpop.f32.mrb[0].mxu0
  %2753 = vdwg.mxu0
  %vm2754 = vcmask 80896
  %v2755 = vsel %vm2754, %v2751, -inf
  %2756 = vmax.xlane.f32.xlu0 %v2755
  %v2757 = vpop.xlane.xlu0 %2756
  %v2758 = vsub.f32 %v2751, %v2757
  %v2759 = vmul.f32 %v2758, 1.442695
  %v2760 = vpow.pop %v2759
  %v2761 = vsel %vm2754, %v2760, 0.0
  %2762 = vadd.xlane.f32.xlu0 %v2761
  %v2763 = vpop.xlane.xlu0 %2762
  %v2764 = vrcp.pop %v2763
  %v2765 = vmul.f32 %v2760, %v2764
  %v2767 = vsel %vm2754, %v2765, 0
  %vm2769 = vcmask 1041408
  %v2771 = vsel %vm2769, %v2663, 0
  %2773 = vmatprep.subr.mxu0 0.0
  %2774 = vmatpush1.msra.mxu0 %v2658
  %2775 = vmatprep.subr.mxu0 0.0
  %2776 = vmatpush1.msra.mxu0 %v2771
  %2777 = vmatprep.subr.mxu0 0.0
  %2778 = vmatpush1.msra.mxu0 0.0
  %2779 = vmatprep.subr.mxu0 0.0
  %2780 = vmatpush1.msra.mxu0 0.0
  %2781 = vmatprep.subr.mxu0 0.0
  %2782 = vmatpush1.msra.mxu0 0.0
  %2783 = vmatprep.subr.mxu0 0.0
  %2784 = vmatpush1.msra.mxu0 0.0
  %2785 = vmatprep.subr.mxu0 0.0
  %2786 = vmatpush1.msra.mxu0 0.0
  %2787 = vmatprep.subr.mxu0 0.0
  %2788 = vmatpush1.msra.mxu0 0.0
  %2789 = vmatprep.subr.mxu0 0.0
  %2790 = vmatpush1.msra.mxu0 0.0
  %2791 = vmatprep.subr.mxu0 0.0
  %2792 = vmatpush1.msra.mxu0 0.0
  %2793 = vmatprep.subr.mxu0 0.0
  %2794 = vmatpush1.msra.mxu0 0.0
  %2795 = vmatprep.subr.mxu0 0.0
  %2796 = vmatpush1.msra.mxu0 0.0
  %2797 = vmatprep.subr.mxu0 0.0
  %2798 = vmatpush1.msra.mxu0 0.0
  %2799 = vmatprep.subr.mxu0 0.0
  %2800 = vmatpush1.msra.mxu0 0.0
  %2801 = vmatprep.subr.mxu0 0.0
  %2802 = vmatpush1.msra.mxu0 0.0
  %2803 = vmatprep.subr.mxu0 0.0
  %2804 = vmatpush1.msra.mxu0 0.0
  %2805 = vmatprep.subr.mxu0 0.0
  %2806 = vmatpush1.msra.mxu0 0.0
  %2807 = vmatprep.subr.mxu0 0.0
  %2808 = vmatpush1.msra.mxu0 0.0
  %2809 = vmatprep.subr.mxu0 0.0
  %2810 = vmatpush1.msra.mxu0 0.0
  %2811 = vmatprep.subr.mxu0 0.0
  %2812 = vmatpush1.msra.mxu0 0.0
  %2813 = vmatprep.subr.mxu0 0.0
  %2814 = vmatpush1.msra.mxu0 0.0
  %2815 = vmatprep.subr.mxu0 0.0
  %2816 = vmatpush1.msra.mxu0 0.0
  %2817 = vmatprep.subr.mxu0 0.0
  %2818 = vmatpush1.msra.mxu0 0.0
  %2819 = vmatprep.subr.mxu0 0.0
  %2820 = vmatpush1.msra.mxu0 0.0
  %2821 = vmatprep.subr.mxu0 0.0
  %2822 = vmatpush1.msra.mxu0 0.0
  %2823 = vmatprep.subr.mxu0 0.0
  %2824 = vmatpush1.msra.mxu0 0.0
  %2825 = vmatprep.subr.mxu0 0.0
  %2826 = vmatpush1.msra.mxu0 0.0
  %2827 = vmatprep.subr.mxu0 0.0
  %2828 = vmatpush1.msra.mxu0 0.0
  %2829 = vmatprep.subr.mxu0 0.0
  %2830 = vmatpush1.msra.mxu0 0.0
  %2831 = vmatprep.subr.mxu0 0.0
  %2832 = vmatpush1.msra.mxu0 0.0
  %2833 = vmatprep.subr.mxu0 0.0
  %2834 = vmatpush1.msra.mxu0 0.0
  %2835 = vmatprep.subr.mxu0 0.0
  %2836 = vmatpush1.msra.mxu0 0.0
  %2837 = vmatprep.mubr.f32.mxu0 0.0
  %2838 = vmatmul.mubr.f32.gmra.mrb[0].mxu0 %v2767
  %v2839 = vpop.f32.mrb[0].mxu0
  %v2840 = vadd.f32 0.0, %v2839
  %v2841 = vpop.f32.mrb[0].mxu0
  %2842 = vdwg.mxu0
  %2843 = vrot.lane.b32.xlu0 %v2469, 120
  %v2844 = vpop.permute.xlu0 %2843
  %2845 = vrot.lane.b32.xlu0 %v2558, 120
  %v2846 = vpop.permute.xlu0 %2845
  %2847 = vrot.lane.b32.xlu0 %v2563, 120
  %v2848 = vpop.permute.xlu0 %2847
  %v2849 = vsel %vm412, %v2844, 0
  %v2851 = vsel %vm412, %v2846, 0
  %v2853 = vsel %vm412, %v2848, 0
  %2855 = vmatprep.subr.mxu0 0.0
  %2856 = vmatpush1.xpose.msra.mxu0 %v2851
  %2857 = vmatprep.subr.mxu0 0.0
  %2858 = vmatpush1.xpose.msra.mxu0 %v2853
  %2859 = vmatprep.subr.mxu0 0.0
  %2860 = vmatpush1.xpose.msra.mxu0 0.0
  %2861 = vmatprep.subr.mxu0 0.0
  %2862 = vmatpush1.xpose.msra.mxu0 0.0
  %2863 = vmatprep.subr.mxu0 0.0
  %2864 = vmatpush1.xpose.msra.mxu0 0.0
  %2865 = vmatprep.subr.mxu0 0.0
  %2866 = vmatpush1.xpose.msra.mxu0 0.0
  %2867 = vmatprep.subr.mxu0 0.0
  %2868 = vmatpush1.xpose.msra.mxu0 0.0
  %2869 = vmatprep.subr.mxu0 0.0
  %2870 = vmatpush1.xpose.msra.mxu0 0.0
  %2871 = vmatprep.subr.mxu0 0.0
  %2872 = vmatpush1.xpose.msra.mxu0 0.0
  %2873 = vmatprep.subr.mxu0 0.0
  %2874 = vmatpush1.xpose.msra.mxu0 0.0
  %2875 = vmatprep.subr.mxu0 0.0
  %2876 = vmatpush1.xpose.msra.mxu0 0.0
  %2877 = vmatprep.subr.mxu0 0.0
  %2878 = vmatpush1.xpose.msra.mxu0 0.0
  %2879 = vmatprep.subr.mxu0 0.0
  %2880 = vmatpush1.xpose.msra.mxu0 0.0
  %2881 = vmatprep.subr.mxu0 0.0
  %2882 = vmatpush1.xpose.msra.mxu0 0.0
  %2883 = vmatprep.subr.mxu0 0.0
  %2884 = vmatpush1.xpose.msra.mxu0 0.0
  %2885 = vmatprep.subr.mxu0 0.0
  %2886 = vmatpush1.xpose.msra.mxu0 0.0
  %2887 = vmatprep.subr.mxu0 0.0
  %2888 = vmatpush1.xpose.msra.mxu0 0.0
  %2889 = vmatprep.subr.mxu0 0.0
  %2890 = vmatpush1.xpose.msra.mxu0 0.0
  %2891 = vmatprep.subr.mxu0 0.0
  %2892 = vmatpush1.xpose.msra.mxu0 0.0
  %2893 = vmatprep.subr.mxu0 0.0
  %2894 = vmatpush1.xpose.msra.mxu0 0.0
  %2895 = vmatprep.subr.mxu0 0.0
  %2896 = vmatpush1.xpose.msra.mxu0 0.0
  %2897 = vmatprep.subr.mxu0 0.0
  %2898 = vmatpush1.xpose.msra.mxu0 0.0
  %2899 = vmatprep.subr.mxu0 0.0
  %2900 = vmatpush1.xpose.msra.mxu0 0.0
  %2901 = vmatprep.subr.mxu0 0.0
  %2902 = vmatpush1.xpose.msra.mxu0 0.0
  %2903 = vmatprep.subr.mxu0 0.0
  %2904 = vmatpush1.xpose.msra.mxu0 0.0
  %2905 = vmatprep.subr.mxu0 0.0
  %2906 = vmatpush1.xpose.msra.mxu0 0.0
  %2907 = vmatprep.subr.mxu0 0.0
  %2908 = vmatpush1.xpose.msra.mxu0 0.0
  %2909 = vmatprep.subr.mxu0 0.0
  %2910 = vmatpush1.xpose.msra.mxu0 0.0
  %2911 = vmatprep.subr.mxu0 0.0
  %2912 = vmatpush1.xpose.msra.mxu0 0.0
  %2913 = vmatprep.subr.mxu0 0.0
  %2914 = vmatpush1.xpose.msra.mxu0 0.0
  %2915 = vmatprep.subr.mxu0 0.0
  %2916 = vmatpush1.xpose.msra.mxu0 0.0
  %2917 = vmatprep.subr.mxu0 0.0
  %2918 = vmatpush1.xpose.msra.mxu0 0.0
  %2919 = vmatprep.mubr.f32.mxu0 0.0
  %2920 = vmatmul.mubr.f32.gmra.mrb[0].mxu0 %v2849
  %v2921 = vpop.f32.mrb[0].mxu0
  %v2922 = vadd.f32 0.0, %v2921
  %v2923 = vpop.f32.mrb[0].mxu0
  %2924 = vdwg.mxu0
  %v2925 = vsel %vm2754, %v2922, -inf
  %2926 = vmax.xlane.f32.xlu0 %v2925
  %v2927 = vpop.xlane.xlu0 %2926
  %v2928 = vsub.f32 %v2922, %v2927
  %v2929 = vmul.f32 %v2928, 1.442695
  %v2930 = vpow.pop %v2929
  %v2931 = vsel %vm2754, %v2930, 0.0
  %2932 = vadd.xlane.f32.xlu0 %v2931
  %v2933 = vpop.xlane.xlu0 %2932
  %v2934 = vrcp.pop %v2933
  %v2935 = vmul.f32 %v2930, %v2934
  %2937 = vrot.lane.b32.xlu0 %v2658, 120
  %v2938 = vpop.permute.xlu0 %2937
  %2939 = vrot.lane.b32.xlu0 %v2663, 120
  %v2940 = vpop.permute.xlu0 %2939
  %v2943 = vsel %vm2754, %v2935, 0
  %v2945 = vsel %vm2769, %v2940, 0
  %2947 = vmatprep.subr.mxu0 0.0
  %2948 = vmatpush1.msra.mxu0 %v2938
  %2949 = vmatprep.subr.mxu0 0.0
  %2950 = vmatpush1.msra.mxu0 %v2945
  %2951 = vmatprep.subr.mxu0 0.0
  %2952 = vmatpush1.msra.mxu0 0.0
  %2953 = vmatprep.subr.mxu0 0.0
  %2954 = vmatpush1.msra.mxu0 0.0
  %2955 = vmatprep.subr.mxu0 0.0
  %2956 = vmatpush1.msra.mxu0 0.0
  %2957 = vmatprep.subr.mxu0 0.0
  %2958 = vmatpush1.msra.mxu0 0.0
  %2959 = vmatprep.subr.mxu0 0.0
  %2960 = vmatpush1.msra.mxu0 0.0
  %2961 = vmatprep.subr.mxu0 0.0
  %2962 = vmatpush1.msra.mxu0 0.0
  %2963 = vmatprep.subr.mxu0 0.0
  %2964 = vmatpush1.msra.mxu0 0.0
  %2965 = vmatprep.subr.mxu0 0.0
  %2966 = vmatpush1.msra.mxu0 0.0
  %2967 = vmatprep.subr.mxu0 0.0
  %2968 = vmatpush1.msra.mxu0 0.0
  %2969 = vmatprep.subr.mxu0 0.0
  %2970 = vmatpush1.msra.mxu0 0.0
  %2971 = vmatprep.subr.mxu0 0.0
  %2972 = vmatpush1.msra.mxu0 0.0
  %2973 = vmatprep.subr.mxu0 0.0
  %2974 = vmatpush1.msra.mxu0 0.0
  %2975 = vmatprep.subr.mxu0 0.0
  %2976 = vmatpush1.msra.mxu0 0.0
  %2977 = vmatprep.subr.mxu0 0.0
  %2978 = vmatpush1.msra.mxu0 0.0
  %2979 = vmatprep.subr.mxu0 0.0
  %2980 = vmatpush1.msra.mxu0 0.0
  %2981 = vmatprep.subr.mxu0 0.0
  %2982 = vmatpush1.msra.mxu0 0.0
  %2983 = vmatprep.subr.mxu0 0.0
  %2984 = vmatpush1.msra.mxu0 0.0
  %2985 = vmatprep.subr.mxu0 0.0
  %2986 = vmatpush1.msra.mxu0 0.0
  %2987 = vmatprep.subr.mxu0 0.0
  %2988 = vmatpush1.msra.mxu0 0.0
  %2989 = vmatprep.subr.mxu0 0.0
  %2990 = vmatpush1.msra.mxu0 0.0
  %2991 = vmatprep.subr.mxu0 0.0
  %2992 = vmatpush1.msra.mxu0 0.0
  %2993 = vmatprep.subr.mxu0 0.0
  %2994 = vmatpush1.msra.mxu0 0.0
  %2995 = vmatprep.subr.mxu0 0.0
  %2996 = vmatpush1.msra.mxu0 0.0
  %2997 = vmatprep.subr.mxu0 0.0
  %2998 = vmatpush1.msra.mxu0 0.0
  %2999 = vmatprep.subr.mxu0 0.0
  %3000 = vmatpush1.msra.mxu0 0.0
  %3001 = vmatprep.subr.mxu0 0.0
  %3002 = vmatpush1.msra.mxu0 0.0
  %3003 = vmatprep.subr.mxu0 0.0
  %3004 = vmatpush1.msra.mxu0 0.0
  %3005 = vmatprep.subr.mxu0 0.0
  %3006 = vmatpush1.msra.mxu0 0.0
  %3007 = vmatprep.subr.mxu0 0.0
  %3008 = vmatpush1.msra.mxu0 0.0
  %3009 = vmatprep.subr.mxu0 0.0
  %3010 = vmatpush1.msra.mxu0 0.0
  %3011 = vmatprep.mubr.f32.mxu0 0.0
  %3012 = vmatmul.mubr.f32.gmra.mrb[0].mxu0 %v2943
  %v3013 = vpop.f32.mrb[0].mxu0
  %v3014 = vadd.f32 0.0, %v3013
  %v3015 = vpop.f32.mrb[0].mxu0
  %3016 = vdwg.mxu0
  %v3018 = vsel %vm412, %v3014, 0
  %3020 = vmatprep.subr.mxu0 0.0
  %3021 = vmatpush1.msra.mxu0 %v2672
  %3022 = vmatprep.subr.mxu0 0.0
  %3023 = vmatpush1.msra.mxu0 0.0
  %3024 = vmatprep.subr.mxu0 0.0
  %3025 = vmatpush1.msra.mxu0 0.0
  %3026 = vmatprep.subr.mxu0 0.0
  %3027 = vmatpush1.msra.mxu0 0.0
  %3028 = vmatprep.subr.mxu0 0.0
  %3029 = vmatpush1.msra.mxu0 0.0
  %3030 = vmatprep.subr.mxu0 0.0
  %3031 = vmatpush1.msra.mxu0 0.0
  %3032 = vmatprep.subr.mxu0 0.0
  %3033 = vmatpush1.msra.mxu0 0.0
  %3034 = vmatprep.subr.mxu0 0.0
  %3035 = vmatpush1.msra.mxu0 0.0
  %3036 = vmatprep.subr.mxu0 0.0
  %3037 = vmatpush1.msra.mxu0 0.0
  %3038 = vmatprep.subr.mxu0 0.0
  %3039 = vmatpush1.msra.mxu0 0.0
  %3040 = vmatprep.subr.mxu0 0.0
  %3041 = vmatpush1.msra.mxu0 0.0
  %3042 = vmatprep.subr.mxu0 0.0
  %3043 = vmatpush1.msra.mxu0 0.0
  %3044 = vmatprep.subr.mxu0 0.0
  %3045 = vmatpush1.msra.mxu0 0.0
  %3046 = vmatprep.subr.mxu0 0.0
  %3047 = vmatpush1.msra.mxu0 0.0
  %3048 = vmatprep.subr.mxu0 0.0
  %3049 = vmatpush1.msra.mxu0 0.0
  %3050 = vmatprep.subr.mxu0 0.0
  %3051 = vmatpush1.msra.mxu0 0.0
  %3052 = vmatprep.subr.mxu0 0.0
  %3053 = vmatpush1.msra.mxu0 0.0
  %3054 = vmatprep.subr.mxu0 0.0
  %3055 = vmatpush1.msra.mxu0 0.0
  %3056 = vmatprep.subr.mxu0 0.0
  %3057 = vmatpush1.msra.mxu0 0.0
  %3058 = vmatprep.subr.mxu0 0.0
  %3059 = vmatpush1.msra.mxu0 0.0
  %3060 = vmatprep.subr.mxu0 0.0
  %3061 = vmatpush1.msra.mxu0 0.0
  %3062 = vmatprep.subr.mxu0 0.0
  %3063 = vmatpush1.msra.mxu0 0.0
  %3064 = vmatprep.subr.mxu0 0.0
  %3065 = vmatpush1.msra.mxu0 0.0
  %3066 = vmatprep.subr.mxu0 0.0
  %3067 = vmatpush1.msra.mxu0 0.0
  %3068 = vmatprep.subr.mxu0 0.0
  %3069 = vmatpush1.msra.mxu0 0.0
  %3070 = vmatprep.subr.mxu0 0.0
  %3071 = vmatpush1.msra.mxu0 0.0
  %3072 = vmatprep.subr.mxu0 0.0
  %3073 = vmatpush1.msra.mxu0 0.0
  %3074 = vmatprep.subr.mxu0 0.0
  %3075 = vmatpush1.msra.mxu0 0.0
  %3076 = vmatprep.subr.mxu0 0.0
  %3077 = vmatpush1.msra.mxu0 0.0
  %3078 = vmatprep.subr.mxu0 0.0
  %3079 = vmatpush1.msra.mxu0 0.0
  %3080 = vmatprep.subr.mxu0 0.0
  %3081 = vmatpush1.msra.mxu0 0.0
  %3082 = vmatprep.subr.mxu0 0.0
  %3083 = vmatpush1.msra.mxu0 0.0
  %3084 = vmatprep.mubr.f32.mxu0 0.0
  %3085 = vmatmul.mubr.f32.gmra.mrb[0].mxu0 %v3018
  %v3086 = vpop.f32.mrb[0].mxu0
  %v3087 = vadd.f32 0.0, %v3086
  %v3088 = vpop.f32.mrb[0].mxu0
  %3089 = vdwg.mxu0
  %v3091 = vsel %vm412, %v2840, 0
  %3093 = vmatprep.subr.mxu0 0.0
  %3094 = vmatpush1.msra.mxu0 %v2671
  %3095 = vmatprep.subr.mxu0 0.0
  %3096 = vmatpush1.msra.mxu0 0.0
  %3097 = vmatprep.subr.mxu0 0.0
  %3098 = vmatpush1.msra.mxu0 0.0
  %3099 = vmatprep.subr.mxu0 0.0
  %3100 = vmatpush1.msra.mxu0 0.0
  %3101 = vmatprep.subr.mxu0 0.0
  %3102 = vmatpush1.msra.mxu0 0.0
  %3103 = vmatprep.subr.mxu0 0.0
  %3104 = vmatpush1.msra.mxu0 0.0
  %3105 = vmatprep.subr.mxu0 0.0
  %3106 = vmatpush1.msra.mxu0 0.0
  %3107 = vmatprep.subr.mxu0 0.0
  %3108 = vmatpush1.msra.mxu0 0.0
  %3109 = vmatprep.subr.mxu0 0.0
  %3110 = vmatpush1.msra.mxu0 0.0
  %3111 = vmatprep.subr.mxu0 0.0
  %3112 = vmatpush1.msra.mxu0 0.0
  %3113 = vmatprep.subr.mxu0 0.0
  %3114 = vmatpush1.msra.mxu0 0.0
  %3115 = vmatprep.subr.mxu0 0.0
  %3116 = vmatpush1.msra.mxu0 0.0
  %3117 = vmatprep.subr.mxu0 0.0
  %3118 = vmatpush1.msra.mxu0 0.0
  %3119 = vmatprep.subr.mxu0 0.0
  %3120 = vmatpush1.msra.mxu0 0.0
  %3121 = vmatprep.subr.mxu0 0.0
  %3122 = vmatpush1.msra.mxu0 0.0
  %3123 = vmatprep.subr.mxu0 0.0
  %3124 = vmatpush1.msra.mxu0 0.0
  %3125 = vmatprep.subr.mxu0 0.0
  %3126 = vmatpush1.msra.mxu0 0.0
  %3127 = vmatprep.subr.mxu0 0.0
  %3128 = vmatpush1.msra.mxu0 0.0
  %3129 = vmatprep.subr.mxu0 0.0
  %3130 = vmatpush1.msra.mxu0 0.0
  %3131 = vmatprep.subr.mxu0 0.0
  %3132 = vmatpush1.msra.mxu0 0.0
  %3133 = vmatprep.subr.mxu0 0.0
  %3134 = vmatpush1.msra.mxu0 0.0
  %3135 = vmatprep.subr.mxu0 0.0
  %3136 = vmatpush1.msra.mxu0 0.0
  %3137 = vmatprep.subr.mxu0 0.0
  %3138 = vmatpush1.msra.mxu0 0.0
  %3139 = vmatprep.subr.mxu0 0.0
  %3140 = vmatpush1.msra.mxu0 0.0
  %3141 = vmatprep.subr.mxu0 0.0
  %3142 = vmatpush1.msra.mxu0 0.0
  %3143 = vmatprep.subr.mxu0 0.0
  %3144 = vmatpush1.msra.mxu0 0.0
  %3145 = vmatprep.subr.mxu0 0.0
  %3146 = vmatpush1.msra.mxu0 0.0
  %3147 = vmatprep.subr.mxu0 0.0
  %3148 = vmatpush1.msra.mxu0 0.0
  %3149 = vmatprep.subr.mxu0 0.0
  %3150 = vmatpush1.msra.mxu0 0.0
  %3151 = vmatprep.subr.mxu0 0.0
  %3152 = vmatpush1.msra.mxu0 0.0
  %3153 = vmatprep.subr.mxu0 0.0
  %3154 = vmatpush1.msra.mxu0 0.0
  %3155 = vmatprep.subr.mxu0 0.0
  %3156 = vmatpush1.msra.mxu0 0.0
  %3157 = vmatprep.mubr.f32.mxu0 0.0
  %3158 = vmatmul.mubr.f32.gmra.mrb[0].mxu0 %v3091
  %v3159 = vpop.f32.mrb[0].mxu0
  %v3160 = vadd.f32 %v3087, %v3159
  %v3161 = vpop.f32.mrb[0].mxu0
  %3162 = vdwg.mxu0
  %3163 = vrot.lane.b32.xlu0 %v2469, 112
  %v3164 = vpop.permute.xlu0 %3163
  %3165 = vrot.lane.b32.xlu0 %v2558, 112
  %v3166 = vpop.permute.xlu0 %3165
  %3167 = vrot.lane.b32.xlu0 %v2563, 112
  %v3168 = vpop.permute.xlu0 %3167
  %v3169 = vsel %vm412, %v3164, 0
  %v3171 = vsel %vm412, %v3166, 0
  %v3173 = vsel %vm412, %v3168, 0
  %3175 = vmatprep.subr.mxu0 0.0
  %3176 = vmatpush1.xpose.msra.mxu0 %v3171
  %3177 = vmatprep.subr.mxu0 0.0
  %3178 = vmatpush1.xpose.msra.mxu0 %v3173
  %3179 = vmatprep.subr.mxu0 0.0
  %3180 = vmatpush1.xpose.msra.mxu0 0.0
  %3181 = vmatprep.subr.mxu0 0.0
  %3182 = vmatpush1.xpose.msra.mxu0 0.0
  %3183 = vmatprep.subr.mxu0 0.0
  %3184 = vmatpush1.xpose.msra.mxu0 0.0
  %3185 = vmatprep.subr.mxu0 0.0
  %3186 = vmatpush1.xpose.msra.mxu0 0.0
  %3187 = vmatprep.subr.mxu0 0.0
  %3188 = vmatpush1.xpose.msra.mxu0 0.0
  %3189 = vmatprep.subr.mxu0 0.0
  %3190 = vmatpush1.xpose.msra.mxu0 0.0
  %3191 = vmatprep.subr.mxu0 0.0
  %3192 = vmatpush1.xpose.msra.mxu0 0.0
  %3193 = vmatprep.subr.mxu0 0.0
  %3194 = vmatpush1.xpose.msra.mxu0 0.0
  %3195 = vmatprep.subr.mxu0 0.0
  %3196 = vmatpush1.xpose.msra.mxu0 0.0
  %3197 = vmatprep.subr.mxu0 0.0
  %3198 = vmatpush1.xpose.msra.mxu0 0.0
  %3199 = vmatprep.subr.mxu0 0.0
  %3200 = vmatpush1.xpose.msra.mxu0 0.0
  %3201 = vmatprep.subr.mxu0 0.0
  %3202 = vmatpush1.xpose.msra.mxu0 0.0
  %3203 = vmatprep.subr.mxu0 0.0
  %3204 = vmatpush1.xpose.msra.mxu0 0.0
  %3205 = vmatprep.subr.mxu0 0.0
  %3206 = vmatpush1.xpose.msra.mxu0 0.0
  %3207 = vmatprep.subr.mxu0 0.0
  %3208 = vmatpush1.xpose.msra.mxu0 0.0
  %3209 = vmatprep.subr.mxu0 0.0
  %3210 = vmatpush1.xpose.msra.mxu0 0.0
  %3211 = vmatprep.subr.mxu0 0.0
  %3212 = vmatpush1.xpose.msra.mxu0 0.0
  %3213 = vmatprep.subr.mxu0 0.0
  %3214 = vmatpush1.xpose.msra.mxu0 0.0
  %3215 = vmatprep.subr.mxu0 0.0
  %3216 = vmatpush1.xpose.msra.mxu0 0.0
  %3217 = vmatprep.subr.mxu0 0.0
  %3218 = vmatpush1.xpose.msra.mxu0 0.0
  %3219 = vmatprep.subr.mxu0 0.0
  %3220 = vmatpush1.xpose.msra.mxu0 0.0
  %3221 = vmatprep.subr.mxu0 0.0
  %3222 = vmatpush1.xpose.msra.mxu0 0.0
  %3223 = vmatprep.subr.mxu0 0.0
  %3224 = vmatpush1.xpose.msra.mxu0 0.0
  %3225 = vmatprep.subr.mxu0 0.0
  %3226 = vmatpush1.xpose.msra.mxu0 0.0
  %3227 = vmatprep.subr.mxu0 0.0
  %3228 = vmatpush1.xpose.msra.mxu0 0.0
  %3229 = vmatprep.subr.mxu0 0.0
  %3230 = vmatpush1.xpose.msra.mxu0 0.0
  %3231 = vmatprep.subr.mxu0 0.0
  %3232 = vmatpush1.xpose.msra.mxu0 0.0
  %3233 = vmatprep.subr.mxu0 0.0
  %3234 = vmatpush1.xpose.msra.mxu0 0.0
  %3235 = vmatprep.subr.mxu0 0.0
  %3236 = vmatpush1.xpose.msra.mxu0 0.0
  %3237 = vmatprep.subr.mxu0 0.0
  %3238 = vmatpush1.xpose.msra.mxu0 0.0
  %3239 = vmatprep.mubr.f32.mxu0 0.0
  %3240 = vmatmul.mubr.f32.gmra.mrb[0].mxu0 %v3169
  %v3241 = vpop.f32.mrb[0].mxu0
  %v3242 = vadd.f32 0.0, %v3241
  %v3243 = vpop.f32.mrb[0].mxu0
  %3244 = vdwg.mxu0
  %v3245 = vsel %vm2754, %v3242, -inf
  %3246 = vmax.xlane.f32.xlu0 %v3245
  %v3247 = vpop.xlane.xlu0 %3246
  %v3248 = vsub.f32 %v3242, %v3247
  %v3249 = vmul.f32 %v3248, 1.442695
  %v3250 = vpow.pop %v3249
  %v3251 = vsel %vm2754, %v3250, 0.0
  %3252 = vadd.xlane.f32.xlu0 %v3251
  %v3253 = vpop.xlane.xlu0 %3252
  %v3254 = vrcp.pop %v3253
  %v3255 = vmul.f32 %v3250, %v3254
  %3256 = vrot.lane.b32.xlu0 %v2658, 112
  %v3257 = vpop.permute.xlu0 %3256
  %3258 = vrot.lane.b32.xlu0 %v2663, 112
  %v3259 = vpop.permute.xlu0 %3258
  %v3262 = vsel %vm2754, %v3255, 0
  %v3264 = vsel %vm2769, %v3259, 0
  %3266 = vmatprep.subr.mxu0 0.0
  %3267 = vmatpush1.msra.mxu0 %v3257
  %3268 = vmatprep.subr.mxu0 0.0
  %3269 = vmatpush1.msra.mxu0 %v3264
  %3270 = vmatprep.subr.mxu0 0.0
  %3271 = vmatpush1.msra.mxu0 0.0
  %3272 = vmatprep.subr.mxu0 0.0
  %3273 = vmatpush1.msra.mxu0 0.0
  %3274 = vmatprep.subr.mxu0 0.0
  %3275 = vmatpush1.msra.mxu0 0.0
  %3276 = vmatprep.subr.mxu0 0.0
  %3277 = vmatpush1.msra.mxu0 0.0
  %3278 = vmatprep.subr.mxu0 0.0
  %3279 = vmatpush1.msra.mxu0 0.0
  %3280 = vmatprep.subr.mxu0 0.0
  %3281 = vmatpush1.msra.mxu0 0.0
  %3282 = vmatprep.subr.mxu0 0.0
  %3283 = vmatpush1.msra.mxu0 0.0
  %3284 = vmatprep.subr.mxu0 0.0
  %3285 = vmatpush1.msra.mxu0 0.0
  %3286 = vmatprep.subr.mxu0 0.0
  %3287 = vmatpush1.msra.mxu0 0.0
  %3288 = vmatprep.subr.mxu0 0.0
  %3289 = vmatpush1.msra.mxu0 0.0
  %3290 = vmatprep.subr.mxu0 0.0
  %3291 = vmatpush1.msra.mxu0 0.0
  %3292 = vmatprep.subr.mxu0 0.0
  %3293 = vmatpush1.msra.mxu0 0.0
  %3294 = vmatprep.subr.mxu0 0.0
  %3295 = vmatpush1.msra.mxu0 0.0
  %3296 = vmatprep.subr.mxu0 0.0
  %3297 = vmatpush1.msra.mxu0 0.0
  %3298 = vmatprep.subr.mxu0 0.0
  %3299 = vmatpush1.msra.mxu0 0.0
  %3300 = vmatprep.subr.mxu0 0.0
  %3301 = vmatpush1.msra.mxu0 0.0
  %3302 = vmatprep.subr.mxu0 0.0
  %3303 = vmatpush1.msra.mxu0 0.0
  %3304 = vmatprep.subr.mxu0 0.0
  %3305 = vmatpush1.msra.mxu0 0.0
  %3306 = vmatprep.subr.mxu0 0.0
  %3307 = vmatpush1.msra.mxu0 0.0
  %3308 = vmatprep.subr.mxu0 0.0
  %3309 = vmatpush1.msra.mxu0 0.0
  %3310 = vmatprep.subr.mxu0 0.0
  %3311 = vmatpush1.msra.mxu0 0.0
  %3312 = vmatprep.subr.mxu0 0.0
  %3313 = vmatpush1.msra.mxu0 0.0
  %3314 = vmatprep.subr.mxu0 0.0
  %3315 = vmatpush1.msra.mxu0 0.0
  %3316 = vmatprep.subr.mxu0 0.0
  %3317 = vmatpush1.msra.mxu0 0.0
  %3318 = vmatprep.subr.mxu0 0.0
  %3319 = vmatpush1.msra.mxu0 0.0
  %3320 = vmatprep.subr.mxu0 0.0
  %3321 = vmatpush1.msra.mxu0 0.0
  %3322 = vmatprep.subr.mxu0 0.0
  %3323 = vmatpush1.msra.mxu0 0.0
  %3324 = vmatprep.subr.mxu0 0.0
  %3325 = vmatpush1.msra.mxu0 0.0
  %3326 = vmatprep.subr.mxu0 0.0
  %3327 = vmatpush1.msra.mxu0 0.0
  %3328 = vmatprep.subr.mxu0 0.0
  %3329 = vmatpush1.msra.mxu0 0.0
  %3330 = vmatprep.mubr.f32.mxu0 0.0
  %3331 = vmatmul.mubr.f32.gmra.mrb[0].mxu0 %v3262
  %v3332 = vpop.f32.mrb[0].mxu0
  %v3333 = vadd.f32 0.0, %v3332
  %v3334 = vpop.f32.mrb[0].mxu0
  %3335 = vdwg.mxu0
  %v3337 = vsel %vm412, %v3333, 0
  %3339 = vmatprep.subr.mxu0 0.0
  %3340 = vmatpush1.msra.mxu0 %v2673
  %3341 = vmatprep.subr.mxu0 0.0
  %3342 = vmatpush1.msra.mxu0 0.0
  %3343 = vmatprep.subr.mxu0 0.0
  %3344 = vmatpush1.msra.mxu0 0.0
  %3345 = vmatprep.subr.mxu0 0.0
  %3346 = vmatpush1.msra.mxu0 0.0
  %3347 = vmatprep.subr.mxu0 0.0
  %3348 = vmatpush1.msra.mxu0 0.0
  %3349 = vmatprep.subr.mxu0 0.0
  %3350 = vmatpush1.msra.mxu0 0.0
  %3351 = vmatprep.subr.mxu0 0.0
  %3352 = vmatpush1.msra.mxu0 0.0
  %3353 = vmatprep.subr.mxu0 0.0
  %3354 = vmatpush1.msra.mxu0 0.0
  %3355 = vmatprep.subr.mxu0 0.0
  %3356 = vmatpush1.msra.mxu0 0.0
  %3357 = vmatprep.subr.mxu0 0.0
  %3358 = vmatpush1.msra.mxu0 0.0
  %3359 = vmatprep.subr.mxu0 0.0
  %3360 = vmatpush1.msra.mxu0 0.0
  %3361 = vmatprep.subr.mxu0 0.0
  %3362 = vmatpush1.msra.mxu0 0.0
  %3363 = vmatprep.subr.mxu0 0.0
  %3364 = vmatpush1.msra.mxu0 0.0
  %3365 = vmatprep.subr.mxu0 0.0
  %3366 = vmatpush1.msra.mxu0 0.0
  %3367 = vmatprep.subr.mxu0 0.0
  %3368 = vmatpush1.msra.mxu0 0.0
  %3369 = vmatprep.subr.mxu0 0.0
  %3370 = vmatpush1.msra.mxu0 0.0
  %3371 = vmatprep.subr.mxu0 0.0
  %3372 = vmatpush1.msra.mxu0 0.0
  %3373 = vmatprep.subr.mxu0 0.0
  %3374 = vmatpush1.msra.mxu0 0.0
  %3375 = vmatprep.subr.mxu0 0.0
  %3376 = vmatpush1.msra.mxu0 0.0
  %3377 = vmatprep.subr.mxu0 0.0
  %3378 = vmatpush1.msra.mxu0 0.0
  %3379 = vmatprep.subr.mxu0 0.0
  %3380 = vmatpush1.msra.mxu0 0.0
  %3381 = vmatprep.subr.mxu0 0.0
  %3382 = vmatpush1.msra.mxu0 0.0
  %3383 = vmatprep.subr.mxu0 0.0
  %3384 = vmatpush1.msra.mxu0 0.0
  %3385 = vmatprep.subr.mxu0 0.0
  %3386 = vmatpush1.msra.mxu0 0.0
  %3387 = vmatprep.subr.mxu0 0.0
  %3388 = vmatpush1.msra.mxu0 0.0
  %3389 = vmatprep.subr.mxu0 0.0
  %3390 = vmatpush1.msra.mxu0 0.0
  %3391 = vmatprep.subr.mxu0 0.0
  %3392 = vmatpush1.msra.mxu0 0.0
  %3393 = vmatprep.subr.mxu0 0.0
  %3394 = vmatpush1.msra.mxu0 0.0
  %3395 = vmatprep.subr.mxu0 0.0
  %3396 = vmatpush1.msra.mxu0 0.0
  %3397 = vmatprep.subr.mxu0 0.0
  %3398 = vmatpush1.msra.mxu0 0.0
  %3399 = vmatprep.subr.mxu0 0.0
  %3400 = vmatpush1.msra.mxu0 0.0
  %3401 = vmatprep.subr.mxu0 0.0
  %3402 = vmatpush1.msra.mxu0 0.0
  %3403 = vmatprep.mubr.f32.mxu0 0.0
  %3404 = vmatmul.mubr.f32.gmra.mrb[0].mxu0 %v3337
  %v3405 = vpop.f32.mrb[0].mxu0
  %v3406 = vadd.f32 0.0, %v3405
  %v3407 = vpop.f32.mrb[0].mxu0
  %3408 = vdwg.mxu0
  %v3409 = vadd.f32 %v3160, %v3406
  %3410 = vrot.lane.b32.xlu0 %v2469, 104
  %v3411 = vpop.permute.xlu0 %3410
  %3412 = vrot.lane.b32.xlu0 %v2558, 104
  %v3413 = vpop.permute.xlu0 %3412
  %3414 = vrot.lane.b32.xlu0 %v2563, 104
  %v3415 = vpop.permute.xlu0 %3414
  %v3416 = vsel %vm412, %v3411, 0
  %v3418 = vsel %vm412, %v3413, 0
  %v3420 = vsel %vm412, %v3415, 0
  %3422 = vmatprep.subr.mxu0 0.0
  %3423 = vmatpush1.xpose.msra.mxu0 %v3418
  %3424 = vmatprep.subr.mxu0 0.0
  %3425 = vmatpush1.xpose.msra.mxu0 %v3420
  %3426 = vmatprep.subr.mxu0 0.0
  %3427 = vmatpush1.xpose.msra.mxu0 0.0
  %3428 = vmatprep.subr.mxu0 0.0
  %3429 = vmatpush1.xpose.msra.mxu0 0.0
  %3430 = vmatprep.subr.mxu0 0.0
  %3431 = vmatpush1.xpose.msra.mxu0 0.0
  %3432 = vmatprep.subr.mxu0 0.0
  %3433 = vmatpush1.xpose.msra.mxu0 0.0
  %3434 = vmatprep.subr.mxu0 0.0
  %3435 = vmatpush1.xpose.msra.mxu0 0.0
  %3436 = vmatprep.subr.mxu0 0.0
  %3437 = vmatpush1.xpose.msra.mxu0 0.0
  %3438 = vmatprep.subr.mxu0 0.0
  %3439 = vmatpush1.xpose.msra.mxu0 0.0
  %3440 = vmatprep.subr.mxu0 0.0
  %3441 = vmatpush1.xpose.msra.mxu0 0.0
  %3442 = vmatprep.subr.mxu0 0.0
  %3443 = vmatpush1.xpose.msra.mxu0 0.0
  %3444 = vmatprep.subr.mxu0 0.0
  %3445 = vmatpush1.xpose.msra.mxu0 0.0
  %3446 = vmatprep.subr.mxu0 0.0
  %3447 = vmatpush1.xpose.msra.mxu0 0.0
  %3448 = vmatprep.subr.mxu0 0.0
  %3449 = vmatpush1.xpose.msra.mxu0 0.0
  %3450 = vmatprep.subr.mxu0 0.0
  %3451 = vmatpush1.xpose.msra.mxu0 0.0
  %3452 = vmatprep.subr.mxu0 0.0
  %3453 = vmatpush1.xpose.msra.mxu0 0.0
  %3454 = vmatprep.subr.mxu0 0.0
  %3455 = vmatpush1.xpose.msra.mxu0 0.0
  %3456 = vmatprep.subr.mxu0 0.0
  %3457 = vmatpush1.xpose.msra.mxu0 0.0
  %3458 = vmatprep.subr.mxu0 0.0
  %3459 = vmatpush1.xpose.msra.mxu0 0.0
  %3460 = vmatprep.subr.mxu0 0.0
  %3461 = vmatpush1.xpose.msra.mxu0 0.0
  %3462 = vmatprep.subr.mxu0 0.0
  %3463 = vmatpush1.xpose.msra.mxu0 0.0
  %3464 = vmatprep.subr.mxu0 0.0
  %3465 = vmatpush1.xpose.msra.mxu0 0.0
  %3466 = vmatprep.subr.mxu0 0.0
  %3467 = vmatpush1.xpose.msra.mxu0 0.0
  %3468 = vmatprep.subr.mxu0 0.0
  %3469 = vmatpush1.xpose.msra.mxu0 0.0
  %3470 = vmatprep.subr.mxu0 0.0
  %3471 = vmatpush1.xpose.msra.mxu0 0.0
  %3472 = vmatprep.subr.mxu0 0.0
  %3473 = vmatpush1.xpose.msra.mxu0 0.0
  %3474 = vmatprep.subr.mxu0 0.0
  %3475 = vmatpush1.xpose.msra.mxu0 0.0
  %3476 = vmatprep.subr.mxu0 0.0
  %3477 = vmatpush1.xpose.msra.mxu0 0.0
  %3478 = vmatprep.subr.mxu0 0.0
  %3479 = vmatpush1.xpose.msra.mxu0 0.0
  %3480 = vmatprep.subr.mxu0 0.0
  %3481 = vmatpush1.xpose.msra.mxu0 0.0
  %3482 = vmatprep.subr.mxu0 0.0
  %3483 = vmatpush1.xpose.msra.mxu0 0.0
  %3484 = vmatprep.subr.mxu0 0.0
  %3485 = vmatpush1.xpose.msra.mxu0 0.0
  %3486 = vmatprep.mubr.f32.mxu0 0.0
  %3487 = vmatmul.mubr.f32.gmra.mrb[0].mxu0 %v3416
  %v3488 = vpop.f32.mrb[0].mxu0
  %v3489 = vadd.f32 0.0, %v3488
  %v3490 = vpop.f32.mrb[0].mxu0
  %3491 = vdwg.mxu0
  %v3492 = vsel %vm2754, %v3489, -inf
  %3493 = vmax.xlane.f32.xlu0 %v3492
  %v3494 = vpop.xlane.xlu0 %3493
  %v3495 = vsub.f32 %v3489, %v3494
  %v3496 = vmul.f32 %v3495, 1.442695
  %v3497 = vpow.pop %v3496
  %v3498 = vsel %vm2754, %v3497, 0.0
  %3499 = vadd.xlane.f32.xlu0 %v3498
  %v3500 = vpop.xlane.xlu0 %3499
  %v3501 = vrcp.pop %v3500
  %v3502 = vmul.f32 %v3497, %v3501
  %3503 = vrot.lane.b32.xlu0 %v2658, 104
  %v3504 = vpop.permute.xlu0 %3503
  %3505 = vrot.lane.b32.xlu0 %v2663, 104
  %v3506 = vpop.permute.xlu0 %3505
  %v3509 = vsel %vm2754, %v3502, 0
  %v3511 = vsel %vm2769, %v3506, 0
  %3513 = vmatprep.subr.mxu0 0.0
  %3514 = vmatpush1.msra.mxu0 %v3504
  %3515 = vmatprep.subr.mxu0 0.0
  %3516 = vmatpush1.msra.mxu0 %v3511
  %3517 = vmatprep.subr.mxu0 0.0
  %3518 = vmatpush1.msra.mxu0 0.0
  %3519 = vmatprep.subr.mxu0 0.0
  %3520 = vmatpush1.msra.mxu0 0.0
  %3521 = vmatprep.subr.mxu0 0.0
  %3522 = vmatpush1.msra.mxu0 0.0
  %3523 = vmatprep.subr.mxu0 0.0
  %3524 = vmatpush1.msra.mxu0 0.0
  %3525 = vmatprep.subr.mxu0 0.0
  %3526 = vmatpush1.msra.mxu0 0.0
  %3527 = vmatprep.subr.mxu0 0.0
  %3528 = vmatpush1.msra.mxu0 0.0
  %3529 = vmatprep.subr.mxu0 0.0
  %3530 = vmatpush1.msra.mxu0 0.0
  %3531 = vmatprep.subr.mxu0 0.0
  %3532 = vmatpush1.msra.mxu0 0.0
  %3533 = vmatprep.subr.mxu0 0.0
  %3534 = vmatpush1.msra.mxu0 0.0
  %3535 = vmatprep.subr.mxu0 0.0
  %3536 = vmatpush1.msra.mxu0 0.0
  %3537 = vmatprep.subr.mxu0 0.0
  %3538 = vmatpush1.msra.mxu0 0.0
  %3539 = vmatprep.subr.mxu0 0.0
  %3540 = vmatpush1.msra.mxu0 0.0
  %3541 = vmatprep.subr.mxu0 0.0
  %3542 = vmatpush1.msra.mxu0 0.0
  %3543 = vmatprep.subr.mxu0 0.0
  %3544 = vmatpush1.msra.mxu0 0.0
  %3545 = vmatprep.subr.mxu0 0.0
  %3546 = vmatpush1.msra.mxu0 0.0
  %3547 = vmatprep.subr.mxu0 0.0
  %3548 = vmatpush1.msra.mxu0 0.0
  %3549 = vmatprep.subr.mxu0 0.0
  %3550 = vmatpush1.msra.mxu0 0.0
  %3551 = vmatprep.subr.mxu0 0.0
  %3552 = vmatpush1.msra.mxu0 0.0
  %3553 = vmatprep.subr.mxu0 0.0
  %3554 = vmatpush1.msra.mxu0 0.0
  %3555 = vmatprep.subr.mxu0 0.0
  %3556 = vmatpush1.msra.mxu0 0.0
  %3557 = vmatprep.subr.mxu0 0.0
  %3558 = vmatpush1.msra.mxu0 0.0
  %3559 = vmatprep.subr.mxu0 0.0
  %3560 = vmatpush1.msra.mxu0 0.0
  %3561 = vmatprep.subr.mxu0 0.0
  %3562 = vmatpush1.msra.mxu0 0.0
  %3563 = vmatprep.subr.mxu0 0.0
  %3564 = vmatpush1.msra.mxu0 0.0
  %3565 = vmatprep.subr.mxu0 0.0
  %3566 = vmatpush1.msra.mxu0 0.0
  %3567 = vmatprep.subr.mxu0 0.0
  %3568 = vmatpush1.msra.mxu0 0.0
  %3569 = vmatprep.subr.mxu0 0.0
  %3570 = vmatpush1.msra.mxu0 0.0
  %3571 = vmatprep.subr.mxu0 0.0
  %3572 = vmatpush1.msra.mxu0 0.0
  %3573 = vmatprep.subr.mxu0 0.0
  %3574 = vmatpush1.msra.mxu0 0.0
  %3575 = vmatprep.subr.mxu0 0.0
  %3576 = vmatpush1.msra.mxu0 0.0
  %3577 = vmatprep.mubr.f32.mxu0 0.0
  %3578 = vmatmul.mubr.f32.gmra.mrb[0].mxu0 %v3509
  %v3579 = vpop.f32.mrb[0].mxu0
  %v3580 = vadd.f32 0.0, %v3579
  %v3581 = vpop.f32.mrb[0].mxu0
  %3582 = vdwg.mxu0
  %v3584 = vsel %vm412, %v3580, 0
  %3586 = vmatprep.subr.mxu0 0.0
  %3587 = vmatpush1.msra.mxu0 %v2674
  %3588 = vmatprep.subr.mxu0 0.0
  %3589 = vmatpush1.msra.mxu0 0.0
  %3590 = vmatprep.subr.mxu0 0.0
  %3591 = vmatpush1.msra.mxu0 0.0
  %3592 = vmatprep.subr.mxu0 0.0
  %3593 = vmatpush1.msra.mxu0 0.0
  %3594 = vmatprep.subr.mxu0 0.0
  %3595 = vmatpush1.msra.mxu0 0.0
  %3596 = vmatprep.subr.mxu0 0.0
  %3597 = vmatpush1.msra.mxu0 0.0
  %3598 = vmatprep.subr.mxu0 0.0
  %3599 = vmatpush1.msra.mxu0 0.0
  %3600 = vmatprep.subr.mxu0 0.0
  %3601 = vmatpush1.msra.mxu0 0.0
  %3602 = vmatprep.subr.mxu0 0.0
  %3603 = vmatpush1.msra.mxu0 0.0
  %3604 = vmatprep.subr.mxu0 0.0
  %3605 = vmatpush1.msra.mxu0 0.0
  %3606 = vmatprep.subr.mxu0 0.0
  %3607 = vmatpush1.msra.mxu0 0.0
  %3608 = vmatprep.subr.mxu0 0.0
  %3609 = vmatpush1.msra.mxu0 0.0
  %3610 = vmatprep.subr.mxu0 0.0
  %3611 = vmatpush1.msra.mxu0 0.0
  %3612 = vmatprep.subr.mxu0 0.0
  %3613 = vmatpush1.msra.mxu0 0.0
  %3614 = vmatprep.subr.mxu0 0.0
  %3615 = vmatpush1.msra.mxu0 0.0
  %3616 = vmatprep.subr.mxu0 0.0
  %3617 = vmatpush1.msra.mxu0 0.0
  %3618 = vmatprep.subr.mxu0 0.0
  %3619 = vmatpush1.msra.mxu0 0.0
  %3620 = vmatprep.subr.mxu0 0.0
  %3621 = vmatpush1.msra.mxu0 0.0
  %3622 = vmatprep.subr.mxu0 0.0
  %3623 = vmatpush1.msra.mxu0 0.0
  %3624 = vmatprep.subr.mxu0 0.0
  %3625 = vmatpush1.msra.mxu0 0.0
  %3626 = vmatprep.subr.mxu0 0.0
  %3627 = vmatpush1.msra.mxu0 0.0
  %3628 = vmatprep.subr.mxu0 0.0
  %3629 = vmatpush1.msra.mxu0 0.0
  %3630 = vmatprep.subr.mxu0 0.0
  %3631 = vmatpush1.msra.mxu0 0.0
  %3632 = vmatprep.subr.mxu0 0.0
  %3633 = vmatpush1.msra.mxu0 0.0
  %3634 = vmatprep.subr.mxu0 0.0
  %3635 = vmatpush1.msra.mxu0 0.0
  %3636 = vmatprep.subr.mxu0 0.0
  %3637 = vmatpush1.msra.mxu0 0.0
  %3638 = vmatprep.subr.mxu0 0.0
  %3639 = vmatpush1.msra.mxu0 0.0
  %3640 = vmatprep.subr.mxu0 0.0
  %3641 = vmatpush1.msra.mxu0 0.0
  %3642 = vmatprep.subr.mxu0 0.0
  %3643 = vmatpush1.msra.mxu0 0.0
  %3644 = vmatprep.subr.mxu0 0.0
  %3645 = vmatpush1.msra.mxu0 0.0
  %3646 = vmatprep.subr.mxu0 0.0
  %3647 = vmatpush1.msra.mxu0 0.0
  %3648 = vmatprep.subr.mxu0 0.0
  %3649 = vmatpush1.msra.mxu0 0.0
  %3650 = vmatprep.mubr.f32.mxu0 0.0
  %3651 = vmatmul.mubr.f32.gmra.mrb[0].mxu0 %v3584
  %v3652 = vpop.f32.mrb[0].mxu0
  %v3653 = vadd.f32 0.0, %v3652
  %v3654 = vpop.f32.mrb[0].mxu0
  %3655 = vdwg.mxu0
  %v3656 = vadd.f32 %v3409, %v3653
  %vm3658 = vcmask 1045504
  %v3659 = vrot.slane %v2563, 2
  %v3660 = vrot.slane %v2568, 2
  %v3661 = vsel %vm3658, %v3659, %v3660
  %v3663 = vsel %vm412, %v2470, 0
  %v3665 = vsel %vm412, %v3661, 0
  %v3667 = vsel %vm412, %v3660, 0
  %3669 = vmatprep.subr.mxu0 0.0
  %3670 = vmatpush1.xpose.msra.mxu0 %v3665
  %3671 = vmatprep.subr.mxu0 0.0
  %3672 = vmatpush1.xpose.msra.mxu0 %v3667
  %3673 = vmatprep.subr.mxu0 0.0
  %3674 = vmatpush1.xpose.msra.mxu0 0.0
  %3675 = vmatprep.subr.mxu0 0.0
  %3676 = vmatpush1.xpose.msra.mxu0 0.0
  %3677 = vmatprep.subr.mxu0 0.0
  %3678 = vmatpush1.xpose.msra.mxu0 0.0
  %3679 = vmatprep.subr.mxu0 0.0
  %3680 = vmatpush1.xpose.msra.mxu0 0.0
  %3681 = vmatprep.subr.mxu0 0.0
  %3682 = vmatpush1.xpose.msra.mxu0 0.0
  %3683 = vmatprep.subr.mxu0 0.0
  %3684 = vmatpush1.xpose.msra.mxu0 0.0
  %3685 = vmatprep.subr.mxu0 0.0
  %3686 = vmatpush1.xpose.msra.mxu0 0.0
  %3687 = vmatprep.subr.mxu0 0.0
  %3688 = vmatpush1.xpose.msra.mxu0 0.0
  %3689 = vmatprep.subr.mxu0 0.0
  %3690 = vmatpush1.xpose.msra.mxu0 0.0
  %3691 = vmatprep.subr.mxu0 0.0
  %3692 = vmatpush1.xpose.msra.mxu0 0.0
  %3693 = vmatprep.subr.mxu0 0.0
  %3694 = vmatpush1.xpose.msra.mxu0 0.0
  %3695 = vmatprep.subr.mxu0 0.0
  %3696 = vmatpush1.xpose.msra.mxu0 0.0
  %3697 = vmatprep.subr.mxu0 0.0
  %3698 = vmatpush1.xpose.msra.mxu0 0.0
  %3699 = vmatprep.subr.mxu0 0.0
  %3700 = vmatpush1.xpose.msra.mxu0 0.0
  %3701 = vmatprep.subr.mxu0 0.0
  %3702 = vmatpush1.xpose.msra.mxu0 0.0
  %3703 = vmatprep.subr.mxu0 0.0
  %3704 = vmatpush1.xpose.msra.mxu0 0.0
  %3705 = vmatprep.subr.mxu0 0.0
  %3706 = vmatpush1.xpose.msra.mxu0 0.0
  %3707 = vmatprep.subr.mxu0 0.0
  %3708 = vmatpush1.xpose.msra.mxu0 0.0
  %3709 = vmatprep.subr.mxu0 0.0
  %3710 = vmatpush1.xpose.msra.mxu0 0.0
  %3711 = vmatprep.subr.mxu0 0.0
  %3712 = vmatpush1.xpose.msra.mxu0 0.0
  %3713 = vmatprep.subr.mxu0 0.0
  %3714 = vmatpush1.xpose.msra.mxu0 0.0
  %3715 = vmatprep.subr.mxu0 0.0
  %3716 = vmatpush1.xpose.msra.mxu0 0.0
  %3717 = vmatprep.subr.mxu0 0.0
  %3718 = vmatpush1.xpose.msra.mxu0 0.0
  %3719 = vmatprep.subr.mxu0 0.0
  %3720 = vmatpush1.xpose.msra.mxu0 0.0
  %3721 = vmatprep.subr.mxu0 0.0
  %3722 = vmatpush1.xpose.msra.mxu0 0.0
  %3723 = vmatprep.subr.mxu0 0.0
  %3724 = vmatpush1.xpose.msra.mxu0 0.0
  %3725 = vmatprep.subr.mxu0 0.0
  %3726 = vmatpush1.xpose.msra.mxu0 0.0
  %3727 = vmatprep.subr.mxu0 0.0
  %3728 = vmatpush1.xpose.msra.mxu0 0.0
  %3729 = vmatprep.subr.mxu0 0.0
  %3730 = vmatpush1.xpose.msra.mxu0 0.0
  %3731 = vmatprep.subr.mxu0 0.0
  %3732 = vmatpush1.xpose.msra.mxu0 0.0
  %3733 = vmatprep.mubr.f32.mxu0 0.0
  %3734 = vmatmul.mubr.f32.gmra.mrb[0].mxu0 %v3663
  %v3735 = vpop.f32.mrb[0].mxu0
  %v3736 = vadd.f32 0.0, %v3735
  %v3737 = vpop.f32.mrb[0].mxu0
  %3738 = vdwg.mxu0
  %v3739 = vsel %vm2754, %v3736, -inf
  %3740 = vmax.xlane.f32.xlu0 %v3739
  %v3741 = vpop.xlane.xlu0 %3740
  %v3742 = vsub.f32 %v3736, %v3741
  %v3743 = vmul.f32 %v3742, 1.442695
  %v3744 = vpow.pop %v3743
  %v3745 = vsel %vm2754, %v3744, 0.0
  %3746 = vadd.xlane.f32.xlu0 %v3745
  %v3747 = vpop.xlane.xlu0 %3746
  %v3748 = vrcp.pop %v3747
  %v3749 = vmul.f32 %v3744, %v3748
  %v3751 = vrot.slane %v2663, 2
  %v3752 = vrot.slane %v2668, 2
  %v3753 = vsel %vm3658, %v3751, %v3752
  %v3756 = vsel %vm2754, %v3749, 0
  %v3758 = vsel %vm2769, %v3752, 0
  %3760 = vmatprep.subr.mxu0 0.0
  %3761 = vmatpush1.msra.mxu0 %v3753
  %3762 = vmatprep.subr.mxu0 0.0
  %3763 = vmatpush1.msra.mxu0 %v3758
  %3764 = vmatprep.subr.mxu0 0.0
  %3765 = vmatpush1.msra.mxu0 0.0
  %3766 = vmatprep.subr.mxu0 0.0
  %3767 = vmatpush1.msra.mxu0 0.0
  %3768 = vmatprep.subr.mxu0 0.0
  %3769 = vmatpush1.msra.mxu0 0.0
  %3770 = vmatprep.subr.mxu0 0.0
  %3771 = vmatpush1.msra.mxu0 0.0
  %3772 = vmatprep.subr.mxu0 0.0
  %3773 = vmatpush1.msra.mxu0 0.0
  %3774 = vmatprep.subr.mxu0 0.0
  %3775 = vmatpush1.msra.mxu0 0.0
  %3776 = vmatprep.subr.mxu0 0.0
  %3777 = vmatpush1.msra.mxu0 0.0
  %3778 = vmatprep.subr.mxu0 0.0
  %3779 = vmatpush1.msra.mxu0 0.0
  %3780 = vmatprep.subr.mxu0 0.0
  %3781 = vmatpush1.msra.mxu0 0.0
  %3782 = vmatprep.subr.mxu0 0.0
  %3783 = vmatpush1.msra.mxu0 0.0
  %3784 = vmatprep.subr.mxu0 0.0
  %3785 = vmatpush1.msra.mxu0 0.0
  %3786 = vmatprep.subr.mxu0 0.0
  %3787 = vmatpush1.msra.mxu0 0.0
  %3788 = vmatprep.subr.mxu0 0.0
  %3789 = vmatpush1.msra.mxu0 0.0
  %3790 = vmatprep.subr.mxu0 0.0
  %3791 = vmatpush1.msra.mxu0 0.0
  %3792 = vmatprep.subr.mxu0 0.0
  %3793 = vmatpush1.msra.mxu0 0.0
  %3794 = vmatprep.subr.mxu0 0.0
  %3795 = vmatpush1.msra.mxu0 0.0
  %3796 = vmatprep.subr.mxu0 0.0
  %3797 = vmatpush1.msra.mxu0 0.0
  %3798 = vmatprep.subr.mxu0 0.0
  %3799 = vmatpush1.msra.mxu0 0.0
  %3800 = vmatprep.subr.mxu0 0.0
  %3801 = vmatpush1.msra.mxu0 0.0
  %3802 = vmatprep.subr.mxu0 0.0
  %3803 = vmatpush1.msra.mxu0 0.0
  %3804 = vmatprep.subr.mxu0 0.0
  %3805 = vmatpush1.msra.mxu0 0.0
  %3806 = vmatprep.subr.mxu0 0.0
  %3807 = vmatpush1.msra.mxu0 0.0
  %3808 = vmatprep.subr.mxu0 0.0
  %3809 = vmatpush1.msra.mxu0 0.0
  %3810 = vmatprep.subr.mxu0 0.0
  %3811 = vmatpush1.msra.mxu0 0.0
  %3812 = vmatprep.subr.mxu0 0.0
  %3813 = vmatpush1.msra.mxu0 0.0
  %3814 = vmatprep.subr.mxu0 0.0
  %3815 = vmatpush1.msra.mxu0 0.0
  %3816 = vmatprep.subr.mxu0 0.0
  %3817 = vmatpush1.msra.mxu0 0.0
  %3818 = vmatprep.subr.mxu0 0.0
  %3819 = vmatpush1.msra.mxu0 0.0
  %3820 = vmatprep.subr.mxu0 0.0
  %3821 = vmatpush1.msra.mxu0 0.0
  %3822 = vmatprep.subr.mxu0 0.0
  %3823 = vmatpush1.msra.mxu0 0.0
  %3824 = vmatprep.mubr.f32.mxu0 0.0
  %3825 = vmatmul.mubr.f32.gmra.mrb[0].mxu0 %v3756
  %v3826 = vpop.f32.mrb[0].mxu0
  %v3827 = vadd.f32 0.0, %v3826
  %v3828 = vpop.f32.mrb[0].mxu0
  %3829 = vdwg.mxu0
  %3830 = vrot.lane.b32.xlu0 %v2470, 120
  %v3831 = vpop.permute.xlu0 %3830
  %3832 = vrot.lane.b32.xlu0 %v3661, 120
  %v3833 = vpop.permute.xlu0 %3832
  %3834 = vrot.lane.b32.xlu0 %v3660, 120
  %v3835 = vpop.permute.xlu0 %3834
  %v3836 = vsel %vm412, %v3831, 0
  %v3838 = vsel %vm412, %v3833, 0
  %v3840 = vsel %vm412, %v3835, 0
  %3842 = vmatprep.subr.mxu0 0.0
  %3843 = vmatpush1.xpose.msra.mxu0 %v3838
  %3844 = vmatprep.subr.mxu0 0.0
  %3845 = vmatpush1.xpose.msra.mxu0 %v3840
  %3846 = vmatprep.subr.mxu0 0.0
  %3847 = vmatpush1.xpose.msra.mxu0 0.0
  %3848 = vmatprep.subr.mxu0 0.0
  %3849 = vmatpush1.xpose.msra.mxu0 0.0
  %3850 = vmatprep.subr.mxu0 0.0
  %3851 = vmatpush1.xpose.msra.mxu0 0.0
  %3852 = vmatprep.subr.mxu0 0.0
  %3853 = vmatpush1.xpose.msra.mxu0 0.0
  %3854 = vmatprep.subr.mxu0 0.0
  %3855 = vmatpush1.xpose.msra.mxu0 0.0
  %3856 = vmatprep.subr.mxu0 0.0
  %3857 = vmatpush1.xpose.msra.mxu0 0.0
  %3858 = vmatprep.subr.mxu0 0.0
  %3859 = vmatpush1.xpose.msra.mxu0 0.0
  %3860 = vmatprep.subr.mxu0 0.0
  %3861 = vmatpush1.xpose.msra.mxu0 0.0
  %3862 = vmatprep.subr.mxu0 0.0
  %3863 = vmatpush1.xpose.msra.mxu0 0.0
  %3864 = vmatprep.subr.mxu0 0.0
  %3865 = vmatpush1.xpose.msra.mxu0 0.0
  %3866 = vmatprep.subr.mxu0 0.0
  %3867 = vmatpush1.xpose.msra.mxu0 0.0
  %3868 = vmatprep.subr.mxu0 0.0
  %3869 = vmatpush1.xpose.msra.mxu0 0.0
  %3870 = vmatprep.subr.mxu0 0.0
  %3871 = vmatpush1.xpose.msra.mxu0 0.0
  %3872 = vmatprep.subr.mxu0 0.0
  %3873 = vmatpush1.xpose.msra.mxu0 0.0
  %3874 = vmatprep.subr.mxu0 0.0
  %3875 = vmatpush1.xpose.msra.mxu0 0.0
  %3876 = vmatprep.subr.mxu0 0.0
  %3877 = vmatpush1.xpose.msra.mxu0 0.0
  %3878 = vmatprep.subr.mxu0 0.0
  %3879 = vmatpush1.xpose.msra.mxu0 0.0
  %3880 = vmatprep.subr.mxu0 0.0
  %3881 = vmatpush1.xpose.msra.mxu0 0.0
  %3882 = vmatprep.subr.mxu0 0.0
  %3883 = vmatpush1.xpose.msra.mxu0 0.0
  %3884 = vmatprep.subr.mxu0 0.0
  %3885 = vmatpush1.xpose.msra.mxu0 0.0
  %3886 = vmatprep.subr.mxu0 0.0
  %3887 = vmatpush1.xpose.msra.mxu0 0.0
  %3888 = vmatprep.subr.mxu0 0.0
  %3889 = vmatpush1.xpose.msra.mxu0 0.0
  %3890 = vmatprep.subr.mxu0 0.0
  %3891 = vmatpush1.xpose.msra.mxu0 0.0
  %3892 = vmatprep.subr.mxu0 0.0
  %3893 = vmatpush1.xpose.msra.mxu0 0.0
  %3894 = vmatprep.subr.mxu0 0.0
  %3895 = vmatpush1.xpose.msra.mxu0 0.0
  %3896 = vmatprep.subr.mxu0 0.0
  %3897 = vmatpush1.xpose.msra.mxu0 0.0
  %3898 = vmatprep.subr.mxu0 0.0
  %3899 = vmatpush1.xpose.msra.mxu0 0.0
  %3900 = vmatprep.subr.mxu0 0.0
  %3901 = vmatpush1.xpose.msra.mxu0 0.0
  %3902 = vmatprep.subr.mxu0 0.0
  %3903 = vmatpush1.xpose.msra.mxu0 0.0
  %3904 = vmatprep.subr.mxu0 0.0
  %3905 = vmatpush1.xpose.msra.mxu0 0.0
  %3906 = vmatprep.mubr.f32.mxu0 0.0
  %3907 = vmatmul.mubr.f32.gmra.mrb[0].mxu0 %v3836
  %v3908 = vpop.f32.mrb[0].mxu0
  %v3909 = vadd.f32 0.0, %v3908
  %v3910 = vpop.f32.mrb[0].mxu0
  %3911 = vdwg.mxu0
  %v3912 = vsel %vm2754, %v3909, -inf
  %3913 = vmax.xlane.f32.xlu0 %v3912
  %v3914 = vpop.xlane.xlu0 %3913
  %v3915 = vsub.f32 %v3909, %v3914
  %v3916 = vmul.f32 %v3915, 1.442695
  %v3917 = vpow.pop %v3916
  %v3918 = vsel %vm2754, %v3917, 0.0
  %3919 = vadd.xlane.f32.xlu0 %v3918
  %v3920 = vpop.xlane.xlu0 %3919
  %v3921 = vrcp.pop %v3920
  %v3922 = vmul.f32 %v3917, %v3921
  %3923 = vrot.lane.b32.xlu0 %v3753, 120
  %v3924 = vpop.permute.xlu0 %3923
  %3925 = vrot.lane.b32.xlu0 %v3752, 120
  %v3926 = vpop.permute.xlu0 %3925
  %v3929 = vsel %vm2754, %v3922, 0
  %v3931 = vsel %vm2769, %v3926, 0
  %3933 = vmatprep.subr.mxu0 0.0
  %3934 = vmatpush1.msra.mxu0 %v3924
  %3935 = vmatprep.subr.mxu0 0.0
  %3936 = vmatpush1.msra.mxu0 %v3931
  %3937 = vmatprep.subr.mxu0 0.0
  %3938 = vmatpush1.msra.mxu0 0.0
  %3939 = vmatprep.subr.mxu0 0.0
  %3940 = vmatpush1.msra.mxu0 0.0
  %3941 = vmatprep.subr.mxu0 0.0
  %3942 = vmatpush1.msra.mxu0 0.0
  %3943 = vmatprep.subr.mxu0 0.0
  %3944 = vmatpush1.msra.mxu0 0.0
  %3945 = vmatprep.subr.mxu0 0.0
  %3946 = vmatpush1.msra.mxu0 0.0
  %3947 = vmatprep.subr.mxu0 0.0
  %3948 = vmatpush1.msra.mxu0 0.0
  %3949 = vmatprep.subr.mxu0 0.0
  %3950 = vmatpush1.msra.mxu0 0.0
  %3951 = vmatprep.subr.mxu0 0.0
  %3952 = vmatpush1.msra.mxu0 0.0
  %3953 = vmatprep.subr.mxu0 0.0
  %3954 = vmatpush1.msra.mxu0 0.0
  %3955 = vmatprep.subr.mxu0 0.0
  %3956 = vmatpush1.msra.mxu0 0.0
  %3957 = vmatprep.subr.mxu0 0.0
  %3958 = vmatpush1.msra.mxu0 0.0
  %3959 = vmatprep.subr.mxu0 0.0
  %3960 = vmatpush1.msra.mxu0 0.0
  %3961 = vmatprep.subr.mxu0 0.0
  %3962 = vmatpush1.msra.mxu0 0.0
  %3963 = vmatprep.subr.mxu0 0.0
  %3964 = vmatpush1.msra.mxu0 0.0
  %3965 = vmatprep.subr.mxu0 0.0
  %3966 = vmatpush1.msra.mxu0 0.0
  %3967 = vmatprep.subr.mxu0 0.0
  %3968 = vmatpush1.msra.mxu0 0.0
  %3969 = vmatprep.subr.mxu0 0.0
  %3970 = vmatpush1.msra.mxu0 0.0
  %3971 = vmatprep.subr.mxu0 0.0
  %3972 = vmatpush1.msra.mxu0 0.0
  %3973 = vmatprep.subr.mxu0 0.0
  %3974 = vmatpush1.msra.mxu0 0.0
  %3975 = vmatprep.subr.mxu0 0.0
  %3976 = vmatpush1.msra.mxu0 0.0
  %3977 = vmatprep.subr.mxu0 0.0
  %3978 = vmatpush1.msra.mxu0 0.0
  %3979 = vmatprep.subr.mxu0 0.0
  %3980 = vmatpush1.msra.mxu0 0.0
  %3981 = vmatprep.subr.mxu0 0.0
  %3982 = vmatpush1.msra.mxu0 0.0
  %3983 = vmatprep.subr.mxu0 0.0
  %3984 = vmatpush1.msra.mxu0 0.0
  %3985 = vmatprep.subr.mxu0 0.0
  %3986 = vmatpush1.msra.mxu0 0.0
  %3987 = vmatprep.subr.mxu0 0.0
  %3988 = vmatpush1.msra.mxu0 0.0
  %3989 = vmatprep.subr.mxu0 0.0
  %3990 = vmatpush1.msra.mxu0 0.0
  %3991 = vmatprep.subr.mxu0 0.0
  %3992 = vmatpush1.msra.mxu0 0.0
  %3993 = vmatprep.subr.mxu0 0.0
  %3994 = vmatpush1.msra.mxu0 0.0
  %3995 = vmatprep.subr.mxu0 0.0
  %3996 = vmatpush1.msra.mxu0 0.0
  %3997 = vmatprep.mubr.f32.mxu0 0.0
  %3998 = vmatmul.mubr.f32.gmra.mrb[0].mxu0 %v3929
  %v3999 = vpop.f32.mrb[0].mxu0
  %v4000 = vadd.f32 0.0, %v3999
  %v4001 = vpop.f32.mrb[0].mxu0
  %4002 = vdwg.mxu0
  %v4004 = vsel %vm412, %v4000, 0
  %4006 = vmatprep.subr.mxu0 0.0
  %4007 = vmatpush1.msra.mxu0 %v2672
  %4008 = vmatprep.subr.mxu0 0.0
  %4009 = vmatpush1.msra.mxu0 0.0
  %4010 = vmatprep.subr.mxu0 0.0
  %4011 = vmatpush1.msra.mxu0 0.0
  %4012 = vmatprep.subr.mxu0 0.0
  %4013 = vmatpush1.msra.mxu0 0.0
  %4014 = vmatprep.subr.mxu0 0.0
  %4015 = vmatpush1.msra.mxu0 0.0
  %4016 = vmatprep.subr.mxu0 0.0
  %4017 = vmatpush1.msra.mxu0 0.0
  %4018 = vmatprep.subr.mxu0 0.0
  %4019 = vmatpush1.msra.mxu0 0.0
  %4020 = vmatprep.subr.mxu0 0.0
  %4021 = vmatpush1.msra.mxu0 0.0
  %4022 = vmatprep.subr.mxu0 0.0
  %4023 = vmatpush1.msra.mxu0 0.0
  %4024 = vmatprep.subr.mxu0 0.0
  %4025 = vmatpush1.msra.mxu0 0.0
  %4026 = vmatprep.subr.mxu0 0.0
  %4027 = vmatpush1.msra.mxu0 0.0
  %4028 = vmatprep.subr.mxu0 0.0
  %4029 = vmatpush1.msra.mxu0 0.0
  %4030 = vmatprep.subr.mxu0 0.0
  %4031 = vmatpush1.msra.mxu0 0.0
  %4032 = vmatprep.subr.mxu0 0.0
  %4033 = vmatpush1.msra.mxu0 0.0
  %4034 = vmatprep.subr.mxu0 0.0
  %4035 = vmatpush1.msra.mxu0 0.0
  %4036 = vmatprep.subr.mxu0 0.0
  %4037 = vmatpush1.msra.mxu0 0.0
  %4038 = vmatprep.subr.mxu0 0.0
  %4039 = vmatpush1.msra.mxu0 0.0
  %4040 = vmatprep.subr.mxu0 0.0
  %4041 = vmatpush1.msra.mxu0 0.0
  %4042 = vmatprep.subr.mxu0 0.0
  %4043 = vmatpush1.msra.mxu0 0.0
  %4044 = vmatprep.subr.mxu0 0.0
  %4045 = vmatpush1.msra.mxu0 0.0
  %4046 = vmatprep.subr.mxu0 0.0
  %4047 = vmatpush1.msra.mxu0 0.0
  %4048 = vmatprep.subr.mxu0 0.0
  %4049 = vmatpush1.msra.mxu0 0.0
  %4050 = vmatprep.subr.mxu0 0.0
  %4051 = vmatpush1.msra.mxu0 0.0
  %4052 = vmatprep.subr.mxu0 0.0
  %4053 = vmatpush1.msra.mxu0 0.0
  %4054 = vmatprep.subr.mxu0 0.0
  %4055 = vmatpush1.msra.mxu0 0.0
  %4056 = vmatprep.subr.mxu0 0.0
  %4057 = vmatpush1.msra.mxu0 0.0
  %4058 = vmatprep.subr.mxu0 0.0
  %4059 = vmatpush1.msra.mxu0 0.0
  %4060 = vmatprep.subr.mxu0 0.0
  %4061 = vmatpush1.msra.mxu0 0.0
  %4062 = vmatprep.subr.mxu0 0.0
  %4063 = vmatpush1.msra.mxu0 0.0
  %4064 = vmatprep.subr.mxu0 0.0
  %4065 = vmatpush1.msra.mxu0 0.0
  %4066 = vmatprep.subr.mxu0 0.0
  %4067 = vmatpush1.msra.mxu0 0.0
  %4068 = vmatprep.subr.mxu0 0.0
  %4069 = vmatpush1.msra.mxu0 0.0
  %4070 = vmatprep.mubr.f32.mxu0 0.0
  %4071 = vmatmul.mubr.f32.gmra.mrb[0].mxu0 %v4004
  %v4072 = vpop.f32.mrb[0].mxu0
  %v4073 = vadd.f32 0.0, %v4072
  %v4074 = vpop.f32.mrb[0].mxu0
  %4075 = vdwg.mxu0
  %v4077 = vsel %vm412, %v3827, 0
  %4079 = vmatprep.subr.mxu0 0.0
  %4080 = vmatpush1.msra.mxu0 %v2671
  %4081 = vmatprep.subr.mxu0 0.0
  %4082 = vmatpush1.msra.mxu0 0.0
  %4083 = vmatprep.subr.mxu0 0.0
  %4084 = vmatpush1.msra.mxu0 0.0
  %4085 = vmatprep.subr.mxu0 0.0
  %4086 = vmatpush1.msra.mxu0 0.0
  %4087 = vmatprep.subr.mxu0 0.0
  %4088 = vmatpush1.msra.mxu0 0.0
  %4089 = vmatprep.subr.mxu0 0.0
  %4090 = vmatpush1.msra.mxu0 0.0
  %4091 = vmatprep.subr.mxu0 0.0
  %4092 = vmatpush1.msra.mxu0 0.0
  %4093 = vmatprep.subr.mxu0 0.0
  %4094 = vmatpush1.msra.mxu0 0.0
  %4095 = vmatprep.subr.mxu0 0.0
  %4096 = vmatpush1.msra.mxu0 0.0
  %4097 = vmatprep.subr.mxu0 0.0
  %4098 = vmatpush1.msra.mxu0 0.0
  %4099 = vmatprep.subr.mxu0 0.0
  %4100 = vmatpush1.msra.mxu0 0.0
  %4101 = vmatprep.subr.mxu0 0.0
  %4102 = vmatpush1.msra.mxu0 0.0
  %4103 = vmatprep.subr.mxu0 0.0
  %4104 = vmatpush1.msra.mxu0 0.0
  %4105 = vmatprep.subr.mxu0 0.0
  %4106 = vmatpush1.msra.mxu0 0.0
  %4107 = vmatprep.subr.mxu0 0.0
  %4108 = vmatpush1.msra.mxu0 0.0
  %4109 = vmatprep.subr.mxu0 0.0
  %4110 = vmatpush1.msra.mxu0 0.0
  %4111 = vmatprep.subr.mxu0 0.0
  %4112 = vmatpush1.msra.mxu0 0.0
  %4113 = vmatprep.subr.mxu0 0.0
  %4114 = vmatpush1.msra.mxu0 0.0
  %4115 = vmatprep.subr.mxu0 0.0
  %4116 = vmatpush1.msra.mxu0 0.0
  %4117 = vmatprep.subr.mxu0 0.0
  %4118 = vmatpush1.msra.mxu0 0.0
  %4119 = vmatprep.subr.mxu0 0.0
  %4120 = vmatpush1.msra.mxu0 0.0
  %4121 = vmatprep.subr.mxu0 0.0
  %4122 = vmatpush1.msra.mxu0 0.0
  %4123 = vmatprep.subr.mxu0 0.0
  %4124 = vmatpush1.msra.mxu0 0.0
  %4125 = vmatprep.subr.mxu0 0.0
  %4126 = vmatpush1.msra.mxu0 0.0
  %4127 = vmatprep.subr.mxu0 0.0
  %4128 = vmatpush1.msra.mxu0 0.0
  %4129 = vmatprep.subr.mxu0 0.0
  %4130 = vmatpush1.msra.mxu0 0.0
  %4131 = vmatprep.subr.mxu0 0.0
  %4132 = vmatpush1.msra.mxu0 0.0
  %4133 = vmatprep.subr.mxu0 0.0
  %4134 = vmatpush1.msra.mxu0 0.0
  %4135 = vmatprep.subr.mxu0 0.0
  %4136 = vmatpush1.msra.mxu0 0.0
  %4137 = vmatprep.subr.mxu0 0.0
  %4138 = vmatpush1.msra.mxu0 0.0
  %4139 = vmatprep.subr.mxu0 0.0
  %4140 = vmatpush1.msra.mxu0 0.0
  %4141 = vmatprep.subr.mxu0 0.0
  %4142 = vmatpush1.msra.mxu0 0.0
  %4143 = vmatprep.mubr.f32.mxu0 0.0
  %4144 = vmatmul.mubr.f32.gmra.mrb[0].mxu0 %v4077
  %v4145 = vpop.f32.mrb[0].mxu0
  %v4146 = vadd.f32 %v4073, %v4145
  %v4147 = vpop.f32.mrb[0].mxu0
  %4148 = vdwg.mxu0
  %4149 = vrot.lane.b32.xlu0 %v2470, 112
  %v4150 = vpop.permute.xlu0 %4149
  %4151 = vrot.lane.b32.xlu0 %v3661, 112
  %v4152 = vpop.permute.xlu0 %4151
  %4153 = vrot.lane.b32.xlu0 %v3660, 112
  %v4154 = vpop.permute.xlu0 %4153
  %v4155 = vsel %vm412, %v4150, 0
  %v4157 = vsel %vm412, %v4152, 0
  %v4159 = vsel %vm412, %v4154, 0
  %4161 = vmatprep.subr.mxu0 0.0
  %4162 = vmatpush1.xpose.msra.mxu0 %v4157
  %4163 = vmatprep.subr.mxu0 0.0
  %4164 = vmatpush1.xpose.msra.mxu0 %v4159
  %4165 = vmatprep.subr.mxu0 0.0
  %4166 = vmatpush1.xpose.msra.mxu0 0.0
  %4167 = vmatprep.subr.mxu0 0.0
  %4168 = vmatpush1.xpose.msra.mxu0 0.0
  %4169 = vmatprep.subr.mxu0 0.0
  %4170 = vmatpush1.xpose.msra.mxu0 0.0
  %4171 = vmatprep.subr.mxu0 0.0
  %4172 = vmatpush1.xpose.msra.mxu0 0.0
  %4173 = vmatprep.subr.mxu0 0.0
  %4174 = vmatpush1.xpose.msra.mxu0 0.0
  %4175 = vmatprep.subr.mxu0 0.0
  %4176 = vmatpush1.xpose.msra.mxu0 0.0
  %4177 = vmatprep.subr.mxu0 0.0
  %4178 = vmatpush1.xpose.msra.mxu0 0.0
  %4179 = vmatprep.subr.mxu0 0.0
  %4180 = vmatpush1.xpose.msra.mxu0 0.0
  %4181 = vmatprep.subr.mxu0 0.0
  %4182 = vmatpush1.xpose.msra.mxu0 0.0
  %4183 = vmatprep.subr.mxu0 0.0
  %4184 = vmatpush1.xpose.msra.mxu0 0.0
  %4185 = vmatprep.subr.mxu0 0.0
  %4186 = vmatpush1.xpose.msra.mxu0 0.0
  %4187 = vmatprep.subr.mxu0 0.0
  %4188 = vmatpush1.xpose.msra.mxu0 0.0
  %4189 = vmatprep.subr.mxu0 0.0
  %4190 = vmatpush1.xpose.msra.mxu0 0.0
  %4191 = vmatprep.subr.mxu0 0.0
  %4192 = vmatpush1.xpose.msra.mxu0 0.0
  %4193 = vmatprep.subr.mxu0 0.0
  %4194 = vmatpush1.xpose.msra.mxu0 0.0
  %4195 = vmatprep.subr.mxu0 0.0
  %4196 = vmatpush1.xpose.msra.mxu0 0.0
  %4197 = vmatprep.subr.mxu0 0.0
  %4198 = vmatpush1.xpose.msra.mxu0 0.0
  %4199 = vmatprep.subr.mxu0 0.0
  %4200 = vmatpush1.xpose.msra.mxu0 0.0
  %4201 = vmatprep.subr.mxu0 0.0
  %4202 = vmatpush1.xpose.msra.mxu0 0.0
  %4203 = vmatprep.subr.mxu0 0.0
  %4204 = vmatpush1.xpose.msra.mxu0 0.0
  %4205 = vmatprep.subr.mxu0 0.0
  %4206 = vmatpush1.xpose.msra.mxu0 0.0
  %4207 = vmatprep.subr.mxu0 0.0
  %4208 = vmatpush1.xpose.msra.mxu0 0.0
  %4209 = vmatprep.subr.mxu0 0.0
  %4210 = vmatpush1.xpose.msra.mxu0 0.0
  %4211 = vmatprep.subr.mxu0 0.0
  %4212 = vmatpush1.xpose.msra.mxu0 0.0
  %4213 = vmatprep.subr.mxu0 0.0
  %4214 = vmatpush1.xpose.msra.mxu0 0.0
  %4215 = vmatprep.subr.mxu0 0.0
  %4216 = vmatpush1.xpose.msra.mxu0 0.0
  %4217 = vmatprep.subr.mxu0 0.0
  %4218 = vmatpush1.xpose.msra.mxu0 0.0
  %4219 = vmatprep.subr.mxu0 0.0
  %4220 = vmatpush1.xpose.msra.mxu0 0.0
  %4221 = vmatprep.subr.mxu0 0.0
  %4222 = vmatpush1.xpose.msra.mxu0 0.0
  %4223 = vmatprep.subr.mxu0 0.0
  %4224 = vmatpush1.xpose.msra.mxu0 0.0
  %4225 = vmatprep.mubr.f32.mxu0 0.0
  %4226 = vmatmul.mubr.f32.gmra.mrb[0].mxu0 %v4155
  %v4227 = vpop.f32.mrb[0].mxu0
  %v4228 = vadd.f32 0.0, %v4227
  %v4229 = vpop.f32.mrb[0].mxu0
  %4230 = vdwg.mxu0
  %v4231 = vsel %vm2754, %v4228, -inf
  %4232 = vmax.xlane.f32.xlu0 %v4231
  %v4233 = vpop.xlane.xlu0 %4232
  %v4234 = vsub.f32 %v4228, %v4233
  %v4235 = vmul.f32 %v4234, 1.442695
  %v4236 = vpow.pop %v4235
  %v4237 = vsel %vm2754, %v4236, 0.0
  %4238 = vadd.xlane.f32.xlu0 %v4237
  %v4239 = vpop.xlane.xlu0 %4238
  %v4240 = vrcp.pop %v4239
  %v4241 = vmul.f32 %v4236, %v4240
  %4242 = vrot.lane.b32.xlu0 %v3753, 112
  %v4243 = vpop.permute.xlu0 %4242
  %4244 = vrot.lane.b32.xlu0 %v3752, 112
  %v4245 = vpop.permute.xlu0 %4244
  %v4248 = vsel %vm2754, %v4241, 0
  %v4250 = vsel %vm2769, %v4245, 0
  %4252 = vmatprep.subr.mxu0 0.0
  %4253 = vmatpush1.msra.mxu0 %v4243
  %4254 = vmatprep.subr.mxu0 0.0
  %4255 = vmatpush1.msra.mxu0 %v4250
  %4256 = vmatprep.subr.mxu0 0.0
  %4257 = vmatpush1.msra.mxu0 0.0
  %4258 = vmatprep.subr.mxu0 0.0
  %4259 = vmatpush1.msra.mxu0 0.0
  %4260 = vmatprep.subr.mxu0 0.0
  %4261 = vmatpush1.msra.mxu0 0.0
  %4262 = vmatprep.subr.mxu0 0.0
  %4263 = vmatpush1.msra.mxu0 0.0
  %4264 = vmatprep.subr.mxu0 0.0
  %4265 = vmatpush1.msra.mxu0 0.0
  %4266 = vmatprep.subr.mxu0 0.0
  %4267 = vmatpush1.msra.mxu0 0.0
  %4268 = vmatprep.subr.mxu0 0.0
  %4269 = vmatpush1.msra.mxu0 0.0
  %4270 = vmatprep.subr.mxu0 0.0
  %4271 = vmatpush1.msra.mxu0 0.0
  %4272 = vmatprep.subr.mxu0 0.0
  %4273 = vmatpush1.msra.mxu0 0.0
  %4274 = vmatprep.subr.mxu0 0.0
  %4275 = vmatpush1.msra.mxu0 0.0
  %4276 = vmatprep.subr.mxu0 0.0
  %4277 = vmatpush1.msra.mxu0 0.0
  %4278 = vmatprep.subr.mxu0 0.0
  %4279 = vmatpush1.msra.mxu0 0.0
  %4280 = vmatprep.subr.mxu0 0.0
  %4281 = vmatpush1.msra.mxu0 0.0
  %4282 = vmatprep.subr.mxu0 0.0
  %4283 = vmatpush1.msra.mxu0 0.0
  %4284 = vmatprep.subr.mxu0 0.0
  %4285 = vmatpush1.msra.mxu0 0.0
  %4286 = vmatprep.subr.mxu0 0.0
  %4287 = vmatpush1.msra.mxu0 0.0
  %4288 = vmatprep.subr.mxu0 0.0
  %4289 = vmatpush1.msra.mxu0 0.0
  %4290 = vmatprep.subr.mxu0 0.0
  %4291 = vmatpush1.msra.mxu0 0.0
  %4292 = vmatprep.subr.mxu0 0.0
  %4293 = vmatpush1.msra.mxu0 0.0
  %4294 = vmatprep.subr.mxu0 0.0
  %4295 = vmatpush1.msra.mxu0 0.0
  %4296 = vmatprep.subr.mxu0 0.0
  %4297 = vmatpush1.msra.mxu0 0.0
  %4298 = vmatprep.subr.mxu0 0.0
  %4299 = vmatpush1.msra.mxu0 0.0
  %4300 = vmatprep.subr.mxu0 0.0
  %4301 = vmatpush1.msra.mxu0 0.0
  %4302 = vmatprep.subr.mxu0 0.0
  %4303 = vmatpush1.msra.mxu0 0.0
  %4304 = vmatprep.subr.mxu0 0.0
  %4305 = vmatpush1.msra.mxu0 0.0
  %4306 = vmatprep.subr.mxu0 0.0
  %4307 = vmatpush1.msra.mxu0 0.0
  %4308 = vmatprep.subr.mxu0 0.0
  %4309 = vmatpush1.msra.mxu0 0.0
  %4310 = vmatprep.subr.mxu0 0.0
  %4311 = vmatpush1.msra.mxu0 0.0
  %4312 = vmatprep.subr.mxu0 0.0
  %4313 = vmatpush1.msra.mxu0 0.0
  %4314 = vmatprep.subr.mxu0 0.0
  %4315 = vmatpush1.msra.mxu0 0.0
  %4316 = vmatprep.mubr.f32.mxu0 0.0
  %4317 = vmatmul.mubr.f32.gmra.mrb[0].mxu0 %v4248
  %v4318 = vpop.f32.mrb[0].mxu0
  %v4319 = vadd.f32 0.0, %v4318
  %v4320 = vpop.f32.mrb[0].mxu0
  %4321 = vdwg.mxu0
  %v4323 = vsel %vm412, %v4319, 0
  %4325 = vmatprep.subr.mxu0 0.0
  %4326 = vmatpush1.msra.mxu0 %v2673
  %4327 = vmatprep.subr.mxu0 0.0
  %4328 = vmatpush1.msra.mxu0 0.0
  %4329 = vmatprep.subr.mxu0 0.0
  %4330 = vmatpush1.msra.mxu0 0.0
  %4331 = vmatprep.subr.mxu0 0.0
  %4332 = vmatpush1.msra.mxu0 0.0
  %4333 = vmatprep.subr.mxu0 0.0
  %4334 = vmatpush1.msra.mxu0 0.0
  %4335 = vmatprep.subr.mxu0 0.0
  %4336 = vmatpush1.msra.mxu0 0.0
  %4337 = vmatprep.subr.mxu0 0.0
  %4338 = vmatpush1.msra.mxu0 0.0
  %4339 = vmatprep.subr.mxu0 0.0
  %4340 = vmatpush1.msra.mxu0 0.0
  %4341 = vmatprep.subr.mxu0 0.0
  %4342 = vmatpush1.msra.mxu0 0.0
  %4343 = vmatprep.subr.mxu0 0.0
  %4344 = vmatpush1.msra.mxu0 0.0
  %4345 = vmatprep.subr.mxu0 0.0
  %4346 = vmatpush1.msra.mxu0 0.0
  %4347 = vmatprep.subr.mxu0 0.0
  %4348 = vmatpush1.msra.mxu0 0.0
  %4349 = vmatprep.subr.mxu0 0.0
  %4350 = vmatpush1.msra.mxu0 0.0
  %4351 = vmatprep.subr.mxu0 0.0
  %4352 = vmatpush1.msra.mxu0 0.0
  %4353 = vmatprep.subr.mxu0 0.0
  %4354 = vmatpush1.msra.mxu0 0.0
  %4355 = vmatprep.subr.mxu0 0.0
  %4356 = vmatpush1.msra.mxu0 0.0
  %4357 = vmatprep.subr.mxu0 0.0
  %4358 = vmatpush1.msra.mxu0 0.0
  %4359 = vmatprep.subr.mxu0 0.0
  %4360 = vmatpush1.msra.mxu0 0.0
  %4361 = vmatprep.subr.mxu0 0.0
  %4362 = vmatpush1.msra.mxu0 0.0
  %4363 = vmatprep.subr.mxu0 0.0
  %4364 = vmatpush1.msra.mxu0 0.0
  %4365 = vmatprep.subr.mxu0 0.0
  %4366 = vmatpush1.msra.mxu0 0.0
  %4367 = vmatprep.subr.mxu0 0.0
  %4368 = vmatpush1.msra.mxu0 0.0
  %4369 = vmatprep.subr.mxu0 0.0
  %4370 = vmatpush1.msra.mxu0 0.0
  %4371 = vmatprep.subr.mxu0 0.0
  %4372 = vmatpush1.msra.mxu0 0.0
  %4373 = vmatprep.subr.mxu0 0.0
  %4374 = vmatpush1.msra.mxu0 0.0
  %4375 = vmatprep.subr.mxu0 0.0
  %4376 = vmatpush1.msra.mxu0 0.0
  %4377 = vmatprep.subr.mxu0 0.0
  %4378 = vmatpush1.msra.mxu0 0.0
  %4379 = vmatprep.subr.mxu0 0.0
  %4380 = vmatpush1.msra.mxu0 0.0
  %4381 = vmatprep.subr.mxu0 0.0
  %4382 = vmatpush1.msra.mxu0 0.0
  %4383 = vmatprep.subr.mxu0 0.0
  %4384 = vmatpush1.msra.mxu0 0.0
  %4385 = vmatprep.subr.mxu0 0.0
  %4386 = vmatpush1.msra.mxu0 0.0
  %4387 = vmatprep.subr.mxu0 0.0
  %4388 = vmatpush1.msra.mxu0 0.0
  %4389 = vmatprep.mubr.f32.mxu0 0.0
  %4390 = vmatmul.mubr.f32.gmra.mrb[0].mxu0 %v4323
  %v4391 = vpop.f32.mrb[0].mxu0
  %v4392 = vadd.f32 0.0, %v4391
  %v4393 = vpop.f32.mrb[0].mxu0
  %4394 = vdwg.mxu0
  %v4395 = vadd.f32 %v4146, %v4392
  %4396 = vrot.lane.b32.xlu0 %v2470, 104
  %v4397 = vpop.permute.xlu0 %4396
  %4398 = vrot.lane.b32.xlu0 %v3661, 104
  %v4399 = vpop.permute.xlu0 %4398
  %4400 = vrot.lane.b32.xlu0 %v3660, 104
  %v4401 = vpop.permute.xlu0 %4400
  %v4402 = vsel %vm412, %v4397, 0
  %v4404 = vsel %vm412, %v4399, 0
  %v4406 = vsel %vm412, %v4401, 0
  %4408 = vmatprep.subr.mxu0 0.0
  %4409 = vmatpush1.xpose.msra.mxu0 %v4404
  %4410 = vmatprep.subr.mxu0 0.0
  %4411 = vmatpush1.xpose.msra.mxu0 %v4406
  %4412 = vmatprep.subr.mxu0 0.0
  %4413 = vmatpush1.xpose.msra.mxu0 0.0
  %4414 = vmatprep.subr.mxu0 0.0
  %4415 = vmatpush1.xpose.msra.mxu0 0.0
  %4416 = vmatprep.subr.mxu0 0.0
  %4417 = vmatpush1.xpose.msra.mxu0 0.0
  %4418 = vmatprep.subr.mxu0 0.0
  %4419 = vmatpush1.xpose.msra.mxu0 0.0
  %4420 = vmatprep.subr.mxu0 0.0
  %4421 = vmatpush1.xpose.msra.mxu0 0.0
  %4422 = vmatprep.subr.mxu0 0.0
  %4423 = vmatpush1.xpose.msra.mxu0 0.0
  %4424 = vmatprep.subr.mxu0 0.0
  %4425 = vmatpush1.xpose.msra.mxu0 0.0
  %4426 = vmatprep.subr.mxu0 0.0
  %4427 = vmatpush1.xpose.msra.mxu0 0.0
  %4428 = vmatprep.subr.mxu0 0.0
  %4429 = vmatpush1.xpose.msra.mxu0 0.0
  %4430 = vmatprep.subr.mxu0 0.0
  %4431 = vmatpush1.xpose.msra.mxu0 0.0
  %4432 = vmatprep.subr.mxu0 0.0
  %4433 = vmatpush1.xpose.msra.mxu0 0.0
  %4434 = vmatprep.subr.mxu0 0.0
  %4435 = vmatpush1.xpose.msra.mxu0 0.0
  %4436 = vmatprep.subr.mxu0 0.0
  %4437 = vmatpush1.xpose.msra.mxu0 0.0
  %4438 = vmatprep.subr.mxu0 0.0
  %4439 = vmatpush1.xpose.msra.mxu0 0.0
  %4440 = vmatprep.subr.mxu0 0.0
  %4441 = vmatpush1.xpose.msra.mxu0 0.0
  %4442 = vmatprep.subr.mxu0 0.0
  %4443 = vmatpush1.xpose.msra.mxu0 0.0
  %4444 = vmatprep.subr.mxu0 0.0
  %4445 = vmatpush1.xpose.msra.mxu0 0.0
  %4446 = vmatprep.subr.mxu0 0.0
  %4447 = vmatpush1.xpose.msra.mxu0 0.0
  %4448 = vmatprep.subr.mxu0 0.0
  %4449 = vmatpush1.xpose.msra.mxu0 0.0
  %4450 = vmatprep.subr.mxu0 0.0
  %4451 = vmatpush1.xpose.msra.mxu0 0.0
  %4452 = vmatprep.subr.mxu0 0.0
  %4453 = vmatpush1.xpose.msra.mxu0 0.0
  %4454 = vmatprep.subr.mxu0 0.0
  %4455 = vmatpush1.xpose.msra.mxu0 0.0
  %4456 = vmatprep.subr.mxu0 0.0
  %4457 = vmatpush1.xpose.msra.mxu0 0.0
  %4458 = vmatprep.subr.mxu0 0.0
  %4459 = vmatpush1.xpose.msra.mxu0 0.0
  %4460 = vmatprep.subr.mxu0 0.0
  %4461 = vmatpush1.xpose.msra.mxu0 0.0
  %4462 = vmatprep.subr.mxu0 0.0
  %4463 = vmatpush1.xpose.msra.mxu0 0.0
  %4464 = vmatprep.subr.mxu0 0.0
  %4465 = vmatpush1.xpose.msra.mxu0 0.0
  %4466 = vmatprep.subr.mxu0 0.0
  %4467 = vmatpush1.xpose.msra.mxu0 0.0
  %4468 = vmatprep.subr.mxu0 0.0
  %4469 = vmatpush1.xpose.msra.mxu0 0.0
  %4470 = vmatprep.subr.mxu0 0.0
  %4471 = vmatpush1.xpose.msra.mxu0 0.0
  %4472 = vmatprep.mubr.f32.mxu0 0.0
  %4473 = vmatmul.mubr.f32.gmra.mrb[0].mxu0 %v4402
  %v4474 = vpop.f32.mrb[0].mxu0
  %v4475 = vadd.f32 0.0, %v4474
  %v4476 = vpop.f32.mrb[0].mxu0
  %4477 = vdwg.mxu0
  %v4478 = vsel %vm2754, %v4475, -inf
  %4479 = vmax.xlane.f32.xlu0 %v4478
  %v4480 = vpop.xlane.xlu0 %4479
  %v4481 = vsub.f32 %v4475, %v4480
  %v4482 = vmul.f32 %v4481, 1.442695
  %v4483 = vpow.pop %v4482
  %v4484 = vsel %vm2754, %v4483, 0.0
  %4485 = vadd.xlane.f32.xlu0 %v4484
  %v4486 = vpop.xlane.xlu0 %4485
  %v4487 = vrcp.pop %v4486
  %v4488 = vmul.f32 %v4483, %v4487
  %4489 = vrot.lane.b32.xlu0 %v3753, 104
  %v4490 = vpop.permute.xlu0 %4489
  %4491 = vrot.lane.b32.xlu0 %v3752, 104
  %v4492 = vpop.permute.xlu0 %4491
  %v4495 = vsel %vm2754, %v4488, 0
  %v4497 = vsel %vm2769, %v4492, 0
  %4499 = vmatprep.subr.mxu0 0.0
  %4500 = vmatpush1.msra.mxu0 %v4490
  %4501 = vmatprep.subr.mxu0 0.0
  %4502 = vmatpush1.msra.mxu0 %v4497
  %4503 = vmatprep.subr.mxu0 0.0
  %4504 = vmatpush1.msra.mxu0 0.0
  %4505 = vmatprep.subr.mxu0 0.0
  %4506 = vmatpush1.msra.mxu0 0.0
  %4507 = vmatprep.subr.mxu0 0.0
  %4508 = vmatpush1.msra.mxu0 0.0
  %4509 = vmatprep.subr.mxu0 0.0
  %4510 = vmatpush1.msra.mxu0 0.0
  %4511 = vmatprep.subr.mxu0 0.0
  %4512 = vmatpush1.msra.mxu0 0.0
  %4513 = vmatprep.subr.mxu0 0.0
  %4514 = vmatpush1.msra.mxu0 0.0
  %4515 = vmatprep.subr.mxu0 0.0
  %4516 = vmatpush1.msra.mxu0 0.0
  %4517 = vmatprep.subr.mxu0 0.0
  %4518 = vmatpush1.msra.mxu0 0.0
  %4519 = vmatprep.subr.mxu0 0.0
  %4520 = vmatpush1.msra.mxu0 0.0
  %4521 = vmatprep.subr.mxu0 0.0
  %4522 = vmatpush1.msra.mxu0 0.0
  %4523 = vmatprep.subr.mxu0 0.0
  %4524 = vmatpush1.msra.mxu0 0.0
  %4525 = vmatprep.subr.mxu0 0.0
  %4526 = vmatpush1.msra.mxu0 0.0
  %4527 = vmatprep.subr.mxu0 0.0
  %4528 = vmatpush1.msra.mxu0 0.0
  %4529 = vmatprep.subr.mxu0 0.0
  %4530 = vmatpush1.msra.mxu0 0.0
  %4531 = vmatprep.subr.mxu0 0.0
  %4532 = vmatpush1.msra.mxu0 0.0
  %4533 = vmatprep.subr.mxu0 0.0
  %4534 = vmatpush1.msra.mxu0 0.0
  %4535 = vmatprep.subr.mxu0 0.0
  %4536 = vmatpush1.msra.mxu0 0.0
  %4537 = vmatprep.subr.mxu0 0.0
  %4538 = vmatpush1.msra.mxu0 0.0
  %4539 = vmatprep.subr.mxu0 0.0
  %4540 = vmatpush1.msra.mxu0 0.0
  %4541 = vmatprep.subr.mxu0 0.0
  %4542 = vmatpush1.msra.mxu0 0.0
  %4543 = vmatprep.subr.mxu0 0.0
  %4544 = vmatpush1.msra.mxu0 0.0
  %4545 = vmatprep.subr.mxu0 0.0
  %4546 = vmatpush1.msra.mxu0 0.0
  %4547 = vmatprep.subr.mxu0 0.0
  %4548 = vmatpush1.msra.mxu0 0.0
  %4549 = vmatprep.subr.mxu0 0.0
  %4550 = vmatpush1.msra.mxu0 0.0
  %4551 = vmatprep.subr.mxu0 0.0
  %4552 = vmatpush1.msra.mxu0 0.0
  %4553 = vmatprep.subr.mxu0 0.0
  %4554 = vmatpush1.msra.mxu0 0.0
  %4555 = vmatprep.subr.mxu0 0.0
  %4556 = vmatpush1.msra.mxu0 0.0
  %4557 = vmatprep.subr.mxu0 0.0
  %4558 = vmatpush1.msra.mxu0 0.0
  %4559 = vmatprep.subr.mxu0 0.0
  %4560 = vmatpush1.msra.mxu0 0.0
  %4561 = vmatprep.subr.mxu0 0.0
  %4562 = vmatpush1.msra.mxu0 0.0
  %4563 = vmatprep.mubr.f32.mxu0 0.0
  %4564 = vmatmul.mubr.f32.gmra.mrb[0].mxu0 %v4495
  %v4565 = vpop.f32.mrb[0].mxu0
  %v4566 = vadd.f32 0.0, %v4565
  %v4567 = vpop.f32.mrb[0].mxu0
  %4568 = vdwg.mxu0
  %v4570 = vsel %vm412, %v4566, 0
  %4572 = vmatprep.subr.mxu0 0.0
  %4573 = vmatpush1.msra.mxu0 %v2674
  %4574 = vmatprep.subr.mxu0 0.0
  %4575 = vmatpush1.msra.mxu0 0.0
  %4576 = vmatprep.subr.mxu0 0.0
  %4577 = vmatpush1.msra.mxu0 0.0
  %4578 = vmatprep.subr.mxu0 0.0
  %4579 = vmatpush1.msra.mxu0 0.0
  %4580 = vmatprep.subr.mxu0 0.0
  %4581 = vmatpush1.msra.mxu0 0.0
  %4582 = vmatprep.subr.mxu0 0.0
  %4583 = vmatpush1.msra.mxu0 0.0
  %4584 = vmatprep.subr.mxu0 0.0
  %4585 = vmatpush1.msra.mxu0 0.0
  %4586 = vmatprep.subr.mxu0 0.0
  %4587 = vmatpush1.msra.mxu0 0.0
  %4588 = vmatprep.subr.mxu0 0.0
  %4589 = vmatpush1.msra.mxu0 0.0
  %4590 = vmatprep.subr.mxu0 0.0
  %4591 = vmatpush1.msra.mxu0 0.0
  %4592 = vmatprep.subr.mxu0 0.0
  %4593 = vmatpush1.msra.mxu0 0.0
  %4594 = vmatprep.subr.mxu0 0.0
  %4595 = vmatpush1.msra.mxu0 0.0
  %4596 = vmatprep.subr.mxu0 0.0
  %4597 = vmatpush1.msra.mxu0 0.0
  %4598 = vmatprep.subr.mxu0 0.0
  %4599 = vmatpush1.msra.mxu0 0.0
  %4600 = vmatprep.subr.mxu0 0.0
  %4601 = vmatpush1.msra.mxu0 0.0
  %4602 = vmatprep.subr.mxu0 0.0
  %4603 = vmatpush1.msra.mxu0 0.0
  %4604 = vmatprep.subr.mxu0 0.0
  %4605 = vmatpush1.msra.mxu0 0.0
  %4606 = vmatprep.subr.mxu0 0.0
  %4607 = vmatpush1.msra.mxu0 0.0
  %4608 = vmatprep.subr.mxu0 0.0
  %4609 = vmatpush1.msra.mxu0 0.0
  %4610 = vmatprep.subr.mxu0 0.0
  %4611 = vmatpush1.msra.mxu0 0.0
  %4612 = vmatprep.subr.mxu0 0.0
  %4613 = vmatpush1.msra.mxu0 0.0
  %4614 = vmatprep.subr.mxu0 0.0
  %4615 = vmatpush1.msra.mxu0 0.0
  %4616 = vmatprep.subr.mxu0 0.0
  %4617 = vmatpush1.msra.mxu0 0.0
  %4618 = vmatprep.subr.mxu0 0.0
  %4619 = vmatpush1.msra.mxu0 0.0
  %4620 = vmatprep.subr.mxu0 0.0
  %4621 = vmatpush1.msra.mxu0 0.0
  %4622 = vmatprep.subr.mxu0 0.0
  %4623 = vmatpush1.msra.mxu0 0.0
  %4624 = vmatprep.subr.mxu0 0.0
  %4625 = vmatpush1.msra.mxu0 0.0
  %4626 = vmatprep.subr.mxu0 0.0
  %4627 = vmatpush1.msra.mxu0 0.0
  %4628 = vmatprep.subr.mxu0 0.0
  %4629 = vmatpush1.msra.mxu0 0.0
  %4630 = vmatprep.subr.mxu0 0.0
  %4631 = vmatpush1.msra.mxu0 0.0
  %4632 = vmatprep.subr.mxu0 0.0
  %4633 = vmatpush1.msra.mxu0 0.0
  %4634 = vmatprep.subr.mxu0 0.0
  %4635 = vmatpush1.msra.mxu0 0.0
  %4636 = vmatprep.mubr.f32.mxu0 0.0
  %4637 = vmatmul.mubr.f32.gmra.mrb[0].mxu0 %v4570
  %v4638 = vpop.f32.mrb[0].mxu0
  %v4639 = vadd.f32 0.0, %v4638
  %v4640 = vpop.f32.mrb[0].mxu0
  %4641 = vdwg.mxu0
  %v4642 = vadd.f32 %v4395, %v4639
  %v4643 = vld [vmem:[%s39] sm:$0x1]
  %v4645 = vlaneseq
  %v4646 = vshrl.u32 %v4645, 7
  %v4647 = vsub.s32 0, %v4646
  %v4648 = vrot.slane %v4643, %v4647
  %v4650 = vadd.f32 %v3656, %v4648
  %v4651 = vadd.f32 %v4642, %v4648
  %v4652 = vadd.f32 %v2367, %v4650
  %v4653 = vadd.f32 %v2368, %v4651
  %v4654 = vsel %vm146, %v4652, 0.0
  %4655 = vadd.xlane.f32.xlu0 %v4654
  %v4656 = vpop.xlane.xlu0 %4655
  %v4657 = vsel %vm146, %v4653, 0.0
  %4658 = vadd.xlane.f32.xlu0 %v4657
  %v4659 = vpop.xlane.xlu0 %4658
  %v4660 = vmul.f32 %v4656, %v2330
  %v4661 = vmul.f32 %v4659, %v2330
  %v4662 = vsub.f32 %v4652, %v4660
  %v4663 = vsub.f32 %v4653, %v4661
  %v4664 = vmul.f32 %v4662, %v4662
  %v4665 = vmul.f32 %v4663, %v4663
  %v4666 = vsel %vm146, %v4664, 0.0
  %4667 = vadd.xlane.f32.xlu0 %v4666
  %v4668 = vpop.xlane.xlu0 %4667
  %v4669 = vsel %vm146, %v4665, 0.0
  %4670 = vadd.xlane.f32.xlu0 %v4669
  %v4671 = vpop.xlane.xlu0 %4670
  %v4672 = vmul.f32 %v4668, %v2330
  %v4673 = vmul.f32 %v4671, %v2330
  %v4674 = vadd.f32 %v4672, 1e-05
  %v4675 = vadd.f32 %v4673, 1e-05
  %v4676 = vrsqrt.pop %v4674
  %v4677 = vrsqrt.pop %v4675
  %v4678 = vmul.f32 %v4662, %v4676
  %v4679 = vmul.f32 %v4663, %v4677
  %v4680 = vld [vmem:[%s53] sm:$0x1]
  %v4682 = vlaneseq
  %v4683 = vshrl.u32 %v4682, 7
  %v4684 = vsub.s32 0, %v4683
  %v4685 = vrot.slane %v4680, %v4684
  %v4687 = vmul.f32 %v4678, %v4685
  %v4688 = vmul.f32 %v4679, %v4685
  %v4689 = vld [vmem:[%s55] sm:$0x1]
  %v4691 = vlaneseq
  %v4692 = vshrl.u32 %v4691, 7
  %v4693 = vsub.s32 0, %v4692
  %v4694 = vrot.slane %v4689, %v4693
  %v4696 = vadd.f32 %v4687, %v4694
  %v4697 = vadd.f32 %v4688, %v4694
  %v4698 = vld [vmem:[%s41] sm:$0xff]
  %v4699 = vld [vmem:[%s41 + $0x8] sm:$0xff]
  %v4700 = vld [vmem:[%s41 + $0x10] sm:$0xff]
  %v4701 = vld [vmem:[%s41 + $0x18] sm:$0xff]
  %v4702 = vld [vmem:[%s43] sm:$0x1]
  %v4704 = vlaneseq
  %v4705 = vshrl.u32 %v4704, 7
  %v4706 = vsub.s32 0, %v4705
  %v4707 = vrot.slane %v4702, %v4706
  %v4710 = vsel %vm146, %v4696, 0
  %v4713 = vsel %vm146, %v4697, 0
  %4715 = vmatprep.subr.mxu0 0.0
  %4716 = vmatpush1.msra.mxu0 %v4698
  %4717 = vmatprep.subr.mxu0 0.0
  %4718 = vmatpush1.msra.mxu0 %v4699
  %4719 = vmatprep.subr.mxu0 0.0
  %4720 = vmatpush1.msra.mxu0 %v4700
  %4721 = vmatprep.subr.mxu0 0.0
  %4722 = vmatpush1.msra.mxu0 %v4701
  %4723 = vmatprep.subr.mxu0 0.0
  %4724 = vmatpush1.msra.mxu0 0.0
  %4725 = vmatprep.subr.mxu0 0.0
  %4726 = vmatpush1.msra.mxu0 0.0
  %4727 = vmatprep.subr.mxu0 0.0
  %4728 = vmatpush1.msra.mxu0 0.0
  %4729 = vmatprep.subr.mxu0 0.0
  %4730 = vmatpush1.msra.mxu0 0.0
  %4731 = vmatprep.subr.mxu0 0.0
  %4732 = vmatpush1.msra.mxu0 0.0
  %4733 = vmatprep.subr.mxu0 0.0
  %4734 = vmatpush1.msra.mxu0 0.0
  %4735 = vmatprep.subr.mxu0 0.0
  %4736 = vmatpush1.msra.mxu0 0.0
  %4737 = vmatprep.subr.mxu0 0.0
  %4738 = vmatpush1.msra.mxu0 0.0
  %4739 = vmatprep.subr.mxu0 0.0
  %4740 = vmatpush1.msra.mxu0 0.0
  %4741 = vmatprep.subr.mxu0 0.0
  %4742 = vmatpush1.msra.mxu0 0.0
  %4743 = vmatprep.subr.mxu0 0.0
  %4744 = vmatpush1.msra.mxu0 0.0
  %4745 = vmatprep.subr.mxu0 0.0
  %4746 = vmatpush1.msra.mxu0 0.0
  %4747 = vmatprep.subr.mxu0 0.0
  %4748 = vmatpush1.msra.mxu0 0.0
  %4749 = vmatprep.subr.mxu0 0.0
  %4750 = vmatpush1.msra.mxu0 0.0
  %4751 = vmatprep.subr.mxu0 0.0
  %4752 = vmatpush1.msra.mxu0 0.0
  %4753 = vmatprep.subr.mxu0 0.0
  %4754 = vmatpush1.msra.mxu0 0.0
  %4755 = vmatprep.subr.mxu0 0.0
  %4756 = vmatpush1.msra.mxu0 0.0
  %4757 = vmatprep.subr.mxu0 0.0
  %4758 = vmatpush1.msra.mxu0 0.0
  %4759 = vmatprep.subr.mxu0 0.0
  %4760 = vmatpush1.msra.mxu0 0.0
  %4761 = vmatprep.subr.mxu0 0.0
  %4762 = vmatpush1.msra.mxu0 0.0
  %4763 = vmatprep.subr.mxu0 0.0
  %4764 = vmatpush1.msra.mxu0 0.0
  %4765 = vmatprep.subr.mxu0 0.0
  %4766 = vmatpush1.msra.mxu0 0.0
  %4767 = vmatprep.subr.mxu0 0.0
  %4768 = vmatpush1.msra.mxu0 0.0
  %4769 = vmatprep.subr.mxu0 0.0
  %4770 = vmatpush1.msra.mxu0 0.0
  %4771 = vmatprep.subr.mxu0 0.0
  %4772 = vmatpush1.msra.mxu0 0.0
  %4773 = vmatprep.subr.mxu0 0.0
  %4774 = vmatpush1.msra.mxu0 0.0
  %4775 = vmatprep.subr.mxu0 0.0
  %4776 = vmatpush1.msra.mxu0 0.0
  %4777 = vmatprep.subr.mxu0 0.0
  %4778 = vmatpush1.msra.mxu0 0.0
  %4779 = vmatprep.mubr.f32.mxu0 0.0
  %4780 = vmatmul.mubr.f32.gmra.mrb[0].mxu0 %v4710
  %v4781 = vpop.f32.mrb[0].mxu0
  %v4782 = vadd.f32 %v4707, %v4781
  %v4783 = vpop.f32.mrb[0].mxu0
  %4784 = vmatprep.mubr.f32.mxu0 0.0
  %4785 = vmatmul.mubr.f32.gmra.mrb[0].mxu0 %v4713
  %v4786 = vpop.f32.mrb[0].mxu0
  %v4787 = vadd.f32 %v4707, %v4786
  %v4788 = vpop.f32.mrb[0].mxu0
  %4789 = vdwg.mxu0
  %v4790 = vmax.f32 %v4782, 0.0
  %v4791 = vmax.f32 %v4787, 0.0
  %v4792 = vld [vmem:[%s45] sm:$0xff]
  %v4793 = vld [vmem:[%s45 + $0x8] sm:$0xff]
  %v4794 = vld [vmem:[%s45 + $0x10] sm:$0xff]
  %v4795 = vld [vmem:[%s45 + $0x18] sm:$0xff]
  %v4796 = vld [vmem:[%s45 + $0x20] sm:$0xff]
  %v4797 = vld [vmem:[%s45 + $0x28] sm:$0xff]
  %v4798 = vld [vmem:[%s45 + $0x30] sm:$0xff]
  %v4799 = vld [vmem:[%s45 + $0x38] sm:$0xff]
  %v4800 = vld [vmem:[%s47] sm:$0x1]
  %v4802 = vlaneseq
  %v4803 = vshrl.u32 %v4802, 7
  %v4804 = vsub.s32 0, %v4803
  %v4805 = vrot.slane %v4800, %v4804
  %vm4807 = vcmask 523264
  %v4809 = vsel %vm4807, %v4790, 0
  %v4812 = vsel %vm4807, %v4791, 0
  %4814 = vmatprep.subr.mxu0 0.0
  %4815 = vmatpush1.msra.mxu0 %v4792
  %4816 = vmatprep.subr.mxu0 0.0
  %4817 = vmatpush1.msra.mxu0 %v4793
  %4818 = vmatprep.subr.mxu0 0.0
  %4819 = vmatpush1.msra.mxu0 %v4794
  %4820 = vmatprep.subr.mxu0 0.0
  %4821 = vmatpush1.msra.mxu0 %v4795
  %4822 = vmatprep.subr.mxu0 0.0
  %4823 = vmatpush1.msra.mxu0 %v4796
  %4824 = vmatprep.subr.mxu0 0.0
  %4825 = vmatpush1.msra.mxu0 %v4797
  %4826 = vmatprep.subr.mxu0 0.0
  %4827 = vmatpush1.msra.mxu0 %v4798
  %4828 = vmatprep.subr.mxu0 0.0
  %4829 = vmatpush1.msra.mxu0 %v4799
  %4830 = vmatprep.subr.mxu0 0.0
  %4831 = vmatpush1.msra.mxu0 0.0
  %4832 = vmatprep.subr.mxu0 0.0
  %4833 = vmatpush1.msra.mxu0 0.0
  %4834 = vmatprep.subr.mxu0 0.0
  %4835 = vmatpush1.msra.mxu0 0.0
  %4836 = vmatprep.subr.mxu0 0.0
  %4837 = vmatpush1.msra.mxu0 0.0
  %4838 = vmatprep.subr.mxu0 0.0
  %4839 = vmatpush1.msra.mxu0 0.0
  %4840 = vmatprep.subr.mxu0 0.0
  %4841 = vmatpush1.msra.mxu0 0.0
  %4842 = vmatprep.subr.mxu0 0.0
  %4843 = vmatpush1.msra.mxu0 0.0
  %4844 = vmatprep.subr.mxu0 0.0
  %4845 = vmatpush1.msra.mxu0 0.0
  %4846 = vmatprep.subr.mxu0 0.0
  %4847 = vmatpush1.msra.mxu0 0.0
  %4848 = vmatprep.subr.mxu0 0.0
  %4849 = vmatpush1.msra.mxu0 0.0
  %4850 = vmatprep.subr.mxu0 0.0
  %4851 = vmatpush1.msra.mxu0 0.0
  %4852 = vmatprep.subr.mxu0 0.0
  %4853 = vmatpush1.msra.mxu0 0.0
  %4854 = vmatprep.subr.mxu0 0.0
  %4855 = vmatpush1.msra.mxu0 0.0
  %4856 = vmatprep.subr.mxu0 0.0
  %4857 = vmatpush1.msra.mxu0 0.0
  %4858 = vmatprep.subr.mxu0 0.0
  %4859 = vmatpush1.msra.mxu0 0.0
  %4860 = vmatprep.subr.mxu0 0.0
  %4861 = vmatpush1.msra.mxu0 0.0
  %4862 = vmatprep.subr.mxu0 0.0
  %4863 = vmatpush1.msra.mxu0 0.0
  %4864 = vmatprep.subr.mxu0 0.0
  %4865 = vmatpush1.msra.mxu0 0.0
  %4866 = vmatprep.subr.mxu0 0.0
  %4867 = vmatpush1.msra.mxu0 0.0
  %4868 = vmatprep.subr.mxu0 0.0
  %4869 = vmatpush1.msra.mxu0 0.0
  %4870 = vmatprep.subr.mxu0 0.0
  %4871 = vmatpush1.msra.mxu0 0.0
  %4872 = vmatprep.subr.mxu0 0.0
  %4873 = vmatpush1.msra.mxu0 0.0
  %4874 = vmatprep.subr.mxu0 0.0
  %4875 = vmatpush1.msra.mxu0 0.0
  %4876 = vmatprep.subr.mxu0 0.0
  %4877 = vmatpush1.msra.mxu0 0.0
  %4878 = vmatprep.mubr.f32.mxu0 0.0
  %4879 = vmatmul.mubr.f32.gmra.mrb[0].mxu0 %v4809
  %v4880 = vpop.f32.mrb[0].mxu0
  %v4881 = vadd.f32 %v4805, %v4880
  %v4882 = vpop.f32.mrb[0].mxu0
  %4883 = vmatprep.mubr.f32.mxu0 0.0
  %4884 = vmatmul.mubr.f32.gmra.mrb[0].mxu0 %v4812
  %v4885 = vpop.f32.mrb[0].mxu0
  %v4886 = vadd.f32 %v4805, %v4885
  %v4887 = vpop.f32.mrb[0].mxu0
  %4888 = vdwg.mxu0
  %v4889 = vadd.f32 %v4696, %v4881
  %v4890 = vadd.f32 %v4697, %v4886
  %v4891 = vsel %vm146, %v4889, 0.0
  %4892 = vadd.xlane.f32.xlu0 %v4891
  %v4893 = vpop.xlane.xlu0 %4892
  %v4894 = vsel %vm146, %v4890, 0.0
  %4895 = vadd.xlane.f32.xlu0 %v4894
  %v4896 = vpop.xlane.xlu0 %4895
  %v4897 = vmul.f32 %v4893, %v2330
  %v4898 = vmul.f32 %v4896, %v2330
  %v4899 = vsub.f32 %v4889, %v4897
  %v4900 = vsub.f32 %v4890, %v4898
  %v4901 = vmul.f32 %v4899, %v4899
  %v4902 = vmul.f32 %v4900, %v4900
  %v4903 = vsel %vm146, %v4901, 0.0
  %4904 = vadd.xlane.f32.xlu0 %v4903
  %v4905 = vpop.xlane.xlu0 %4904
  %v4906 = vsel %vm146, %v4902, 0.0
  %4907 = vadd.xlane.f32.xlu0 %v4906
  %v4908 = vpop.xlane.xlu0 %4907
  %v4909 = vmul.f32 %v4905, %v2330
  %v4910 = vmul.f32 %v4908, %v2330
  %v4911 = vadd.f32 %v4909, 1e-05
  %v4912 = vadd.f32 %v4910, 1e-05
  %v4913 = vrsqrt.pop %v4911
  %v4914 = vrsqrt.pop %v4912
  %v4915 = vmul.f32 %v4899, %v4913
  %v4916 = vmul.f32 %v4900, %v4914
  %v4917 = vld [vmem:[%s57] sm:$0x1]
  %v4919 = vlaneseq
  %v4920 = vshrl.u32 %v4919, 7
  %v4921 = vsub.s32 0, %v4920
  %v4922 = vrot.slane %v4917, %v4921
  %v4924 = vmul.f32 %v4915, %v4922
  %v4925 = vmul.f32 %v4916, %v4922
  %v4926 = vld [vmem:[%s59] sm:$0x1]
  %v4928 = vlaneseq
  %v4929 = vshrl.u32 %v4928, 7
  %v4930 = vsub.s32 0, %v4929
  %v4931 = vrot.slane %v4926, %v4930
  %v4933 = vadd.f32 %v4924, %v4931
  %v4934 = vadd.f32 %v4925, %v4931
  %4935 = vst.msk [vmem:[%s61] sm:$0xff] %vm146, %v4933
  %4936 = vst.msk [vmem:[%s61 + $0x8] sm:$0xff] %vm146, %v4934
  // Predicated region
  $region122: #{transformer_decoder_layer.1} parent=0 // pred_check
    _
  $region123: #{transformer_decoder_layer.1} parent=0 // pred_check_branch
    %4938 = sbr.rel (0) target = $region125
  $region124: #{transformer_decoder_layer.1} parent=0 // pred_region
    _
  $region125: #{transformer_decoder_layer.1} parent=0 // pred_fallthru
    _
  // Predicated region
  $region126: #{transformer_decoder_layer.1} parent=0 // pred_check
    _
  $region127: #{transformer_decoder_layer.1} parent=0 // pred_check_branch
    %4940 = sbr.rel (0) target = $region129
  $region128: #{transformer_decoder_layer.1} parent=0 // pred_region
    _
  $region129: #{transformer_decoder_layer.1} parent=0 // pred_fallthru
    _

</llo_original>
